<compile_context>
chip_gen: v5e
topology: v5e:2x2
jax: 0.10.0
libtpu: 0.0.40
codegen_flags: <defaults>
</compile_context>

<pallas_src>
import functools

import jax
import jax.numpy as jnp
import numpy as np
from jax import lax
from jax.experimental import pallas as pl
from jax.experimental.pallas import tpu as pltpu

EPS = 1e-5    # PyTorch BatchNorm2d default eps
LANE = 128    # TPU lane width


def _resblock_kernel(x_ref, w1_ref, b1_ref, w2_ref, b2_ref, *refs,
                     same_shape, stride, Ho, Wo, compute_dtype):
    if same_shape:
        out_ref, mid_pad = refs
        w3_ref = b3_ref = None
    else:
        w3_ref, b3_ref, out_ref, mid_pad = refs

    Cin = x_ref.shape[-1]        # lane-padded input channels
    Cout = out_ref.shape[-1]     # lane-padded output channels
    HW = Ho * Wo
    S = stride

    # ---- conv1: gather 9 taps from the (phase-decomposed) padded input and run
    #      ONE fused MXU matmul with K = 9*Cin.  BN1 scale is folded into the
    #      weights in the wrapper; only bias + ReLU remain here.
    taps = []
    resid_src = None
    for dy in range(3):
        for dx in range(3):
            ph = (dy % S) * S + (dx % S)
            patch = x_ref[ph, pl.ds(dy // S, Ho), pl.ds(dx // S, Wo), :]
            patch = patch.reshape(HW, Cin)
            if dy == 1 and dx == 1:
                resid_src = patch            # == x (stride-sampled): residual source
            taps.append(patch.astype(compute_dtype))
    slab1 = jnp.concatenate(taps, axis=-1)                       # (HW, 9*Cin)
    h = jnp.dot(slab1, w1_ref[...], preferred_element_type=jnp.float32)
    h = jnp.maximum(h + b1_ref[...], 0.0)                        # bn1 bias + relu

    # ---- conv2: write interior of the padded intermediate; zero ONLY the four
    #      1-wide border strips (interior is fully overwritten every step).
    mid_pad[pl.ds(0, 1), :, :] = jnp.zeros((1, Wo + 2, Cout), jnp.float32)
    mid_pad[pl.ds(Ho + 1, 1), :, :] = jnp.zeros((1, Wo + 2, Cout), jnp.float32)
    mid_pad[pl.ds(1, Ho), pl.ds(0, 1), :] = jnp.zeros((Ho, 1, Cout), jnp.float32)
    mid_pad[pl.ds(1, Ho), pl.ds(Wo + 1, 1), :] = jnp.zeros((Ho, 1, Cout), jnp.float32)
    mid_pad[pl.ds(1, Ho), pl.ds(1, Wo), :] = h.reshape(Ho, Wo, Cout)

    taps2 = []
    for dy in range(3):
        for dx in range(3):
            patch = mid_pad[pl.ds(dy, Ho), pl.ds(dx, Wo), :]
            taps2.append(patch.reshape(HW, Cout).astype(compute_dtype))
    slab2 = jnp.concatenate(taps2, axis=-1)                      # (HW, 9*Cout)
    o = jnp.dot(slab2, w2_ref[...], preferred_element_type=jnp.float32)
    o = o + b2_ref[...]                                          # bn2 bias

    # ---- residual path (reuses the centre conv1 tap; no extra DMA) ----
    if same_shape:
        resid = resid_src
    else:
        resid = jnp.dot(resid_src.astype(compute_dtype), w3_ref[...],
                        preferred_element_type=jnp.float32) + b3_ref[...]

    out_ref[...] = jnp.maximum(resid + o, 0.0).astype(out_ref.dtype)


def residual_block_pallas(x_nchw, params, same_shape=True,
                          compute_dtype=jnp.bfloat16):
    """Forward pass of residual_block. Input/output are NCHW (PyTorch layout)."""
    x = jnp.transpose(x_nchw, (0, 2, 3, 1)).astype(jnp.float32)   # N, H, W, Cin
    N, H, W, Cin = x.shape
    S = 1 if same_shape else 2
    Ho = (H + 2 - 3) // S + 1
    Wo = (W + 2 - 3) // S + 1
    HW = Ho * Wo
    Cout = params["w1"].shape[0]
    Cinp = ((Cin + LANE - 1) // LANE) * LANE      # lane-dense channel padding
    Coutp = ((Cout + LANE - 1) // LANE) * LANE

    # --- padded input, passed once (no 9x tap replication in HBM) ---
    Hp, Wp = H + 2, W + 2
    Hq, Wq = -(-Hp // S), -(-Wp // S)
    xp = jnp.pad(x, ((0, 0),
                     (1, Hq * S - Hp + 1),
                     (1, Wq * S - Wp + 1),
                     (0, Cinp - Cin)))
    # phase decomposition: xph[n, r*S+s, i, j, c] == xp[n, i*S+r, j*S+s, c]
    xph = xp.reshape(N, Hq, S, Wq, S, Cinp).transpose(0, 2, 4, 1, 3, 5)
    xph = xph.reshape(N, S * S, Hq, Wq, Cinp)

    # --- eval-mode BN folded into conv weights (scale) + per-channel bias ---
    s1 = params["g1"] / jnp.sqrt(params["v1"] + EPS)
    s2 = params["g2"] / jnp.sqrt(params["v2"] + EPS)
    b1 = jnp.pad(params["b1"] - params["m1"] * s1, (0, Coutp - Cout)).reshape(1, Coutp)
    b2 = jnp.pad(params["b2"] - params["m2"] * s2, (0, Coutp - Cout)).reshape(1, Coutp)

    w1 = jnp.transpose(params["w1"], (2, 3, 1, 0)) * s1[None, None, None, :]
    w1 = jnp.pad(w1, ((0, 0), (0, 0), (0, Cinp - Cin), (0, Coutp - Cout)))
    w1 = w1.reshape(9 * Cinp, Coutp).astype(compute_dtype)
    w2 = jnp.transpose(params["w2"], (2, 3, 1, 0)) * s2[None, None, None, :]
    w2 = jnp.pad(w2, ((0, 0), (0, 0), (0, Coutp - Cout), (0, Coutp - Cout)))
    w2 = w2.reshape(9 * Coutp, Coutp).astype(compute_dtype)

    inputs = [xph, w1, b1, w2, b2]
    in_specs = [
        pl.BlockSpec((None, S * S, Hq, Wq, Cinp), lambda n: (n, 0, 0, 0, 0)),
        pl.BlockSpec((9 * Cinp, Coutp), lambda n: (0, 0)),
        pl.BlockSpec((1, Coutp), lambda n: (0, 0)),
        pl.BlockSpec((9 * Coutp, Coutp), lambda n: (0, 0)),
        pl.BlockSpec((1, Coutp), lambda n: (0, 0)),
    ]
    if not same_shape:
        w3 = jnp.transpose(params["w3"][:, :, 0, 0], (1, 0))      # (Cin, Cout)
        w3 = jnp.pad(w3, ((0, Cinp - Cin), (0, Coutp - Cout))).astype(compute_dtype)
        b3 = jnp.pad(params["b3"], (0, Coutp - Cout)).reshape(1, Coutp)
        inputs += [w3, b3]
        in_specs += [pl.BlockSpec((Cinp, Coutp), lambda n: (0, 0)),
                     pl.BlockSpec((1, Coutp), lambda n: (0, 0))]

    kernel = functools.partial(_resblock_kernel, same_shape=same_shape,
                               stride=S, Ho=Ho, Wo=Wo, compute_dtype=compute_dtype)

    grid_spec = pltpu.PrefetchScalarGridSpec(
        num_scalar_prefetch=0,
        grid=(N,),
        in_specs=in_specs,
        out_specs=pl.BlockSpec((None, HW, Coutp), lambda n: (n, 0, 0)),
        scratch_shapes=[pltpu.VMEM((Ho + 2, Wo + 2, Coutp), jnp.float32)],
    )

    y = pl.pallas_call(
        kernel,
        out_shape=jax.ShapeDtypeStruct((N, HW, Coutp), jnp.float32),
        grid_spec=grid_spec,
        compiler_params=pltpu.CompilerParams(
            dimension_semantics=("parallel",),
            vmem_limit_bytes=64 * 1024 * 1024),
    )(*inputs)

    y = y[:, :, :Cout].reshape(N, Ho, Wo, Cout)
    return jnp.transpose(y, (0, 3, 1, 2))                         # back to NCHW


# --------------------------- deterministic params ---------------------------
def init_params(key, cin, cout, same_shape):
    ks = jax.random.split(key, 12)
    p = {
        "w1": 0.1 * jax.random.normal(ks[0], (cout, cin, 3, 3), jnp.float32),
        "w2": 0.1 * jax.random.normal(ks[1], (cout, cout, 3, 3), jnp.float32),
        "g1": 1.0 + 0.1 * jax.random.normal(ks[2], (cout,), jnp.float32),
        "b1": 0.1 * jax.random.normal(ks[3], (cout,), jnp.float32),
        "m1": 0.1 * jax.random.normal(ks[4], (cout,), jnp.float32),
        "v1": 0.5 + jax.random.uniform(ks[5], (cout,), jnp.float32),
        "g2": 1.0 + 0.1 * jax.random.normal(ks[6], (cout,), jnp.float32),
        "b2": 0.1 * jax.random.normal(ks[7], (cout,), jnp.float32),
        "m2": 0.1 * jax.random.normal(ks[8], (cout,), jnp.float32),
        "v2": 0.5 + jax.random.uniform(ks[9], (cout,), jnp.float32),
    }
    if not same_shape:
        p["w3"] = 0.1 * jax.random.normal(ks[10], (cout, cin, 1, 1), jnp.float32)
        p["b3"] = 0.1 * jax.random.normal(ks[11], (cout,), jnp.float32)
    return p


# --------------------------- pure-JAX reference ---------------------------
def _bn_eval(x, g, b, m, v):
    return (x - m[None, :, None, None]) / jnp.sqrt(v[None, :, None, None] + EPS) \
        * g[None, :, None, None] + b[None, :, None, None]


def residual_block_ref(x, p, same_shape=True):
    stride = 1 if same_shape else 2
    dn = ("NCHW", "OIHW", "NCHW")
    hp = lax.Precision.HIGHEST
    out = lax.conv_general_dilated(x, p["w1"], (stride, stride), ((1, 1), (1, 1)),
                                   dimension_numbers=dn, precision=hp)
    out = jnp.maximum(_bn_eval(out, p["g1"], p["b1"], p["m1"], p["v1"]), 0.0)
    out = lax.conv_general_dilated(out, p["w2"], (1, 1), ((1, 1), (1, 1)),
                                   dimension_numbers=dn, precision=hp)
    out = _bn_eval(out, p["g2"], p["b2"], p["m2"], p["v2"])
    if same_shape:
        residual = x
    else:
        residual = lax.conv_general_dilated(x, p["w3"], (stride, stride),
                                            ((0, 0), (0, 0)),
                                            dimension_numbers=dn, precision=hp)
        residual = residual + p["b3"][None, :, None, None]
    return jnp.maximum(residual + out, 0.0)


if __name__ == "__main__":
    key = jax.random.PRNGKey(0)
    kx, kp1, kp2 = jax.random.split(key, 3)

    x = jax.random.normal(kx, (2, 4, 16, 16), jnp.float32)

    # same_shape=True: in_channel == out_channel, stride 1, identity residual
    p1 = init_params(kp1, 4, 4, same_shape=True)
    y1 = residual_block_pallas(x, p1, same_shape=True)
    jax.block_until_ready(y1)
    r1 = residual_block_ref(x, p1, same_shape=True)
    # bf16 MXU compute vs f32 HIGHEST reference -> loosened tolerance
    np.testing.assert_allclose(np.asarray(y1), np.asarray(r1), rtol=2e-2, atol=2e-2)

    # same_shape=False: stride-2 downsample + 1x1 stride-2 projection residual
    p2 = init_params(kp2, 4, 8, same_shape=False)
    y2 = residual_block_pallas(x, p2, same_shape=False)
    jax.block_until_ready(y2)
    r2 = residual_block_ref(x, p2, same_shape=False)
    np.testing.assert_allclose(np.asarray(y2), np.asarray(r2), rtol=2e-2, atol=2e-2)

    print("KERNEL_OK")
</pallas_src>

<mosaic_0001>
module attributes {stable_mosaic.version = 11 : i64} {
  func.func @_resblock_kernel(%arg0: i32, %arg1: memref<1x1x18x18x128xf32, #tpu.memory_space<vmem>>, %arg2: memref<1152x128xbf16, #tpu.memory_space<vmem>>, %arg3: memref<1x128xf32, #tpu.memory_space<vmem>>, %arg4: memref<1152x128xbf16, #tpu.memory_space<vmem>>, %arg5: memref<1x128xf32, #tpu.memory_space<vmem>>, %arg6: memref<1x256x128xf32, #tpu.memory_space<vmem>>, %arg7: memref<18x18x128xf32, #tpu.memory_space<vmem>>) attributes {dimension_semantics = [#tpu.dimension_semantics<parallel>], iteration_bounds = array<i64: 2>, scalar_prefetch = 0 : i64, scratch_operands = 1 : i64, tpu.core_type = #tpu.core_type<tc>, window_params = [{transform_indices = @transform_0, window_bounds = array<i64: 1, 1, 18, 18, 128>}, {pipeline_mode = #tpu.pipeline_mode<synchronous>, transform_indices = @transform_1, window_bounds = array<i64: 1152, 128>}, {pipeline_mode = #tpu.pipeline_mode<synchronous>, transform_indices = @transform_2, window_bounds = array<i64: 1, 128>}, {pipeline_mode = #tpu.pipeline_mode<synchronous>, transform_indices = @transform_3, window_bounds = array<i64: 1152, 128>}, {pipeline_mode = #tpu.pipeline_mode<synchronous>, transform_indices = @transform_4, window_bounds = array<i64: 1, 128>}, {transform_indices = @transform_5, window_bounds = array<i64: 1, 256, 128>}]} {
    %c0 = arith.constant 0 : index
    %c0_0 = arith.constant 0 : index
    %c0_1 = arith.constant 0 : index
    %c0_2 = arith.constant 0 : index
    %c0_3 = arith.constant 0 : index
    %0 = vector.load %arg1[%c0, %c0_0, %c0_1, %c0_2, %c0_3] : memref<1x1x18x18x128xf32, #tpu.memory_space<vmem>>, vector<1x1x16x16x128xf32>
    %1 = vector.shape_cast %0 : vector<1x1x16x16x128xf32> to vector<16x16x128xf32>
    %2 = vector.shape_cast %1 : vector<16x16x128xf32> to vector<256x128xf32>
    %3 = arith.truncf %2 : vector<256x128xf32> to vector<256x128xbf16>
    %c0_4 = arith.constant 0 : index
    %c0_5 = arith.constant 0 : index
    %c0_6 = arith.constant 0 : index
    %c1 = arith.constant 1 : index
    %c0_7 = arith.constant 0 : index
    %4 = vector.load %arg1[%c0_4, %c0_5, %c0_6, %c1, %c0_7] : memref<1x1x18x18x128xf32, #tpu.memory_space<vmem>>, vector<1x1x16x16x128xf32>
    %5 = vector.shape_cast %4 : vector<1x1x16x16x128xf32> to vector<16x16x128xf32>
    %6 = vector.shape_cast %5 : vector<16x16x128xf32> to vector<256x128xf32>
    %7 = arith.truncf %6 : vector<256x128xf32> to vector<256x128xbf16>
    %c0_8 = arith.constant 0 : index
    %c0_9 = arith.constant 0 : index
    %c0_10 = arith.constant 0 : index
    %c2 = arith.constant 2 : index
    %c0_11 = arith.constant 0 : index
    %8 = vector.load %arg1[%c0_8, %c0_9, %c0_10, %c2, %c0_11] : memref<1x1x18x18x128xf32, #tpu.memory_space<vmem>>, vector<1x1x16x16x128xf32>
    %9 = vector.shape_cast %8 : vector<1x1x16x16x128xf32> to vector<16x16x128xf32>
    %10 = vector.shape_cast %9 : vector<16x16x128xf32> to vector<256x128xf32>
    %11 = arith.truncf %10 : vector<256x128xf32> to vector<256x128xbf16>
    %c0_12 = arith.constant 0 : index
    %c0_13 = arith.constant 0 : index
    %c1_14 = arith.constant 1 : index
    %c0_15 = arith.constant 0 : index
    %c0_16 = arith.constant 0 : index
    %12 = vector.load %arg1[%c0_12, %c0_13, %c1_14, %c0_15, %c0_16] : memref<1x1x18x18x128xf32, #tpu.memory_space<vmem>>, vector<1x1x16x16x128xf32>
    %13 = vector.shape_cast %12 : vector<1x1x16x16x128xf32> to vector<16x16x128xf32>
    %14 = vector.shape_cast %13 : vector<16x16x128xf32> to vector<256x128xf32>
    %15 = arith.truncf %14 : vector<256x128xf32> to vector<256x128xbf16>
    %c0_17 = arith.constant 0 : index
    %c0_18 = arith.constant 0 : index
    %c1_19 = arith.constant 1 : index
    %c1_20 = arith.constant 1 : index
    %c0_21 = arith.constant 0 : index
    %16 = vector.load %arg1[%c0_17, %c0_18, %c1_19, %c1_20, %c0_21] : memref<1x1x18x18x128xf32, #tpu.memory_space<vmem>>, vector<1x1x16x16x128xf32>
    %17 = vector.shape_cast %16 : vector<1x1x16x16x128xf32> to vector<16x16x128xf32>
    %18 = vector.shape_cast %17 : vector<16x16x128xf32> to vector<256x128xf32>
    %19 = arith.truncf %18 : vector<256x128xf32> to vector<256x128xbf16>
    %c0_22 = arith.constant 0 : index
    %c0_23 = arith.constant 0 : index
    %c1_24 = arith.constant 1 : index
    %c2_25 = arith.constant 2 : index
    %c0_26 = arith.constant 0 : index
    %20 = vector.load %arg1[%c0_22, %c0_23, %c1_24, %c2_25, %c0_26] : memref<1x1x18x18x128xf32, #tpu.memory_space<vmem>>, vector<1x1x16x16x128xf32>
    %21 = vector.shape_cast %20 : vector<1x1x16x16x128xf32> to vector<16x16x128xf32>
    %22 = vector.shape_cast %21 : vector<16x16x128xf32> to vector<256x128xf32>
    %23 = arith.truncf %22 : vector<256x128xf32> to vector<256x128xbf16>
    %c0_27 = arith.constant 0 : index
    %c0_28 = arith.constant 0 : index
    %c2_29 = arith.constant 2 : index
    %c0_30 = arith.constant 0 : index
    %c0_31 = arith.constant 0 : index
    %24 = vector.load %arg1[%c0_27, %c0_28, %c2_29, %c0_30, %c0_31] : memref<1x1x18x18x128xf32, #tpu.memory_space<vmem>>, vector<1x1x16x16x128xf32>
    %25 = vector.shape_cast %24 : vector<1x1x16x16x128xf32> to vector<16x16x128xf32>
    %26 = vector.shape_cast %25 : vector<16x16x128xf32> to vector<256x128xf32>
    %27 = arith.truncf %26 : vector<256x128xf32> to vector<256x128xbf16>
    %c0_32 = arith.constant 0 : index
    %c0_33 = arith.constant 0 : index
    %c2_34 = arith.constant 2 : index
    %c1_35 = arith.constant 1 : index
    %c0_36 = arith.constant 0 : index
    %28 = vector.load %arg1[%c0_32, %c0_33, %c2_34, %c1_35, %c0_36] : memref<1x1x18x18x128xf32, #tpu.memory_space<vmem>>, vector<1x1x16x16x128xf32>
    %29 = vector.shape_cast %28 : vector<1x1x16x16x128xf32> to vector<16x16x128xf32>
    %30 = vector.shape_cast %29 : vector<16x16x128xf32> to vector<256x128xf32>
    %31 = arith.truncf %30 : vector<256x128xf32> to vector<256x128xbf16>
    %c0_37 = arith.constant 0 : index
    %c0_38 = arith.constant 0 : index
    %c2_39 = arith.constant 2 : index
    %c2_40 = arith.constant 2 : index
    %c0_41 = arith.constant 0 : index
    %32 = vector.load %arg1[%c0_37, %c0_38, %c2_39, %c2_40, %c0_41] : memref<1x1x18x18x128xf32, #tpu.memory_space<vmem>>, vector<1x1x16x16x128xf32>
    %33 = vector.shape_cast %32 : vector<1x1x16x16x128xf32> to vector<16x16x128xf32>
    %34 = vector.shape_cast %33 : vector<16x16x128xf32> to vector<256x128xf32>
    %35 = arith.truncf %34 : vector<256x128xf32> to vector<256x128xbf16>
    %36 = tpu.concatenate %3, %7, %11, %15, %19, %23, %27, %31, %35 in 1 : vector<256x128xbf16>, vector<256x128xbf16>, vector<256x128xbf16>, vector<256x128xbf16>, vector<256x128xbf16>, vector<256x128xbf16>, vector<256x128xbf16>, vector<256x128xbf16>, vector<256x128xbf16> -> vector<256x1152xbf16>
    %c0_42 = arith.constant 0 : index
    %c0_43 = arith.constant 0 : index
    %37 = vector.load %arg2[%c0_42, %c0_43] : memref<1152x128xbf16, #tpu.memory_space<vmem>>, vector<1152x128xbf16>
    %cst = arith.constant dense<0.000000e+00> : vector<256x128xf32>
    %38 = tpu.matmul %36, %37, %cst {dimension_numbers = #tpu.dot_dimension_numbers<[1], [0], [0], [1], [0, 0, 1, 1], [], []>} : vector<256x1152xbf16>, vector<1152x128xbf16>, vector<256x128xf32> -> vector<256x128xf32>
    %c0_44 = arith.constant 0 : index
    %c0_45 = arith.constant 0 : index
    %39 = vector.load %arg3[%c0_44, %c0_45] : memref<1x128xf32, #tpu.memory_space<vmem>>, vector<1x128xf32>
    %40 = vector.broadcast %39 : vector<1x128xf32> to vector<256x128xf32>
    %41 = arith.addf %38, %40 : vector<256x128xf32>
    %cst_46 = arith.constant 0.000000e+00 : f32
    %42 = vector.broadcast %cst_46 : f32 to vector<256x128xf32>
    %43 = arith.maximumf %41, %42 : vector<256x128xf32>
    %cst_47 = arith.constant 0.000000e+00 : f32
    %44 = vector.broadcast %cst_47 : f32 to vector<1x18x128xf32>
    %c0_48 = arith.constant 0 : index
    %c0_49 = arith.constant 0 : index
    %c0_50 = arith.constant 0 : index
    %45 = vector.load %arg7[%c0_48, %c0_49, %c0_50] : memref<18x18x128xf32, #tpu.memory_space<vmem>>, vector<1x18x128xf32>
    tpu.vector_store %arg7[%c0_48, %c0_49, %c0_50], %44 {strides = array<i32>} : memref<18x18x128xf32, #tpu.memory_space<vmem>>, vector<1x18x128xf32>,
    %cst_51 = arith.constant 0.000000e+00 : f32
    %46 = vector.broadcast %cst_51 : f32 to vector<1x18x128xf32>
    %c17 = arith.constant 17 : index
    %c0_52 = arith.constant 0 : index
    %c0_53 = arith.constant 0 : index
    %47 = vector.load %arg7[%c17, %c0_52, %c0_53] : memref<18x18x128xf32, #tpu.memory_space<vmem>>, vector<1x18x128xf32>
    tpu.vector_store %arg7[%c17, %c0_52, %c0_53], %46 {strides = array<i32>} : memref<18x18x128xf32, #tpu.memory_space<vmem>>, vector<1x18x128xf32>,
    %cst_54 = arith.constant 0.000000e+00 : f32
    %48 = vector.broadcast %cst_54 : f32 to vector<16x1x128xf32>
    %c1_55 = arith.constant 1 : index
    %c0_56 = arith.constant 0 : index
    %c0_57 = arith.constant 0 : index
    %49 = vector.load %arg7[%c1_55, %c0_56, %c0_57] : memref<18x18x128xf32, #tpu.memory_space<vmem>>, vector<16x1x128xf32>
    tpu.vector_store %arg7[%c1_55, %c0_56, %c0_57], %48 {strides = array<i32>} : memref<18x18x128xf32, #tpu.memory_space<vmem>>, vector<16x1x128xf32>,
    %cst_58 = arith.constant 0.000000e+00 : f32
    %50 = vector.broadcast %cst_58 : f32 to vector<16x1x128xf32>
    %c1_59 = arith.constant 1 : index
    %c17_60 = arith.constant 17 : index
    %c0_61 = arith.constant 0 : index
    %51 = vector.load %arg7[%c1_59, %c17_60, %c0_61] : memref<18x18x128xf32, #tpu.memory_space<vmem>>, vector<16x1x128xf32>
    tpu.vector_store %arg7[%c1_59, %c17_60, %c0_61], %50 {strides = array<i32>} : memref<18x18x128xf32, #tpu.memory_space<vmem>>, vector<16x1x128xf32>,
    %52 = vector.shape_cast %43 : vector<256x128xf32> to vector<16x16x128xf32>
    %c1_62 = arith.constant 1 : index
    %c1_63 = arith.constant 1 : index
    %c0_64 = arith.constant 0 : index
    %53 = vector.load %arg7[%c1_62, %c1_63, %c0_64] : memref<18x18x128xf32, #tpu.memory_space<vmem>>, vector<16x16x128xf32>
    tpu.vector_store %arg7[%c1_62, %c1_63, %c0_64], %52 {strides = array<i32>} : memref<18x18x128xf32, #tpu.memory_space<vmem>>, vector<16x16x128xf32>,
    %c0_65 = arith.constant 0 : index
    %c0_66 = arith.constant 0 : index
    %c0_67 = arith.constant 0 : index
    %54 = vector.load %arg7[%c0_65, %c0_66, %c0_67] : memref<18x18x128xf32, #tpu.memory_space<vmem>>, vector<16x16x128xf32>
    %55 = vector.shape_cast %54 : vector<16x16x128xf32> to vector<256x128xf32>
    %56 = arith.truncf %55 : vector<256x128xf32> to vector<256x128xbf16>
    %c0_68 = arith.constant 0 : index
    %c1_69 = arith.constant 1 : index
    %c0_70 = arith.constant 0 : index
    %57 = vector.load %arg7[%c0_68, %c1_69, %c0_70] : memref<18x18x128xf32, #tpu.memory_space<vmem>>, vector<16x16x128xf32>
    %58 = vector.shape_cast %57 : vector<16x16x128xf32> to vector<256x128xf32>
    %59 = arith.truncf %58 : vector<256x128xf32> to vector<256x128xbf16>
    %c0_71 = arith.constant 0 : index
    %c2_72 = arith.constant 2 : index
    %c0_73 = arith.constant 0 : index
    %60 = vector.load %arg7[%c0_71, %c2_72, %c0_73] : memref<18x18x128xf32, #tpu.memory_space<vmem>>, vector<16x16x128xf32>
    %61 = vector.shape_cast %60 : vector<16x16x128xf32> to vector<256x128xf32>
    %62 = arith.truncf %61 : vector<256x128xf32> to vector<256x128xbf16>
    %c1_74 = arith.constant 1 : index
    %c0_75 = arith.constant 0 : index
    %c0_76 = arith.constant 0 : index
    %63 = vector.load %arg7[%c1_74, %c0_75, %c0_76] : memref<18x18x128xf32, #tpu.memory_space<vmem>>, vector<16x16x128xf32>
    %64 = vector.shape_cast %63 : vector<16x16x128xf32> to vector<256x128xf32>
    %65 = arith.truncf %64 : vector<256x128xf32> to vector<256x128xbf16>
    %c1_77 = arith.constant 1 : index
    %c1_78 = arith.constant 1 : index
    %c0_79 = arith.constant 0 : index
    %66 = vector.load %arg7[%c1_77, %c1_78, %c0_79] : memref<18x18x128xf32, #tpu.memory_space<vmem>>, vector<16x16x128xf32>
    %67 = vector.shape_cast %66 : vector<16x16x128xf32> to vector<256x128xf32>
    %68 = arith.truncf %67 : vector<256x128xf32> to vector<256x128xbf16>
    %c1_80 = arith.constant 1 : index
    %c2_81 = arith.constant 2 : index
    %c0_82 = arith.constant 0 : index
    %69 = vector.load %arg7[%c1_80, %c2_81, %c0_82] : memref<18x18x128xf32, #tpu.memory_space<vmem>>, vector<16x16x128xf32>
    %70 = vector.shape_cast %69 : vector<16x16x128xf32> to vector<256x128xf32>
    %71 = arith.truncf %70 : vector<256x128xf32> to vector<256x128xbf16>
    %c2_83 = arith.constant 2 : index
    %c0_84 = arith.constant 0 : index
    %c0_85 = arith.constant 0 : index
    %72 = vector.load %arg7[%c2_83, %c0_84, %c0_85] : memref<18x18x128xf32, #tpu.memory_space<vmem>>, vector<16x16x128xf32>
    %73 = vector.shape_cast %72 : vector<16x16x128xf32> to vector<256x128xf32>
    %74 = arith.truncf %73 : vector<256x128xf32> to vector<256x128xbf16>
    %c2_86 = arith.constant 2 : index
    %c1_87 = arith.constant 1 : index
    %c0_88 = arith.constant 0 : index
    %75 = vector.load %arg7[%c2_86, %c1_87, %c0_88] : memref<18x18x128xf32, #tpu.memory_space<vmem>>, vector<16x16x128xf32>
    %76 = vector.shape_cast %75 : vector<16x16x128xf32> to vector<256x128xf32>
    %77 = arith.truncf %76 : vector<256x128xf32> to vector<256x128xbf16>
    %c2_89 = arith.constant 2 : index
    %c2_90 = arith.constant 2 : index
    %c0_91 = arith.constant 0 : index
    %78 = vector.load %arg7[%c2_89, %c2_90, %c0_91] : memref<18x18x128xf32, #tpu.memory_space<vmem>>, vector<16x16x128xf32>
    %79 = vector.shape_cast %78 : vector<16x16x128xf32> to vector<256x128xf32>
    %80 = arith.truncf %79 : vector<256x128xf32> to vector<256x128xbf16>
    %81 = tpu.concatenate %56, %59, %62, %65, %68, %71, %74, %77, %80 in 1 : vector<256x128xbf16>, vector<256x128xbf16>, vector<256x128xbf16>, vector<256x128xbf16>, vector<256x128xbf16>, vector<256x128xbf16>, vector<256x128xbf16>, vector<256x128xbf16>, vector<256x128xbf16> -> vector<256x1152xbf16>
    %c0_92 = arith.constant 0 : index
    %c0_93 = arith.constant 0 : index
    %82 = vector.load %arg4[%c0_92, %c0_93] : memref<1152x128xbf16, #tpu.memory_space<vmem>>, vector<1152x128xbf16>
    %cst_94 = arith.constant dense<0.000000e+00> : vector<256x128xf32>
    %83 = tpu.matmul %81, %82, %cst_94 {dimension_numbers = #tpu.dot_dimension_numbers<[1], [0], [0], [1], [0, 0, 1, 1], [], []>} : vector<256x1152xbf16>, vector<1152x128xbf16>, vector<256x128xf32> -> vector<256x128xf32>
    %c0_95 = arith.constant 0 : index
    %c0_96 = arith.constant 0 : index
    %84 = vector.load %arg5[%c0_95, %c0_96] : memref<1x128xf32, #tpu.memory_space<vmem>>, vector<1x128xf32>
    %85 = vector.broadcast %84 : vector<1x128xf32> to vector<256x128xf32>
    %86 = arith.addf %83, %85 : vector<256x128xf32>
    %87 = arith.addf %18, %86 : vector<256x128xf32>
    %cst_97 = arith.constant 0.000000e+00 : f32
    %88 = vector.broadcast %cst_97 : f32 to vector<256x128xf32>
    %89 = arith.maximumf %87, %88 : vector<256x128xf32>
    %c0_98 = arith.constant 0 : index
    %c0_99 = arith.constant 0 : index
    %c0_100 = arith.constant 0 : index
    %90 = vector.load %arg6[%c0_98, %c0_99, %c0_100] : memref<1x256x128xf32, #tpu.memory_space<vmem>>, vector<1x256x128xf32>
    %91 = vector.shape_cast %90 : vector<1x256x128xf32> to vector<256x128xf32>
    %92 = vector.shape_cast %89 : vector<256x128xf32> to vector<1x256x128xf32>
    tpu.vector_store %arg6[%c0_98, %c0_99, %c0_100], %92 {strides = array<i32>} : memref<1x256x128xf32, #tpu.memory_space<vmem>>, vector<1x256x128xf32>,
    return
  }
  func.func @transform_0(%arg0: i32) -> (i32, i32, i32, i32, i32) {
    %c0_i32 = arith.constant 0 : i32
    %c0_i32_0 = arith.constant 0 : i32
    %c0_i32_1 = arith.constant 0 : i32
    %c0_i32_2 = arith.constant 0 : i32
    %c0_i32_3 = arith.constant 0 : i32
    return %arg0, %c0_i32, %c0_i32_0, %c0_i32_1, %c0_i32_2 : i32, i32, i32, i32, i32
  }
  func.func @transform_1(%arg0: i32) -> (i32, i32) {
    %c0_i32 = arith.constant 0 : i32
    %c0_i32_0 = arith.constant 0 : i32
    %c0_i32_1 = arith.constant 0 : i32
    return %c0_i32, %c0_i32_0 : i32, i32
  }
  func.func @transform_2(%arg0: i32) -> (i32, i32) {
    %c0_i32 = arith.constant 0 : i32
    %c0_i32_0 = arith.constant 0 : i32
    %c0_i32_1 = arith.constant 0 : i32
    return %c0_i32, %c0_i32_0 : i32, i32
  }
  func.func @transform_3(%arg0: i32) -> (i32, i32) {
    %c0_i32 = arith.constant 0 : i32
    %c0_i32_0 = arith.constant 0 : i32
    %c0_i32_1 = arith.constant 0 : i32
    return %c0_i32, %c0_i32_0 : i32, i32
  }
  func.func @transform_4(%arg0: i32) -> (i32, i32) {
    %c0_i32 = arith.constant 0 : i32
    %c0_i32_0 = arith.constant 0 : i32
    %c0_i32_1 = arith.constant 0 : i32
    return %c0_i32, %c0_i32_0 : i32, i32
  }
  func.func @transform_5(%arg0: i32) -> (i32, i32, i32) {
    %c0_i32 = arith.constant 0 : i32
    %c0_i32_0 = arith.constant 0 : i32
    %c0_i32_1 = arith.constant 0 : i32
    return %arg0, %c0_i32, %c0_i32_0 : i32, i32, i32
  }
}

</mosaic_0001>

<llo_original>
// kernel: tpu_custom_call.1
$region0: #{tpu_custom_call.1}
  #allocation0 [shape = 'u32[]', space=smem, size = 0x4, offset = 0x4, fixed_abs, tag = 'smem constant byte address 0x4 - core index']
  #allocation1 [shape = 'u32[72,128]{1,0:T(1,128)}', space=vmem, size = 0x9000, scoped, tag = 'internal scratch']
  #allocation2 [shape = 'f32[18,18,128]{2,1,0:T(8,128)}', space=vmem, size = 0x36000, scoped, tag = 'scratch operand']
  %s0 = inlined_call_operand.vmem [shape: f32[2,1,18,18,128], index: 0, kind: input, shape index: {}]
  %s1 = inlined_call_operand.vmem [shape: bf16[1152,128], index: 1, kind: input, shape index: {}]
  %s2 = inlined_call_operand.vmem [shape: f32[1,128], index: 2, kind: input, shape index: {}]
  %s3 = inlined_call_operand.vmem [shape: bf16[1152,128], index: 3, kind: input, shape index: {}]
  %s4 = inlined_call_operand.vmem [shape: f32[1,128], index: 4, kind: input, shape index: {}]
  %s5 = inlined_call_operand.hbm [shape: f32[2,256,128], index: 5, kind: output, shape index: {}]
  %s6 = sld [smem:[#allocation0]]
  $region53: #{tpu_custom_call.1} parent=0
    _
  %s8 = ssub.s32 1, %s6
  %s9 = scalar_select 0, %s8, %s6
  $region1: #{tpu_custom_call.1} parent=0
    #allocation3 [shape = 'u8[262144]{0}', space=vmem, size = 0x40000, scoped, tag = 'output window, operand 0']
    #allocation4 [shape = 's32[2]{0}', space=sflag, size = 0x8, scoped, tag = 'scoped memory for tpu_custom_call.1']
    %10 = vsyncpa [#allocation4], 0
    %s11 = scalar_lea.sflag [#allocation4], 1
    %12 = vsyncpa %s11, 0
    loop: start=0, step=1, limit=4
    $region2: #{tpu_custom_call.1} parent=1 // loop_pre_header
      _
    $region3: #{tpu_custom_call.1} parent=1 // loop_header
      %s14 = sphi 0, %s18
      %p15 = scmp.ge.s32.totalorder %s14, 4
      %s24 = sphi 0, %s26
      %s27 = sphi 0, %s24
      %s28 = sphi 0, %s27
      %s44 = sphi 0, %s28
      %s48 = sphi 0, %s48
      %s50 = sphi 0, %s48
      %s51 = sphi 0, %s50
      %s65 = sphi 0, %s51
      %s69 = sphi 0, %s69
      %s71 = sphi 0, %s69
      %s72 = sphi 0, %s71
      %s86 = sphi 0, %s72
      %s90 = sphi 0, %s90
      %s92 = sphi 0, %s90
      %s93 = sphi 0, %s92
      %s107 = sphi 0, %s93
      %s111 = sphi 0, %s111
      %s113 = sphi 0, %s111
      %s114 = sphi 0, %s113
      %s128 = sphi 0, %s114
      %s134 = sphi 0, %s136
      %s137 = sphi 0, %s134
      %s138 = sphi 0, %s137
      %s154 = sphi 0, %s138
    $region4: #{tpu_custom_call.1} parent=1 // loop_header_branch
      %17 = sbr.rel (%p15) target = $region8
    $region5: #{tpu_custom_call.1} parent=1 // loop_body
      %s19 = ssub.s32 %s14, 1
      %s20 = ssub.s32 %s14, 2
      %s21 = sadd.s32 %s14, 1
      %s22 = ssub.s32 %s14, %s21
      %p23 = scmp.eq.s32.totalorder %s22, 0
      %s25 = sadd.s32 %s24, 1
      %s26 = scalar_select %p23, %s24, %s25
      %p29 = pneg %p23
      %p30 = scmp.eq.s32.totalorder %s14, 1
      %p31 = por %p29, %p30
      %p32 = scmp.ne.s32.totalorder %s24, %s27
      %p33 = scmp.eq.s32.totalorder %s14, 0
      %p34 = por %p32, %p33
      %p35 = scmp.ne.s32.totalorder %s24, %s27
      %p36 = scmp.eq.s32.totalorder %s19, 1
      %p37 = por %p35, %p36
      %p38 = scmp.ne.s32.totalorder %s27, %s28
      %p39 = scmp.eq.s32.totalorder %s19, 0
      %p40 = por %p38, %p39
      %p41 = scmp.ne.s32.totalorder %s27, %s28
      %p42 = scmp.eq.s32.totalorder %s20, 1
      %p43 = por %p41, %p42
      %p45 = scmp.ne.s32.totalorder %s28, %s44
      %p46 = scmp.eq.s32.totalorder %s20, 0
      %p47 = por %p45, %p46
      %s49 = sadd.s32 %s48, 1
      %p52 = scmp.eq.s32.totalorder %s14, 1
      %p53 = scmp.ne.s32.totalorder %s48, %s50
      %p54 = scmp.eq.s32.totalorder %s14, 0
      %p55 = por %p53, %p54
      %p56 = scmp.ne.s32.totalorder %s48, %s50
      %p57 = scmp.eq.s32.totalorder %s19, 1
      %p58 = por %p56, %p57
      %p59 = scmp.ne.s32.totalorder %s50, %s51
      %p60 = scmp.eq.s32.totalorder %s19, 0
      %p61 = por %p59, %p60
      %p62 = scmp.ne.s32.totalorder %s50, %s51
      %p63 = scmp.eq.s32.totalorder %s20, 1
      %p64 = por %p62, %p63
      %p66 = scmp.ne.s32.totalorder %s51, %s65
      %p67 = scmp.eq.s32.totalorder %s20, 0
      %p68 = por %p66, %p67
      %s70 = sadd.s32 %s69, 1
      %p73 = scmp.eq.s32.totalorder %s14, 1
      %p74 = scmp.ne.s32.totalorder %s69, %s71
      %p75 = scmp.eq.s32.totalorder %s14, 0
      %p76 = por %p74, %p75
      %p77 = scmp.ne.s32.totalorder %s69, %s71
      %p78 = scmp.eq.s32.totalorder %s19, 1
      %p79 = por %p77, %p78
      %p80 = scmp.ne.s32.totalorder %s71, %s72
      %p81 = scmp.eq.s32.totalorder %s19, 0
      %p82 = por %p80, %p81
      %p83 = scmp.ne.s32.totalorder %s71, %s72
      %p84 = scmp.eq.s32.totalorder %s20, 1
      %p85 = por %p83, %p84
      %p87 = scmp.ne.s32.totalorder %s72, %s86
      %p88 = scmp.eq.s32.totalorder %s20, 0
      %p89 = por %p87, %p88
      %s91 = sadd.s32 %s90, 1
      %p94 = scmp.eq.s32.totalorder %s14, 1
      %p95 = scmp.ne.s32.totalorder %s90, %s92
      %p96 = scmp.eq.s32.totalorder %s14, 0
      %p97 = por %p95, %p96
      %p98 = scmp.ne.s32.totalorder %s90, %s92
      %p99 = scmp.eq.s32.totalorder %s19, 1
      %p100 = por %p98, %p99
      %p101 = scmp.ne.s32.totalorder %s92, %s93
      %p102 = scmp.eq.s32.totalorder %s19, 0
      %p103 = por %p101, %p102
      %p104 = scmp.ne.s32.totalorder %s92, %s93
      %p105 = scmp.eq.s32.totalorder %s20, 1
      %p106 = por %p104, %p105
      %p108 = scmp.ne.s32.totalorder %s93, %s107
      %p109 = scmp.eq.s32.totalorder %s20, 0
      %p110 = por %p108, %p109
      %s112 = sadd.s32 %s111, 1
      %p115 = scmp.eq.s32.totalorder %s14, 1
      %p116 = scmp.ne.s32.totalorder %s111, %s113
      %p117 = scmp.eq.s32.totalorder %s14, 0
      %p118 = por %p116, %p117
      %p119 = scmp.ne.s32.totalorder %s111, %s113
      %p120 = scmp.eq.s32.totalorder %s19, 1
      %p121 = por %p119, %p120
      %p122 = scmp.ne.s32.totalorder %s113, %s114
      %p123 = scmp.eq.s32.totalorder %s19, 0
      %p124 = por %p122, %p123
      %p125 = scmp.ne.s32.totalorder %s113, %s114
      %p126 = scmp.eq.s32.totalorder %s20, 1
      %p127 = por %p125, %p126
      %p129 = scmp.ne.s32.totalorder %s114, %s128
      %p130 = scmp.eq.s32.totalorder %s20, 0
      %p131 = por %p129, %p130
      %s132 = ssub.s32 %s14, %s21
      %p133 = scmp.eq.s32.totalorder %s132, 0
      %s135 = sadd.s32 %s134, 1
      %s136 = scalar_select %p133, %s134, %s135
      %p139 = pneg %p133
      %p140 = scmp.eq.s32.totalorder %s14, 1
      %p141 = por %p139, %p140
      %p142 = scmp.ne.s32.totalorder %s134, %s137
      %p143 = scmp.eq.s32.totalorder %s14, 0
      %p144 = por %p142, %p143
      %p145 = scmp.ne.s32.totalorder %s134, %s137
      %p146 = scmp.eq.s32.totalorder %s19, 1
      %p147 = por %p145, %p146
      %p148 = scmp.ne.s32.totalorder %s137, %s138
      %p149 = scmp.eq.s32.totalorder %s19, 0
      %p150 = por %p148, %p149
      %p151 = scmp.ne.s32.totalorder %s137, %s138
      %p152 = scmp.eq.s32.totalorder %s20, 1
      %p153 = por %p151, %p152
      %p155 = scmp.ne.s32.totalorder %s138, %s154
      %p156 = scmp.eq.s32.totalorder %s20, 0
      %p157 = por %p155, %p156
      %p158 = scmp.le.s32.totalorder 1, %s14
      %p159 = scmp.lt.s32.totalorder %s14, 3
      %p160 = pnand %p158, %p159
      %p161 = pneg %p160
      // Predicated region
      $region9: #{tpu_custom_call.1} parent=5 // pred_check
        _
      $region10: #{tpu_custom_call.1} parent=5 // pred_check_branch
        %163 = sbr.rel (%p160) target = $region12
      $region11: #{tpu_custom_call.1} parent=5 // pred_region
        %s164 = ssub.s32 %s14, 1
        // Predicated region
        $region13: #{tpu_custom_call.1} parent=11 // pred_check
          %p165 = pneg %p61
        $region14: #{tpu_custom_call.1} parent=11 // pred_check_branch
          %167 = sbr.rel (%p165) target = $region16
        $region15: #{tpu_custom_call.1} parent=11 // pred_region
          _
        $region16: #{tpu_custom_call.1} parent=11 // pred_fallthru
          _
        // Predicated region
        $region17: #{tpu_custom_call.1} parent=11 // pred_check
          %p168 = pneg %p82
        $region18: #{tpu_custom_call.1} parent=11 // pred_check_branch
          %170 = sbr.rel (%p168) target = $region20
        $region19: #{tpu_custom_call.1} parent=11 // pred_region
          _
        $region20: #{tpu_custom_call.1} parent=11 // pred_fallthru
          _
        // Predicated region
        $region21: #{tpu_custom_call.1} parent=11 // pred_check
          %p171 = pneg %p103
        $region22: #{tpu_custom_call.1} parent=11 // pred_check_branch
          %173 = sbr.rel (%p171) target = $region24
        $region23: #{tpu_custom_call.1} parent=11 // pred_region
          _
        $region24: #{tpu_custom_call.1} parent=11 // pred_fallthru
          _
        // Predicated region
        $region25: #{tpu_custom_call.1} parent=11 // pred_check
          %p174 = pneg %p124
        $region26: #{tpu_custom_call.1} parent=11 // pred_check_branch
          %176 = sbr.rel (%p174) target = $region28
        $region27: #{tpu_custom_call.1} parent=11 // pred_region
          _
        $region28: #{tpu_custom_call.1} parent=11 // pred_fallthru
          _
      $region12: #{tpu_custom_call.1} parent=5 // pred_fallthru
        _
      %p177 = scmp.lt.s32.totalorder %s14, 2
      // Predicated region
      $region29: #{tpu_custom_call.1} parent=5 // pred_check
        %p178 = pneg %p177
      $region30: #{tpu_custom_call.1} parent=5 // pred_check_branch
        %180 = sbr.rel (%p178) target = $region32
      $region31: #{tpu_custom_call.1} parent=5 // pred_region
        // Predicated region
        $region33: #{tpu_custom_call.1} parent=31 // pred_check
          %p181 = pneg %p34
        $region34: #{tpu_custom_call.1} parent=31 // pred_check_branch
          %183 = sbr.rel (%p181) target = $region36
        $region35: #{tpu_custom_call.1} parent=31 // pred_region
          %p184 = scmp.lt.s32.totalorder %s14, 1
          %s185 = scalar_select %p184, %s14, 1
          %s186 = smul.addr %s185, 54
          %s187 = smul.addr %s186, 8
          %s188 = scalar_lea.vmem %s0, %s187
        $region36: #{tpu_custom_call.1} parent=31 // pred_fallthru
          _
      $region32: #{tpu_custom_call.1} parent=5 // pred_fallthru
        _
      %p189 = scmp.le.s32.totalorder 1, %s14
      %p190 = scmp.lt.s32.totalorder %s14, 3
      %p191 = pnand %p189, %p190
      %p192 = pneg %p191
      // Predicated region
      $region37: #{tpu_custom_call.1} parent=5 // pred_check
        _
      $region38: #{tpu_custom_call.1} parent=5 // pred_check_branch
        %194 = sbr.rel (%p191) target = $region40
      $region39: #{tpu_custom_call.1} parent=5 // pred_region
        %s195 = ssub.s32 %s14, 1
        %p196 = scmp.lt.s32.totalorder %s19, 1
        %s197 = scalar_select %p196, %s19, 1
        %s198 = smul.addr %s197, 54
        %s199 = smul.addr %s198, 8
        %s200 = scalar_lea.vmem %s0, %s199
        %p201 = pneg %p40
        %p202 = pneg %p37
        %p203 = pneg %p61
        %p204 = pneg %p58
        %p205 = pneg %p82
        %p206 = pneg %p79
        %p207 = pneg %p103
        %p208 = pneg %p100
        %p209 = pneg %p124
        %p210 = pneg %p121
        %p211 = pneg %p150
        %p212 = pneg %p147
        %s213 = sand.u32 %s137, 1
        %s214 = scalar_lea.sflag [#allocation4], %s213
        %s215 = sand.u32 %s137, 1
        %s216 = smul.addr %s215, 256
        %s217 = scalar_lea.vmem [#allocation3], %s216
        %p218 = scmp.lt.s32.totalorder %s19, 1
        %s219 = scalar_select %p218, %s19, 1
        %s220 = smul.addr %s219, 54
        %s221 = smul.addr %s220, 8
        %s222 = scalar_lea.vmem %s0, %s221
        %v223 = vld [vmem:[%s222] sm:$0xff]
        %v224 = vld [vmem:[%s222 + $0x8] sm:$0xff]
        %v225 = vld [vmem:[%s222 + $0x18] sm:$0xff]
        %v226 = vld [vmem:[%s222 + $0x20] sm:$0xff]
        %v227 = vld [vmem:[%s222 + $0x30] sm:$0xff]
        %v228 = vld [vmem:[%s222 + $0x38] sm:$0xff]
        %v229 = vld [vmem:[%s222 + $0x48] sm:$0xff]
        %v230 = vld [vmem:[%s222 + $0x50] sm:$0xff]
        %v231 = vld [vmem:[%s222 + $0x60] sm:$0xff]
        %v232 = vld [vmem:[%s222 + $0x68] sm:$0xff]
        %v233 = vld [vmem:[%s222 + $0x78] sm:$0xff]
        %v234 = vld [vmem:[%s222 + $0x80] sm:$0xff]
        %v235 = vld [vmem:[%s222 + $0x90] sm:$0xff]
        %v236 = vld [vmem:[%s222 + $0x98] sm:$0xff]
        %v237 = vld [vmem:[%s222 + $0xa8] sm:$0xff]
        %v238 = vld [vmem:[%s222 + $0xb0] sm:$0xff]
        %v239 = vld [vmem:[%s222 + $0xc0] sm:$0xff]
        %v240 = vld [vmem:[%s222 + $0xc8] sm:$0xff]
        %v241 = vld [vmem:[%s222 + $0xd8] sm:$0xff]
        %v242 = vld [vmem:[%s222 + $0xe0] sm:$0xff]
        %v243 = vld [vmem:[%s222 + $0xf0] sm:$0xff]
        %v244 = vld [vmem:[%s222 + $0xf8] sm:$0xff]
        %v245 = vld [vmem:[%s222 + $0x108] sm:$0xff]
        %v246 = vld [vmem:[%s222 + $0x110] sm:$0xff]
        %v247 = vld [vmem:[%s222 + $0x120] sm:$0xff]
        %v248 = vld [vmem:[%s222 + $0x128] sm:$0xff]
        %v249 = vld [vmem:[%s222 + $0x138] sm:$0xff]
        %v250 = vld [vmem:[%s222 + $0x140] sm:$0xff]
        %v251 = vld [vmem:[%s222 + $0x150] sm:$0xff]
        %v252 = vld [vmem:[%s222 + $0x158] sm:$0xff]
        %v253 = vld [vmem:[%s222 + $0x168] sm:$0xff]
        %v254 = vld [vmem:[%s222 + $0x170] sm:$0xff]
        %v255 = vpack.c.bf16 %v223, %v223
        %v256 = vpack.c.bf16 %v224, %v224
        %v257 = vpack.c.bf16 %v225, %v225
        %v258 = vpack.c.bf16 %v226, %v226
        %v259 = vpack.c.bf16 %v227, %v227
        %v260 = vpack.c.bf16 %v228, %v228
        %v261 = vpack.c.bf16 %v229, %v229
        %v262 = vpack.c.bf16 %v230, %v230
        %v263 = vpack.c.bf16 %v231, %v231
        %v264 = vpack.c.bf16 %v232, %v232
        %v265 = vpack.c.bf16 %v233, %v233
        %v266 = vpack.c.bf16 %v234, %v234
        %v267 = vpack.c.bf16 %v235, %v235
        %v268 = vpack.c.bf16 %v236, %v236
        %v269 = vpack.c.bf16 %v237, %v237
        %v270 = vpack.c.bf16 %v238, %v238
        %v271 = vpack.c.bf16 %v239, %v239
        %v272 = vpack.c.bf16 %v240, %v240
        %v273 = vpack.c.bf16 %v241, %v241
        %v274 = vpack.c.bf16 %v242, %v242
        %v275 = vpack.c.bf16 %v243, %v243
        %v276 = vpack.c.bf16 %v244, %v244
        %v277 = vpack.c.bf16 %v245, %v245
        %v278 = vpack.c.bf16 %v246, %v246
        %v279 = vpack.c.bf16 %v247, %v247
        %v280 = vpack.c.bf16 %v248, %v248
        %v281 = vpack.c.bf16 %v249, %v249
        %v282 = vpack.c.bf16 %v250, %v250
        %v283 = vpack.c.bf16 %v251, %v251
        %v284 = vpack.c.bf16 %v252, %v252
        %v285 = vpack.c.bf16 %v253, %v253
        %v286 = vpack.c.bf16 %v254, %v254
        %v287 = vld [vmem:[%s222 + $0x1] sm:$0xff]
        %v288 = vld [vmem:[%s222 + $0x9] sm:$0xff]
        %v289 = vld [vmem:[%s222 + $0x19] sm:$0xff]
        %v290 = vld [vmem:[%s222 + $0x21] sm:$0xff]
        %v291 = vld [vmem:[%s222 + $0x31] sm:$0xff]
        %v292 = vld [vmem:[%s222 + $0x39] sm:$0xff]
        %v293 = vld [vmem:[%s222 + $0x49] sm:$0xff]
        %v294 = vld [vmem:[%s222 + $0x51] sm:$0xff]
        %v295 = vld [vmem:[%s222 + $0x61] sm:$0xff]
        %v296 = vld [vmem:[%s222 + $0x69] sm:$0xff]
        %v297 = vld [vmem:[%s222 + $0x79] sm:$0xff]
        %v298 = vld [vmem:[%s222 + $0x81] sm:$0xff]
        %v299 = vld [vmem:[%s222 + $0x91] sm:$0xff]
        %v300 = vld [vmem:[%s222 + $0x99] sm:$0xff]
        %v301 = vld [vmem:[%s222 + $0xa9] sm:$0xff]
        %v302 = vld [vmem:[%s222 + $0xb1] sm:$0xff]
        %v303 = vld [vmem:[%s222 + $0xc1] sm:$0xff]
        %v304 = vld [vmem:[%s222 + $0xc9] sm:$0xff]
        %v305 = vld [vmem:[%s222 + $0xd9] sm:$0xff]
        %v306 = vld [vmem:[%s222 + $0xe1] sm:$0xff]
        %v307 = vld [vmem:[%s222 + $0xf1] sm:$0xff]
        %v308 = vld [vmem:[%s222 + $0xf9] sm:$0xff]
        %v309 = vld [vmem:[%s222 + $0x109] sm:$0xff]
        %v310 = vld [vmem:[%s222 + $0x111] sm:$0xff]
        %v311 = vld [vmem:[%s222 + $0x121] sm:$0xff]
        %v312 = vld [vmem:[%s222 + $0x129] sm:$0xff]
        %v313 = vld [vmem:[%s222 + $0x139] sm:$0xff]
        %v314 = vld [vmem:[%s222 + $0x141] sm:$0xff]
        %v315 = vld [vmem:[%s222 + $0x151] sm:$0xff]
        %v316 = vld [vmem:[%s222 + $0x159] sm:$0xff]
        %v317 = vld [vmem:[%s222 + $0x169] sm:$0xff]
        %v318 = vld [vmem:[%s222 + $0x171] sm:$0xff]
        %v319 = vpack.c.bf16 %v287, %v287
        %v320 = vpack.c.bf16 %v288, %v288
        %v321 = vpack.c.bf16 %v289, %v289
        %v322 = vpack.c.bf16 %v290, %v290
        %v323 = vpack.c.bf16 %v291, %v291
        %v324 = vpack.c.bf16 %v292, %v292
        %v325 = vpack.c.bf16 %v293, %v293
        %v326 = vpack.c.bf16 %v294, %v294
        %v327 = vpack.c.bf16 %v295, %v295
        %v328 = vpack.c.bf16 %v296, %v296
        %v329 = vpack.c.bf16 %v297, %v297
        %v330 = vpack.c.bf16 %v298, %v298
        %v331 = vpack.c.bf16 %v299, %v299
        %v332 = vpack.c.bf16 %v300, %v300
        %v333 = vpack.c.bf16 %v301, %v301
        %v334 = vpack.c.bf16 %v302, %v302
        %v335 = vpack.c.bf16 %v303, %v303
        %v336 = vpack.c.bf16 %v304, %v304
        %v337 = vpack.c.bf16 %v305, %v305
        %v338 = vpack.c.bf16 %v306, %v306
        %v339 = vpack.c.bf16 %v307, %v307
        %v340 = vpack.c.bf16 %v308, %v308
        %v341 = vpack.c.bf16 %v309, %v309
        %v342 = vpack.c.bf16 %v310, %v310
        %v343 = vpack.c.bf16 %v311, %v311
        %v344 = vpack.c.bf16 %v312, %v312
        %v345 = vpack.c.bf16 %v313, %v313
        %v346 = vpack.c.bf16 %v314, %v314
        %v347 = vpack.c.bf16 %v315, %v315
        %v348 = vpack.c.bf16 %v316, %v316
        %v349 = vpack.c.bf16 %v317, %v317
        %v350 = vpack.c.bf16 %v318, %v318
        %v351 = vld [vmem:[%s222 + $0x2] sm:$0xff]
        %v352 = vld [vmem:[%s222 + $0xa] sm:$0xff]
        %v353 = vld [vmem:[%s222 + $0x1a] sm:$0xff]
        %v354 = vld [vmem:[%s222 + $0x22] sm:$0xff]
        %v355 = vld [vmem:[%s222 + $0x32] sm:$0xff]
        %v356 = vld [vmem:[%s222 + $0x3a] sm:$0xff]
        %v357 = vld [vmem:[%s222 + $0x4a] sm:$0xff]
        %v358 = vld [vmem:[%s222 + $0x52] sm:$0xff]
        %v359 = vld [vmem:[%s222 + $0x62] sm:$0xff]
        %v360 = vld [vmem:[%s222 + $0x6a] sm:$0xff]
        %v361 = vld [vmem:[%s222 + $0x7a] sm:$0xff]
        %v362 = vld [vmem:[%s222 + $0x82] sm:$0xff]
        %v363 = vld [vmem:[%s222 + $0x92] sm:$0xff]
        %v364 = vld [vmem:[%s222 + $0x9a] sm:$0xff]
        %v365 = vld [vmem:[%s222 + $0xaa] sm:$0xff]
        %v366 = vld [vmem:[%s222 + $0xb2] sm:$0xff]
        %v367 = vld [vmem:[%s222 + $0xc2] sm:$0xff]
        %v368 = vld [vmem:[%s222 + $0xca] sm:$0xff]
        %v369 = vld [vmem:[%s222 + $0xda] sm:$0xff]
        %v370 = vld [vmem:[%s222 + $0xe2] sm:$0xff]
        %v371 = vld [vmem:[%s222 + $0xf2] sm:$0xff]
        %v372 = vld [vmem:[%s222 + $0xfa] sm:$0xff]
        %v373 = vld [vmem:[%s222 + $0x10a] sm:$0xff]
        %v374 = vld [vmem:[%s222 + $0x112] sm:$0xff]
        %v375 = vld [vmem:[%s222 + $0x122] sm:$0xff]
        %v376 = vld [vmem:[%s222 + $0x12a] sm:$0xff]
        %v377 = vld [vmem:[%s222 + $0x13a] sm:$0xff]
        %v378 = vld [vmem:[%s222 + $0x142] sm:$0xff]
        %v379 = vld [vmem:[%s222 + $0x152] sm:$0xff]
        %v380 = vld [vmem:[%s222 + $0x15a] sm:$0xff]
        %v381 = vld [vmem:[%s222 + $0x16a] sm:$0xff]
        %v382 = vld [vmem:[%s222 + $0x172] sm:$0xff]
        %v383 = vpack.c.bf16 %v351, %v351
        %v384 = vpack.c.bf16 %v352, %v352
        %v385 = vpack.c.bf16 %v353, %v353
        %v386 = vpack.c.bf16 %v354, %v354
        %v387 = vpack.c.bf16 %v355, %v355
        %v388 = vpack.c.bf16 %v356, %v356
        %v389 = vpack.c.bf16 %v357, %v357
        %v390 = vpack.c.bf16 %v358, %v358
        %v391 = vpack.c.bf16 %v359, %v359
        %v392 = vpack.c.bf16 %v360, %v360
        %v393 = vpack.c.bf16 %v361, %v361
        %v394 = vpack.c.bf16 %v362, %v362
        %v395 = vpack.c.bf16 %v363, %v363
        %v396 = vpack.c.bf16 %v364, %v364
        %v397 = vpack.c.bf16 %v365, %v365
        %v398 = vpack.c.bf16 %v366, %v366
        %v399 = vpack.c.bf16 %v367, %v367
        %v400 = vpack.c.bf16 %v368, %v368
        %v401 = vpack.c.bf16 %v369, %v369
        %v402 = vpack.c.bf16 %v370, %v370
        %v403 = vpack.c.bf16 %v371, %v371
        %v404 = vpack.c.bf16 %v372, %v372
        %v405 = vpack.c.bf16 %v373, %v373
        %v406 = vpack.c.bf16 %v374, %v374
        %v407 = vpack.c.bf16 %v375, %v375
        %v408 = vpack.c.bf16 %v376, %v376
        %v409 = vpack.c.bf16 %v377, %v377
        %v410 = vpack.c.bf16 %v378, %v378
        %v411 = vpack.c.bf16 %v379, %v379
        %v412 = vpack.c.bf16 %v380, %v380
        %v413 = vpack.c.bf16 %v381, %v381
        %v414 = vpack.c.bf16 %v382, %v382
        %s415 = scalar_lea.vmem %s222, 24
        %v416 = vld [vmem:[%s415] sm:$0xff]
        %v417 = vld [vmem:[%s415 + $0x8] sm:$0xff]
        %v418 = vld [vmem:[%s415 + $0x18] sm:$0xff]
        %v419 = vld [vmem:[%s415 + $0x20] sm:$0xff]
        %v420 = vld [vmem:[%s415 + $0x30] sm:$0xff]
        %v421 = vld [vmem:[%s415 + $0x38] sm:$0xff]
        %v422 = vld [vmem:[%s415 + $0x48] sm:$0xff]
        %v423 = vld [vmem:[%s415 + $0x50] sm:$0xff]
        %v424 = vld [vmem:[%s415 + $0x60] sm:$0xff]
        %v425 = vld [vmem:[%s415 + $0x68] sm:$0xff]
        %v426 = vld [vmem:[%s415 + $0x78] sm:$0xff]
        %v427 = vld [vmem:[%s415 + $0x80] sm:$0xff]
        %v428 = vld [vmem:[%s415 + $0x90] sm:$0xff]
        %v429 = vld [vmem:[%s415 + $0x98] sm:$0xff]
        %v430 = vld [vmem:[%s415 + $0xa8] sm:$0xff]
        %v431 = vld [vmem:[%s415 + $0xb0] sm:$0xff]
        %v432 = vld [vmem:[%s415 + $0xc0] sm:$0xff]
        %v433 = vld [vmem:[%s415 + $0xc8] sm:$0xff]
        %v434 = vld [vmem:[%s415 + $0xd8] sm:$0xff]
        %v435 = vld [vmem:[%s415 + $0xe0] sm:$0xff]
        %v436 = vld [vmem:[%s415 + $0xf0] sm:$0xff]
        %v437 = vld [vmem:[%s415 + $0xf8] sm:$0xff]
        %v438 = vld [vmem:[%s415 + $0x108] sm:$0xff]
        %v439 = vld [vmem:[%s415 + $0x110] sm:$0xff]
        %v440 = vld [vmem:[%s415 + $0x120] sm:$0xff]
        %v441 = vld [vmem:[%s415 + $0x128] sm:$0xff]
        %v442 = vld [vmem:[%s415 + $0x138] sm:$0xff]
        %v443 = vld [vmem:[%s415 + $0x140] sm:$0xff]
        %v444 = vld [vmem:[%s415 + $0x150] sm:$0xff]
        %v445 = vld [vmem:[%s415 + $0x158] sm:$0xff]
        %v446 = vld [vmem:[%s415 + $0x168] sm:$0xff]
        %v447 = vld [vmem:[%s415 + $0x170] sm:$0xff]
        %v448 = vpack.c.bf16 %v416, %v416
        %v449 = vpack.c.bf16 %v417, %v417
        %v450 = vpack.c.bf16 %v418, %v418
        %v451 = vpack.c.bf16 %v419, %v419
        %v452 = vpack.c.bf16 %v420, %v420
        %v453 = vpack.c.bf16 %v421, %v421
        %v454 = vpack.c.bf16 %v422, %v422
        %v455 = vpack.c.bf16 %v423, %v423
        %v456 = vpack.c.bf16 %v424, %v424
        %v457 = vpack.c.bf16 %v425, %v425
        %v458 = vpack.c.bf16 %v426, %v426
        %v459 = vpack.c.bf16 %v427, %v427
        %v460 = vpack.c.bf16 %v428, %v428
        %v461 = vpack.c.bf16 %v429, %v429
        %v462 = vpack.c.bf16 %v430, %v430
        %v463 = vpack.c.bf16 %v431, %v431
        %v464 = vpack.c.bf16 %v432, %v432
        %v465 = vpack.c.bf16 %v433, %v433
        %v466 = vpack.c.bf16 %v434, %v434
        %v467 = vpack.c.bf16 %v435, %v435
        %v468 = vpack.c.bf16 %v436, %v436
        %v469 = vpack.c.bf16 %v437, %v437
        %v470 = vpack.c.bf16 %v438, %v438
        %v471 = vpack.c.bf16 %v439, %v439
        %v472 = vpack.c.bf16 %v440, %v440
        %v473 = vpack.c.bf16 %v441, %v441
        %v474 = vpack.c.bf16 %v442, %v442
        %v475 = vpack.c.bf16 %v443, %v443
        %v476 = vpack.c.bf16 %v444, %v444
        %v477 = vpack.c.bf16 %v445, %v445
        %v478 = vpack.c.bf16 %v446, %v446
        %v479 = vpack.c.bf16 %v447, %v447
        %v480 = vld [vmem:[%s415 + $0x1] sm:$0xff]
        %v481 = vld [vmem:[%s415 + $0x9] sm:$0xff]
        %v482 = vld [vmem:[%s415 + $0x19] sm:$0xff]
        %v483 = vld [vmem:[%s415 + $0x21] sm:$0xff]
        %v484 = vld [vmem:[%s415 + $0x31] sm:$0xff]
        %v485 = vld [vmem:[%s415 + $0x39] sm:$0xff]
        %v486 = vld [vmem:[%s415 + $0x49] sm:$0xff]
        %v487 = vld [vmem:[%s415 + $0x51] sm:$0xff]
        %v488 = vld [vmem:[%s415 + $0x61] sm:$0xff]
        %v489 = vld [vmem:[%s415 + $0x69] sm:$0xff]
        %v490 = vld [vmem:[%s415 + $0x79] sm:$0xff]
        %v491 = vld [vmem:[%s415 + $0x81] sm:$0xff]
        %v492 = vld [vmem:[%s415 + $0x91] sm:$0xff]
        %v493 = vld [vmem:[%s415 + $0x99] sm:$0xff]
        %v494 = vld [vmem:[%s415 + $0xa9] sm:$0xff]
        %v495 = vld [vmem:[%s415 + $0xb1] sm:$0xff]
        %v496 = vld [vmem:[%s415 + $0xc1] sm:$0xff]
        %v497 = vld [vmem:[%s415 + $0xc9] sm:$0xff]
        %v498 = vld [vmem:[%s415 + $0xd9] sm:$0xff]
        %v499 = vld [vmem:[%s415 + $0xe1] sm:$0xff]
        %v500 = vld [vmem:[%s415 + $0xf1] sm:$0xff]
        %v501 = vld [vmem:[%s415 + $0xf9] sm:$0xff]
        %v502 = vld [vmem:[%s415 + $0x109] sm:$0xff]
        %v503 = vld [vmem:[%s415 + $0x111] sm:$0xff]
        %v504 = vld [vmem:[%s415 + $0x121] sm:$0xff]
        %v505 = vld [vmem:[%s415 + $0x129] sm:$0xff]
        %v506 = vld [vmem:[%s415 + $0x139] sm:$0xff]
        %v507 = vld [vmem:[%s415 + $0x141] sm:$0xff]
        %v508 = vld [vmem:[%s415 + $0x151] sm:$0xff]
        %v509 = vld [vmem:[%s415 + $0x159] sm:$0xff]
        %v510 = vld [vmem:[%s415 + $0x169] sm:$0xff]
        %v511 = vld [vmem:[%s415 + $0x171] sm:$0xff]
        %v512 = vpack.c.bf16 %v480, %v480
        %v513 = vpack.c.bf16 %v481, %v481
        %v514 = vpack.c.bf16 %v482, %v482
        %v515 = vpack.c.bf16 %v483, %v483
        %v516 = vpack.c.bf16 %v484, %v484
        %v517 = vpack.c.bf16 %v485, %v485
        %v518 = vpack.c.bf16 %v486, %v486
        %v519 = vpack.c.bf16 %v487, %v487
        %v520 = vpack.c.bf16 %v488, %v488
        %v521 = vpack.c.bf16 %v489, %v489
        %v522 = vpack.c.bf16 %v490, %v490
        %v523 = vpack.c.bf16 %v491, %v491
        %v524 = vpack.c.bf16 %v492, %v492
        %v525 = vpack.c.bf16 %v493, %v493
        %v526 = vpack.c.bf16 %v494, %v494
        %v527 = vpack.c.bf16 %v495, %v495
        %v528 = vpack.c.bf16 %v496, %v496
        %v529 = vpack.c.bf16 %v497, %v497
        %v530 = vpack.c.bf16 %v498, %v498
        %v531 = vpack.c.bf16 %v499, %v499
        %v532 = vpack.c.bf16 %v500, %v500
        %v533 = vpack.c.bf16 %v501, %v501
        %v534 = vpack.c.bf16 %v502, %v502
        %v535 = vpack.c.bf16 %v503, %v503
        %v536 = vpack.c.bf16 %v504, %v504
        %v537 = vpack.c.bf16 %v505, %v505
        %v538 = vpack.c.bf16 %v506, %v506
        %v539 = vpack.c.bf16 %v507, %v507
        %v540 = vpack.c.bf16 %v508, %v508
        %v541 = vpack.c.bf16 %v509, %v509
        %v542 = vpack.c.bf16 %v510, %v510
        %v543 = vpack.c.bf16 %v511, %v511
        %v544 = vld [vmem:[%s415 + $0x2] sm:$0xff]
        %v545 = vld [vmem:[%s415 + $0xa] sm:$0xff]
        %v546 = vld [vmem:[%s415 + $0x1a] sm:$0xff]
        %v547 = vld [vmem:[%s415 + $0x22] sm:$0xff]
        %v548 = vld [vmem:[%s415 + $0x32] sm:$0xff]
        %v549 = vld [vmem:[%s415 + $0x3a] sm:$0xff]
        %v550 = vld [vmem:[%s415 + $0x4a] sm:$0xff]
        %v551 = vld [vmem:[%s415 + $0x52] sm:$0xff]
        %v552 = vld [vmem:[%s415 + $0x62] sm:$0xff]
        %v553 = vld [vmem:[%s415 + $0x6a] sm:$0xff]
        %v554 = vld [vmem:[%s415 + $0x7a] sm:$0xff]
        %v555 = vld [vmem:[%s415 + $0x82] sm:$0xff]
        %v556 = vld [vmem:[%s415 + $0x92] sm:$0xff]
        %v557 = vld [vmem:[%s415 + $0x9a] sm:$0xff]
        %v558 = vld [vmem:[%s415 + $0xaa] sm:$0xff]
        %v559 = vld [vmem:[%s415 + $0xb2] sm:$0xff]
        %v560 = vld [vmem:[%s415 + $0xc2] sm:$0xff]
        %v561 = vld [vmem:[%s415 + $0xca] sm:$0xff]
        %v562 = vld [vmem:[%s415 + $0xda] sm:$0xff]
        %v563 = vld [vmem:[%s415 + $0xe2] sm:$0xff]
        %v564 = vld [vmem:[%s415 + $0xf2] sm:$0xff]
        %v565 = vld [vmem:[%s415 + $0xfa] sm:$0xff]
        %v566 = vld [vmem:[%s415 + $0x10a] sm:$0xff]
        %v567 = vld [vmem:[%s415 + $0x112] sm:$0xff]
        %v568 = vld [vmem:[%s415 + $0x122] sm:$0xff]
        %v569 = vld [vmem:[%s415 + $0x12a] sm:$0xff]
        %v570 = vld [vmem:[%s415 + $0x13a] sm:$0xff]
        %v571 = vld [vmem:[%s415 + $0x142] sm:$0xff]
        %v572 = vld [vmem:[%s415 + $0x152] sm:$0xff]
        %v573 = vld [vmem:[%s415 + $0x15a] sm:$0xff]
        %v574 = vld [vmem:[%s415 + $0x16a] sm:$0xff]
        %v575 = vld [vmem:[%s415 + $0x172] sm:$0xff]
        %v576 = vpack.c.bf16 %v544, %v544
        %v577 = vpack.c.bf16 %v545, %v545
        %v578 = vpack.c.bf16 %v546, %v546
        %v579 = vpack.c.bf16 %v547, %v547
        %v580 = vpack.c.bf16 %v548, %v548
        %v581 = vpack.c.bf16 %v549, %v549
        %v582 = vpack.c.bf16 %v550, %v550
        %v583 = vpack.c.bf16 %v551, %v551
        %v584 = vpack.c.bf16 %v552, %v552
        %v585 = vpack.c.bf16 %v553, %v553
        %v586 = vpack.c.bf16 %v554, %v554
        %v587 = vpack.c.bf16 %v555, %v555
        %v588 = vpack.c.bf16 %v556, %v556
        %v589 = vpack.c.bf16 %v557, %v557
        %v590 = vpack.c.bf16 %v558, %v558
        %v591 = vpack.c.bf16 %v559, %v559
        %v592 = vpack.c.bf16 %v560, %v560
        %v593 = vpack.c.bf16 %v561, %v561
        %v594 = vpack.c.bf16 %v562, %v562
        %v595 = vpack.c.bf16 %v563, %v563
        %v596 = vpack.c.bf16 %v564, %v564
        %v597 = vpack.c.bf16 %v565, %v565
        %v598 = vpack.c.bf16 %v566, %v566
        %v599 = vpack.c.bf16 %v567, %v567
        %v600 = vpack.c.bf16 %v568, %v568
        %v601 = vpack.c.bf16 %v569, %v569
        %v602 = vpack.c.bf16 %v570, %v570
        %v603 = vpack.c.bf16 %v571, %v571
        %v604 = vpack.c.bf16 %v572, %v572
        %v605 = vpack.c.bf16 %v573, %v573
        %v606 = vpack.c.bf16 %v574, %v574
        %v607 = vpack.c.bf16 %v575, %v575
        %s608 = scalar_lea.vmem %s222, 48
        %v609 = vld [vmem:[%s608] sm:$0xff]
        %v610 = vld [vmem:[%s608 + $0x8] sm:$0xff]
        %v611 = vld [vmem:[%s608 + $0x18] sm:$0xff]
        %v612 = vld [vmem:[%s608 + $0x20] sm:$0xff]
        %v613 = vld [vmem:[%s608 + $0x30] sm:$0xff]
        %v614 = vld [vmem:[%s608 + $0x38] sm:$0xff]
        %v615 = vld [vmem:[%s608 + $0x48] sm:$0xff]
        %v616 = vld [vmem:[%s608 + $0x50] sm:$0xff]
        %v617 = vld [vmem:[%s608 + $0x60] sm:$0xff]
        %v618 = vld [vmem:[%s608 + $0x68] sm:$0xff]
        %v619 = vld [vmem:[%s608 + $0x78] sm:$0xff]
        %v620 = vld [vmem:[%s608 + $0x80] sm:$0xff]
        %v621 = vld [vmem:[%s608 + $0x90] sm:$0xff]
        %v622 = vld [vmem:[%s608 + $0x98] sm:$0xff]
        %v623 = vld [vmem:[%s608 + $0xa8] sm:$0xff]
        %v624 = vld [vmem:[%s608 + $0xb0] sm:$0xff]
        %v625 = vld [vmem:[%s608 + $0xc0] sm:$0xff]
        %v626 = vld [vmem:[%s608 + $0xc8] sm:$0xff]
        %v627 = vld [vmem:[%s608 + $0xd8] sm:$0xff]
        %v628 = vld [vmem:[%s608 + $0xe0] sm:$0xff]
        %v629 = vld [vmem:[%s608 + $0xf0] sm:$0xff]
        %v630 = vld [vmem:[%s608 + $0xf8] sm:$0xff]
        %v631 = vld [vmem:[%s608 + $0x108] sm:$0xff]
        %v632 = vld [vmem:[%s608 + $0x110] sm:$0xff]
        %v633 = vld [vmem:[%s608 + $0x120] sm:$0xff]
        %v634 = vld [vmem:[%s608 + $0x128] sm:$0xff]
        %v635 = vld [vmem:[%s608 + $0x138] sm:$0xff]
        %v636 = vld [vmem:[%s608 + $0x140] sm:$0xff]
        %v637 = vld [vmem:[%s608 + $0x150] sm:$0xff]
        %v638 = vld [vmem:[%s608 + $0x158] sm:$0xff]
        %v639 = vld [vmem:[%s608 + $0x168] sm:$0xff]
        %v640 = vld [vmem:[%s608 + $0x170] sm:$0xff]
        %v641 = vpack.c.bf16 %v609, %v609
        %v642 = vpack.c.bf16 %v610, %v610
        %v643 = vpack.c.bf16 %v611, %v611
        %v644 = vpack.c.bf16 %v612, %v612
        %v645 = vpack.c.bf16 %v613, %v613
        %v646 = vpack.c.bf16 %v614, %v614
        %v647 = vpack.c.bf16 %v615, %v615
        %v648 = vpack.c.bf16 %v616, %v616
        %v649 = vpack.c.bf16 %v617, %v617
        %v650 = vpack.c.bf16 %v618, %v618
        %v651 = vpack.c.bf16 %v619, %v619
        %v652 = vpack.c.bf16 %v620, %v620
        %v653 = vpack.c.bf16 %v621, %v621
        %v654 = vpack.c.bf16 %v622, %v622
        %v655 = vpack.c.bf16 %v623, %v623
        %v656 = vpack.c.bf16 %v624, %v624
        %v657 = vpack.c.bf16 %v625, %v625
        %v658 = vpack.c.bf16 %v626, %v626
        %v659 = vpack.c.bf16 %v627, %v627
        %v660 = vpack.c.bf16 %v628, %v628
        %v661 = vpack.c.bf16 %v629, %v629
        %v662 = vpack.c.bf16 %v630, %v630
        %v663 = vpack.c.bf16 %v631, %v631
        %v664 = vpack.c.bf16 %v632, %v632
        %v665 = vpack.c.bf16 %v633, %v633
        %v666 = vpack.c.bf16 %v634, %v634
        %v667 = vpack.c.bf16 %v635, %v635
        %v668 = vpack.c.bf16 %v636, %v636
        %v669 = vpack.c.bf16 %v637, %v637
        %v670 = vpack.c.bf16 %v638, %v638
        %v671 = vpack.c.bf16 %v639, %v639
        %v672 = vpack.c.bf16 %v640, %v640
        %v673 = vld [vmem:[%s608 + $0x1] sm:$0xff]
        %v674 = vld [vmem:[%s608 + $0x9] sm:$0xff]
        %v675 = vld [vmem:[%s608 + $0x19] sm:$0xff]
        %v676 = vld [vmem:[%s608 + $0x21] sm:$0xff]
        %v677 = vld [vmem:[%s608 + $0x31] sm:$0xff]
        %v678 = vld [vmem:[%s608 + $0x39] sm:$0xff]
        %v679 = vld [vmem:[%s608 + $0x49] sm:$0xff]
        %v680 = vld [vmem:[%s608 + $0x51] sm:$0xff]
        %v681 = vld [vmem:[%s608 + $0x61] sm:$0xff]
        %v682 = vld [vmem:[%s608 + $0x69] sm:$0xff]
        %v683 = vld [vmem:[%s608 + $0x79] sm:$0xff]
        %v684 = vld [vmem:[%s608 + $0x81] sm:$0xff]
        %v685 = vld [vmem:[%s608 + $0x91] sm:$0xff]
        %v686 = vld [vmem:[%s608 + $0x99] sm:$0xff]
        %v687 = vld [vmem:[%s608 + $0xa9] sm:$0xff]
        %v688 = vld [vmem:[%s608 + $0xb1] sm:$0xff]
        %v689 = vld [vmem:[%s608 + $0xc1] sm:$0xff]
        %v690 = vld [vmem:[%s608 + $0xc9] sm:$0xff]
        %v691 = vld [vmem:[%s608 + $0xd9] sm:$0xff]
        %v692 = vld [vmem:[%s608 + $0xe1] sm:$0xff]
        %v693 = vld [vmem:[%s608 + $0xf1] sm:$0xff]
        %v694 = vld [vmem:[%s608 + $0xf9] sm:$0xff]
        %v695 = vld [vmem:[%s608 + $0x109] sm:$0xff]
        %v696 = vld [vmem:[%s608 + $0x111] sm:$0xff]
        %v697 = vld [vmem:[%s608 + $0x121] sm:$0xff]
        %v698 = vld [vmem:[%s608 + $0x129] sm:$0xff]
        %v699 = vld [vmem:[%s608 + $0x139] sm:$0xff]
        %v700 = vld [vmem:[%s608 + $0x141] sm:$0xff]
        %v701 = vld [vmem:[%s608 + $0x151] sm:$0xff]
        %v702 = vld [vmem:[%s608 + $0x159] sm:$0xff]
        %v703 = vld [vmem:[%s608 + $0x169] sm:$0xff]
        %v704 = vld [vmem:[%s608 + $0x171] sm:$0xff]
        %v705 = vpack.c.bf16 %v673, %v673
        %v706 = vpack.c.bf16 %v674, %v674
        %v707 = vpack.c.bf16 %v675, %v675
        %v708 = vpack.c.bf16 %v676, %v676
        %v709 = vpack.c.bf16 %v677, %v677
        %v710 = vpack.c.bf16 %v678, %v678
        %v711 = vpack.c.bf16 %v679, %v679
        %v712 = vpack.c.bf16 %v680, %v680
        %v713 = vpack.c.bf16 %v681, %v681
        %v714 = vpack.c.bf16 %v682, %v682
        %v715 = vpack.c.bf16 %v683, %v683
        %v716 = vpack.c.bf16 %v684, %v684
        %v717 = vpack.c.bf16 %v685, %v685
        %v718 = vpack.c.bf16 %v686, %v686
        %v719 = vpack.c.bf16 %v687, %v687
        %v720 = vpack.c.bf16 %v688, %v688
        %v721 = vpack.c.bf16 %v689, %v689
        %v722 = vpack.c.bf16 %v690, %v690
        %v723 = vpack.c.bf16 %v691, %v691
        %v724 = vpack.c.bf16 %v692, %v692
        %v725 = vpack.c.bf16 %v693, %v693
        %v726 = vpack.c.bf16 %v694, %v694
        %v727 = vpack.c.bf16 %v695, %v695
        %v728 = vpack.c.bf16 %v696, %v696
        %v729 = vpack.c.bf16 %v697, %v697
        %v730 = vpack.c.bf16 %v698, %v698
        %v731 = vpack.c.bf16 %v699, %v699
        %v732 = vpack.c.bf16 %v700, %v700
        %v733 = vpack.c.bf16 %v701, %v701
        %v734 = vpack.c.bf16 %v702, %v702
        %v735 = vpack.c.bf16 %v703, %v703
        %v736 = vpack.c.bf16 %v704, %v704
        %v737 = vld [vmem:[%s608 + $0x2] sm:$0xff]
        %v738 = vld [vmem:[%s608 + $0xa] sm:$0xff]
        %v739 = vld [vmem:[%s608 + $0x1a] sm:$0xff]
        %v740 = vld [vmem:[%s608 + $0x22] sm:$0xff]
        %v741 = vld [vmem:[%s608 + $0x32] sm:$0xff]
        %v742 = vld [vmem:[%s608 + $0x3a] sm:$0xff]
        %v743 = vld [vmem:[%s608 + $0x4a] sm:$0xff]
        %v744 = vld [vmem:[%s608 + $0x52] sm:$0xff]
        %v745 = vld [vmem:[%s608 + $0x62] sm:$0xff]
        %v746 = vld [vmem:[%s608 + $0x6a] sm:$0xff]
        %v747 = vld [vmem:[%s608 + $0x7a] sm:$0xff]
        %v748 = vld [vmem:[%s608 + $0x82] sm:$0xff]
        %v749 = vld [vmem:[%s608 + $0x92] sm:$0xff]
        %v750 = vld [vmem:[%s608 + $0x9a] sm:$0xff]
        %v751 = vld [vmem:[%s608 + $0xaa] sm:$0xff]
        %v752 = vld [vmem:[%s608 + $0xb2] sm:$0xff]
        %v753 = vld [vmem:[%s608 + $0xc2] sm:$0xff]
        %v754 = vld [vmem:[%s608 + $0xca] sm:$0xff]
        %v755 = vld [vmem:[%s608 + $0xda] sm:$0xff]
        %v756 = vld [vmem:[%s608 + $0xe2] sm:$0xff]
        %v757 = vld [vmem:[%s608 + $0xf2] sm:$0xff]
        %v758 = vld [vmem:[%s608 + $0xfa] sm:$0xff]
        %v759 = vld [vmem:[%s608 + $0x10a] sm:$0xff]
        %v760 = vld [vmem:[%s608 + $0x112] sm:$0xff]
        %v761 = vld [vmem:[%s608 + $0x122] sm:$0xff]
        %v762 = vld [vmem:[%s608 + $0x12a] sm:$0xff]
        %v763 = vld [vmem:[%s608 + $0x13a] sm:$0xff]
        %v764 = vld [vmem:[%s608 + $0x142] sm:$0xff]
        %v765 = vld [vmem:[%s608 + $0x152] sm:$0xff]
        %v766 = vld [vmem:[%s608 + $0x15a] sm:$0xff]
        %v767 = vld [vmem:[%s608 + $0x16a] sm:$0xff]
        %v768 = vld [vmem:[%s608 + $0x172] sm:$0xff]
        %v769 = vpack.c.bf16 %v737, %v737
        %v770 = vpack.c.bf16 %v738, %v738
        %v771 = vpack.c.bf16 %v739, %v739
        %v772 = vpack.c.bf16 %v740, %v740
        %v773 = vpack.c.bf16 %v741, %v741
        %v774 = vpack.c.bf16 %v742, %v742
        %v775 = vpack.c.bf16 %v743, %v743
        %v776 = vpack.c.bf16 %v744, %v744
        %v777 = vpack.c.bf16 %v745, %v745
        %v778 = vpack.c.bf16 %v746, %v746
        %v779 = vpack.c.bf16 %v747, %v747
        %v780 = vpack.c.bf16 %v748, %v748
        %v781 = vpack.c.bf16 %v749, %v749
        %v782 = vpack.c.bf16 %v750, %v750
        %v783 = vpack.c.bf16 %v751, %v751
        %v784 = vpack.c.bf16 %v752, %v752
        %v785 = vpack.c.bf16 %v753, %v753
        %v786 = vpack.c.bf16 %v754, %v754
        %v787 = vpack.c.bf16 %v755, %v755
        %v788 = vpack.c.bf16 %v756, %v756
        %v789 = vpack.c.bf16 %v757, %v757
        %v790 = vpack.c.bf16 %v758, %v758
        %v791 = vpack.c.bf16 %v759, %v759
        %v792 = vpack.c.bf16 %v760, %v760
        %v793 = vpack.c.bf16 %v761, %v761
        %v794 = vpack.c.bf16 %v762, %v762
        %v795 = vpack.c.bf16 %v763, %v763
        %v796 = vpack.c.bf16 %v764, %v764
        %v797 = vpack.c.bf16 %v765, %v765
        %v798 = vpack.c.bf16 %v766, %v766
        %v799 = vpack.c.bf16 %v767, %v767
        %v800 = vpack.c.bf16 %v768, %v768
        %v833 = vunpack.c.l.b16 %v255
        %v834 = vunpack.c.l.b16 %v256
        %v835 = vunpack.c.l.b16 %v257
        %v836 = vunpack.c.l.b16 %v258
        %v837 = vunpack.c.l.b16 %v259
        %v838 = vunpack.c.l.b16 %v260
        %v839 = vunpack.c.l.b16 %v261
        %v840 = vunpack.c.l.b16 %v262
        %v841 = vunpack.c.l.b16 %v263
        %v842 = vunpack.c.l.b16 %v264
        %v843 = vunpack.c.l.b16 %v265
        %v844 = vunpack.c.l.b16 %v266
        %v845 = vunpack.c.l.b16 %v267
        %v846 = vunpack.c.l.b16 %v268
        %v847 = vunpack.c.l.b16 %v269
        %v848 = vunpack.c.l.b16 %v270
        %v849 = vunpack.c.l.b16 %v271
        %v850 = vunpack.c.l.b16 %v272
        %v851 = vunpack.c.l.b16 %v273
        %v852 = vunpack.c.l.b16 %v274
        %v853 = vunpack.c.l.b16 %v275
        %v854 = vunpack.c.l.b16 %v276
        %v855 = vunpack.c.l.b16 %v277
        %v856 = vunpack.c.l.b16 %v278
        %v857 = vunpack.c.l.b16 %v279
        %v858 = vunpack.c.l.b16 %v280
        %v859 = vunpack.c.l.b16 %v281
        %v860 = vunpack.c.l.b16 %v282
        %v861 = vunpack.c.l.b16 %v283
        %v862 = vunpack.c.l.b16 %v284
        %v863 = vunpack.c.l.b16 %v285
        %v864 = vunpack.c.l.b16 %v286
        %v865 = vpack.c.b16 %v834, %v833
        %v866 = vpack.c.b16 %v836, %v835
        %v867 = vpack.c.b16 %v838, %v837
        %v868 = vpack.c.b16 %v840, %v839
        %v869 = vpack.c.b16 %v842, %v841
        %v870 = vpack.c.b16 %v844, %v843
        %v871 = vpack.c.b16 %v846, %v845
        %v872 = vpack.c.b16 %v848, %v847
        %v873 = vpack.c.b16 %v850, %v849
        %v874 = vpack.c.b16 %v852, %v851
        %v875 = vpack.c.b16 %v854, %v853
        %v876 = vpack.c.b16 %v856, %v855
        %v877 = vpack.c.b16 %v858, %v857
        %v878 = vpack.c.b16 %v860, %v859
        %v879 = vpack.c.b16 %v862, %v861
        %v880 = vpack.c.b16 %v864, %v863
        %v929 = vunpack.c.l.b16 %v319
        %v930 = vunpack.c.l.b16 %v320
        %v931 = vunpack.c.l.b16 %v321
        %v932 = vunpack.c.l.b16 %v322
        %v933 = vunpack.c.l.b16 %v323
        %v934 = vunpack.c.l.b16 %v324
        %v935 = vunpack.c.l.b16 %v325
        %v936 = vunpack.c.l.b16 %v326
        %v937 = vunpack.c.l.b16 %v327
        %v938 = vunpack.c.l.b16 %v328
        %v939 = vunpack.c.l.b16 %v329
        %v940 = vunpack.c.l.b16 %v330
        %v941 = vunpack.c.l.b16 %v331
        %v942 = vunpack.c.l.b16 %v332
        %v943 = vunpack.c.l.b16 %v333
        %v944 = vunpack.c.l.b16 %v334
        %v945 = vunpack.c.l.b16 %v335
        %v946 = vunpack.c.l.b16 %v336
        %v947 = vunpack.c.l.b16 %v337
        %v948 = vunpack.c.l.b16 %v338
        %v949 = vunpack.c.l.b16 %v339
        %v950 = vunpack.c.l.b16 %v340
        %v951 = vunpack.c.l.b16 %v341
        %v952 = vunpack.c.l.b16 %v342
        %v953 = vunpack.c.l.b16 %v343
        %v954 = vunpack.c.l.b16 %v344
        %v955 = vunpack.c.l.b16 %v345
        %v956 = vunpack.c.l.b16 %v346
        %v957 = vunpack.c.l.b16 %v347
        %v958 = vunpack.c.l.b16 %v348
        %v959 = vunpack.c.l.b16 %v349
        %v960 = vunpack.c.l.b16 %v350
        %v961 = vpack.c.b16 %v930, %v929
        %v962 = vpack.c.b16 %v932, %v931
        %v963 = vpack.c.b16 %v934, %v933
        %v964 = vpack.c.b16 %v936, %v935
        %v965 = vpack.c.b16 %v938, %v937
        %v966 = vpack.c.b16 %v940, %v939
        %v967 = vpack.c.b16 %v942, %v941
        %v968 = vpack.c.b16 %v944, %v943
        %v969 = vpack.c.b16 %v946, %v945
        %v970 = vpack.c.b16 %v948, %v947
        %v971 = vpack.c.b16 %v950, %v949
        %v972 = vpack.c.b16 %v952, %v951
        %v973 = vpack.c.b16 %v954, %v953
        %v974 = vpack.c.b16 %v956, %v955
        %v975 = vpack.c.b16 %v958, %v957
        %v976 = vpack.c.b16 %v960, %v959
        %v1025 = vunpack.c.l.b16 %v383
        %v1026 = vunpack.c.l.b16 %v384
        %v1027 = vunpack.c.l.b16 %v385
        %v1028 = vunpack.c.l.b16 %v386
        %v1029 = vunpack.c.l.b16 %v387
        %v1030 = vunpack.c.l.b16 %v388
        %v1031 = vunpack.c.l.b16 %v389
        %v1032 = vunpack.c.l.b16 %v390
        %v1033 = vunpack.c.l.b16 %v391
        %v1034 = vunpack.c.l.b16 %v392
        %v1035 = vunpack.c.l.b16 %v393
        %v1036 = vunpack.c.l.b16 %v394
        %v1037 = vunpack.c.l.b16 %v395
        %v1038 = vunpack.c.l.b16 %v396
        %v1039 = vunpack.c.l.b16 %v397
        %v1040 = vunpack.c.l.b16 %v398
        %v1041 = vunpack.c.l.b16 %v399
        %v1042 = vunpack.c.l.b16 %v400
        %v1043 = vunpack.c.l.b16 %v401
        %v1044 = vunpack.c.l.b16 %v402
        %v1045 = vunpack.c.l.b16 %v403
        %v1046 = vunpack.c.l.b16 %v404
        %v1047 = vunpack.c.l.b16 %v405
        %v1048 = vunpack.c.l.b16 %v406
        %v1049 = vunpack.c.l.b16 %v407
        %v1050 = vunpack.c.l.b16 %v408
        %v1051 = vunpack.c.l.b16 %v409
        %v1052 = vunpack.c.l.b16 %v410
        %v1053 = vunpack.c.l.b16 %v411
        %v1054 = vunpack.c.l.b16 %v412
        %v1055 = vunpack.c.l.b16 %v413
        %v1056 = vunpack.c.l.b16 %v414
        %v1057 = vpack.c.b16 %v1026, %v1025
        %v1058 = vpack.c.b16 %v1028, %v1027
        %v1059 = vpack.c.b16 %v1030, %v1029
        %v1060 = vpack.c.b16 %v1032, %v1031
        %v1061 = vpack.c.b16 %v1034, %v1033
        %v1062 = vpack.c.b16 %v1036, %v1035
        %v1063 = vpack.c.b16 %v1038, %v1037
        %v1064 = vpack.c.b16 %v1040, %v1039
        %v1065 = vpack.c.b16 %v1042, %v1041
        %v1066 = vpack.c.b16 %v1044, %v1043
        %v1067 = vpack.c.b16 %v1046, %v1045
        %v1068 = vpack.c.b16 %v1048, %v1047
        %v1069 = vpack.c.b16 %v1050, %v1049
        %v1070 = vpack.c.b16 %v1052, %v1051
        %v1071 = vpack.c.b16 %v1054, %v1053
        %v1072 = vpack.c.b16 %v1056, %v1055
        %v1121 = vunpack.c.l.b16 %v448
        %v1122 = vunpack.c.l.b16 %v449
        %v1123 = vunpack.c.l.b16 %v450
        %v1124 = vunpack.c.l.b16 %v451
        %v1125 = vunpack.c.l.b16 %v452
        %v1126 = vunpack.c.l.b16 %v453
        %v1127 = vunpack.c.l.b16 %v454
        %v1128 = vunpack.c.l.b16 %v455
        %v1129 = vunpack.c.l.b16 %v456
        %v1130 = vunpack.c.l.b16 %v457
        %v1131 = vunpack.c.l.b16 %v458
        %v1132 = vunpack.c.l.b16 %v459
        %v1133 = vunpack.c.l.b16 %v460
        %v1134 = vunpack.c.l.b16 %v461
        %v1135 = vunpack.c.l.b16 %v462
        %v1136 = vunpack.c.l.b16 %v463
        %v1137 = vunpack.c.l.b16 %v464
        %v1138 = vunpack.c.l.b16 %v465
        %v1139 = vunpack.c.l.b16 %v466
        %v1140 = vunpack.c.l.b16 %v467
        %v1141 = vunpack.c.l.b16 %v468
        %v1142 = vunpack.c.l.b16 %v469
        %v1143 = vunpack.c.l.b16 %v470
        %v1144 = vunpack.c.l.b16 %v471
        %v1145 = vunpack.c.l.b16 %v472
        %v1146 = vunpack.c.l.b16 %v473
        %v1147 = vunpack.c.l.b16 %v474
        %v1148 = vunpack.c.l.b16 %v475
        %v1149 = vunpack.c.l.b16 %v476
        %v1150 = vunpack.c.l.b16 %v477
        %v1151 = vunpack.c.l.b16 %v478
        %v1152 = vunpack.c.l.b16 %v479
        %v1153 = vpack.c.b16 %v1122, %v1121
        %v1154 = vpack.c.b16 %v1124, %v1123
        %v1155 = vpack.c.b16 %v1126, %v1125
        %v1156 = vpack.c.b16 %v1128, %v1127
        %v1157 = vpack.c.b16 %v1130, %v1129
        %v1158 = vpack.c.b16 %v1132, %v1131
        %v1159 = vpack.c.b16 %v1134, %v1133
        %v1160 = vpack.c.b16 %v1136, %v1135
        %v1161 = vpack.c.b16 %v1138, %v1137
        %v1162 = vpack.c.b16 %v1140, %v1139
        %v1163 = vpack.c.b16 %v1142, %v1141
        %v1164 = vpack.c.b16 %v1144, %v1143
        %v1165 = vpack.c.b16 %v1146, %v1145
        %v1166 = vpack.c.b16 %v1148, %v1147
        %v1167 = vpack.c.b16 %v1150, %v1149
        %v1168 = vpack.c.b16 %v1152, %v1151
        %v1217 = vunpack.c.l.b16 %v512
        %v1218 = vunpack.c.l.b16 %v513
        %v1219 = vunpack.c.l.b16 %v514
        %v1220 = vunpack.c.l.b16 %v515
        %v1221 = vunpack.c.l.b16 %v516
        %v1222 = vunpack.c.l.b16 %v517
        %v1223 = vunpack.c.l.b16 %v518
        %v1224 = vunpack.c.l.b16 %v519
        %v1225 = vunpack.c.l.b16 %v520
        %v1226 = vunpack.c.l.b16 %v521
        %v1227 = vunpack.c.l.b16 %v522
        %v1228 = vunpack.c.l.b16 %v523
        %v1229 = vunpack.c.l.b16 %v524
        %v1230 = vunpack.c.l.b16 %v525
        %v1231 = vunpack.c.l.b16 %v526
        %v1232 = vunpack.c.l.b16 %v527
        %v1233 = vunpack.c.l.b16 %v528
        %v1234 = vunpack.c.l.b16 %v529
        %v1235 = vunpack.c.l.b16 %v530
        %v1236 = vunpack.c.l.b16 %v531
        %v1237 = vunpack.c.l.b16 %v532
        %v1238 = vunpack.c.l.b16 %v533
        %v1239 = vunpack.c.l.b16 %v534
        %v1240 = vunpack.c.l.b16 %v535
        %v1241 = vunpack.c.l.b16 %v536
        %v1242 = vunpack.c.l.b16 %v537
        %v1243 = vunpack.c.l.b16 %v538
        %v1244 = vunpack.c.l.b16 %v539
        %v1245 = vunpack.c.l.b16 %v540
        %v1246 = vunpack.c.l.b16 %v541
        %v1247 = vunpack.c.l.b16 %v542
        %v1248 = vunpack.c.l.b16 %v543
        %v1249 = vpack.c.b16 %v1218, %v1217
        %v1250 = vpack.c.b16 %v1220, %v1219
        %v1251 = vpack.c.b16 %v1222, %v1221
        %v1252 = vpack.c.b16 %v1224, %v1223
        %v1253 = vpack.c.b16 %v1226, %v1225
        %v1254 = vpack.c.b16 %v1228, %v1227
        %v1255 = vpack.c.b16 %v1230, %v1229
        %v1256 = vpack.c.b16 %v1232, %v1231
        %v1257 = vpack.c.b16 %v1234, %v1233
        %v1258 = vpack.c.b16 %v1236, %v1235
        %v1259 = vpack.c.b16 %v1238, %v1237
        %v1260 = vpack.c.b16 %v1240, %v1239
        %v1261 = vpack.c.b16 %v1242, %v1241
        %v1262 = vpack.c.b16 %v1244, %v1243
        %v1263 = vpack.c.b16 %v1246, %v1245
        %v1264 = vpack.c.b16 %v1248, %v1247
        %v1313 = vunpack.c.l.b16 %v576
        %v1314 = vunpack.c.l.b16 %v577
        %v1315 = vunpack.c.l.b16 %v578
        %v1316 = vunpack.c.l.b16 %v579
        %v1317 = vunpack.c.l.b16 %v580
        %v1318 = vunpack.c.l.b16 %v581
        %v1319 = vunpack.c.l.b16 %v582
        %v1320 = vunpack.c.l.b16 %v583
        %v1321 = vunpack.c.l.b16 %v584
        %v1322 = vunpack.c.l.b16 %v585
        %v1323 = vunpack.c.l.b16 %v586
        %v1324 = vunpack.c.l.b16 %v587
        %v1325 = vunpack.c.l.b16 %v588
        %v1326 = vunpack.c.l.b16 %v589
        %v1327 = vunpack.c.l.b16 %v590
        %v1328 = vunpack.c.l.b16 %v591
        %v1329 = vunpack.c.l.b16 %v592
        %v1330 = vunpack.c.l.b16 %v593
        %v1331 = vunpack.c.l.b16 %v594
        %v1332 = vunpack.c.l.b16 %v595
        %v1333 = vunpack.c.l.b16 %v596
        %v1334 = vunpack.c.l.b16 %v597
        %v1335 = vunpack.c.l.b16 %v598
        %v1336 = vunpack.c.l.b16 %v599
        %v1337 = vunpack.c.l.b16 %v600
        %v1338 = vunpack.c.l.b16 %v601
        %v1339 = vunpack.c.l.b16 %v602
        %v1340 = vunpack.c.l.b16 %v603
        %v1341 = vunpack.c.l.b16 %v604
        %v1342 = vunpack.c.l.b16 %v605
        %v1343 = vunpack.c.l.b16 %v606
        %v1344 = vunpack.c.l.b16 %v607
        %v1345 = vpack.c.b16 %v1314, %v1313
        %v1346 = vpack.c.b16 %v1316, %v1315
        %v1347 = vpack.c.b16 %v1318, %v1317
        %v1348 = vpack.c.b16 %v1320, %v1319
        %v1349 = vpack.c.b16 %v1322, %v1321
        %v1350 = vpack.c.b16 %v1324, %v1323
        %v1351 = vpack.c.b16 %v1326, %v1325
        %v1352 = vpack.c.b16 %v1328, %v1327
        %v1353 = vpack.c.b16 %v1330, %v1329
        %v1354 = vpack.c.b16 %v1332, %v1331
        %v1355 = vpack.c.b16 %v1334, %v1333
        %v1356 = vpack.c.b16 %v1336, %v1335
        %v1357 = vpack.c.b16 %v1338, %v1337
        %v1358 = vpack.c.b16 %v1340, %v1339
        %v1359 = vpack.c.b16 %v1342, %v1341
        %v1360 = vpack.c.b16 %v1344, %v1343
        %v1409 = vunpack.c.l.b16 %v641
        %v1410 = vunpack.c.l.b16 %v642
        %v1411 = vunpack.c.l.b16 %v643
        %v1412 = vunpack.c.l.b16 %v644
        %v1413 = vunpack.c.l.b16 %v645
        %v1414 = vunpack.c.l.b16 %v646
        %v1415 = vunpack.c.l.b16 %v647
        %v1416 = vunpack.c.l.b16 %v648
        %v1417 = vunpack.c.l.b16 %v649
        %v1418 = vunpack.c.l.b16 %v650
        %v1419 = vunpack.c.l.b16 %v651
        %v1420 = vunpack.c.l.b16 %v652
        %v1421 = vunpack.c.l.b16 %v653
        %v1422 = vunpack.c.l.b16 %v654
        %v1423 = vunpack.c.l.b16 %v655
        %v1424 = vunpack.c.l.b16 %v656
        %v1425 = vunpack.c.l.b16 %v657
        %v1426 = vunpack.c.l.b16 %v658
        %v1427 = vunpack.c.l.b16 %v659
        %v1428 = vunpack.c.l.b16 %v660
        %v1429 = vunpack.c.l.b16 %v661
        %v1430 = vunpack.c.l.b16 %v662
        %v1431 = vunpack.c.l.b16 %v663
        %v1432 = vunpack.c.l.b16 %v664
        %v1433 = vunpack.c.l.b16 %v665
        %v1434 = vunpack.c.l.b16 %v666
        %v1435 = vunpack.c.l.b16 %v667
        %v1436 = vunpack.c.l.b16 %v668
        %v1437 = vunpack.c.l.b16 %v669
        %v1438 = vunpack.c.l.b16 %v670
        %v1439 = vunpack.c.l.b16 %v671
        %v1440 = vunpack.c.l.b16 %v672
        %v1441 = vpack.c.b16 %v1410, %v1409
        %v1442 = vpack.c.b16 %v1412, %v1411
        %v1443 = vpack.c.b16 %v1414, %v1413
        %v1444 = vpack.c.b16 %v1416, %v1415
        %v1445 = vpack.c.b16 %v1418, %v1417
        %v1446 = vpack.c.b16 %v1420, %v1419
        %v1447 = vpack.c.b16 %v1422, %v1421
        %v1448 = vpack.c.b16 %v1424, %v1423
        %v1449 = vpack.c.b16 %v1426, %v1425
        %v1450 = vpack.c.b16 %v1428, %v1427
        %v1451 = vpack.c.b16 %v1430, %v1429
        %v1452 = vpack.c.b16 %v1432, %v1431
        %v1453 = vpack.c.b16 %v1434, %v1433
        %v1454 = vpack.c.b16 %v1436, %v1435
        %v1455 = vpack.c.b16 %v1438, %v1437
        %v1456 = vpack.c.b16 %v1440, %v1439
        %v1505 = vunpack.c.l.b16 %v705
        %v1506 = vunpack.c.l.b16 %v706
        %v1507 = vunpack.c.l.b16 %v707
        %v1508 = vunpack.c.l.b16 %v708
        %v1509 = vunpack.c.l.b16 %v709
        %v1510 = vunpack.c.l.b16 %v710
        %v1511 = vunpack.c.l.b16 %v711
        %v1512 = vunpack.c.l.b16 %v712
        %v1513 = vunpack.c.l.b16 %v713
        %v1514 = vunpack.c.l.b16 %v714
        %v1515 = vunpack.c.l.b16 %v715
        %v1516 = vunpack.c.l.b16 %v716
        %v1517 = vunpack.c.l.b16 %v717
        %v1518 = vunpack.c.l.b16 %v718
        %v1519 = vunpack.c.l.b16 %v719
        %v1520 = vunpack.c.l.b16 %v720
        %v1521 = vunpack.c.l.b16 %v721
        %v1522 = vunpack.c.l.b16 %v722
        %v1523 = vunpack.c.l.b16 %v723
        %v1524 = vunpack.c.l.b16 %v724
        %v1525 = vunpack.c.l.b16 %v725
        %v1526 = vunpack.c.l.b16 %v726
        %v1527 = vunpack.c.l.b16 %v727
        %v1528 = vunpack.c.l.b16 %v728
        %v1529 = vunpack.c.l.b16 %v729
        %v1530 = vunpack.c.l.b16 %v730
        %v1531 = vunpack.c.l.b16 %v731
        %v1532 = vunpack.c.l.b16 %v732
        %v1533 = vunpack.c.l.b16 %v733
        %v1534 = vunpack.c.l.b16 %v734
        %v1535 = vunpack.c.l.b16 %v735
        %v1536 = vunpack.c.l.b16 %v736
        %v1537 = vpack.c.b16 %v1506, %v1505
        %v1538 = vpack.c.b16 %v1508, %v1507
        %v1539 = vpack.c.b16 %v1510, %v1509
        %v1540 = vpack.c.b16 %v1512, %v1511
        %v1541 = vpack.c.b16 %v1514, %v1513
        %v1542 = vpack.c.b16 %v1516, %v1515
        %v1543 = vpack.c.b16 %v1518, %v1517
        %v1544 = vpack.c.b16 %v1520, %v1519
        %v1545 = vpack.c.b16 %v1522, %v1521
        %v1546 = vpack.c.b16 %v1524, %v1523
        %v1547 = vpack.c.b16 %v1526, %v1525
        %v1548 = vpack.c.b16 %v1528, %v1527
        %v1549 = vpack.c.b16 %v1530, %v1529
        %v1550 = vpack.c.b16 %v1532, %v1531
        %v1551 = vpack.c.b16 %v1534, %v1533
        %v1552 = vpack.c.b16 %v1536, %v1535
        %v1601 = vunpack.c.l.b16 %v769
        %v1602 = vunpack.c.l.b16 %v770
        %v1603 = vunpack.c.l.b16 %v771
        %v1604 = vunpack.c.l.b16 %v772
        %v1605 = vunpack.c.l.b16 %v773
        %v1606 = vunpack.c.l.b16 %v774
        %v1607 = vunpack.c.l.b16 %v775
        %v1608 = vunpack.c.l.b16 %v776
        %v1609 = vunpack.c.l.b16 %v777
        %v1610 = vunpack.c.l.b16 %v778
        %v1611 = vunpack.c.l.b16 %v779
        %v1612 = vunpack.c.l.b16 %v780
        %v1613 = vunpack.c.l.b16 %v781
        %v1614 = vunpack.c.l.b16 %v782
        %v1615 = vunpack.c.l.b16 %v783
        %v1616 = vunpack.c.l.b16 %v784
        %v1617 = vunpack.c.l.b16 %v785
        %v1618 = vunpack.c.l.b16 %v786
        %v1619 = vunpack.c.l.b16 %v787
        %v1620 = vunpack.c.l.b16 %v788
        %v1621 = vunpack.c.l.b16 %v789
        %v1622 = vunpack.c.l.b16 %v790
        %v1623 = vunpack.c.l.b16 %v791
        %v1624 = vunpack.c.l.b16 %v792
        %v1625 = vunpack.c.l.b16 %v793
        %v1626 = vunpack.c.l.b16 %v794
        %v1627 = vunpack.c.l.b16 %v795
        %v1628 = vunpack.c.l.b16 %v796
        %v1629 = vunpack.c.l.b16 %v797
        %v1630 = vunpack.c.l.b16 %v798
        %v1631 = vunpack.c.l.b16 %v799
        %v1632 = vunpack.c.l.b16 %v800
        %v1633 = vpack.c.b16 %v1602, %v1601
        %v1634 = vpack.c.b16 %v1604, %v1603
        %v1635 = vpack.c.b16 %v1606, %v1605
        %v1636 = vpack.c.b16 %v1608, %v1607
        %v1637 = vpack.c.b16 %v1610, %v1609
        %v1638 = vpack.c.b16 %v1612, %v1611
        %v1639 = vpack.c.b16 %v1614, %v1613
        %v1640 = vpack.c.b16 %v1616, %v1615
        %v1641 = vpack.c.b16 %v1618, %v1617
        %v1642 = vpack.c.b16 %v1620, %v1619
        %v1643 = vpack.c.b16 %v1622, %v1621
        %v1644 = vpack.c.b16 %v1624, %v1623
        %v1645 = vpack.c.b16 %v1626, %v1625
        %v1646 = vpack.c.b16 %v1628, %v1627
        %v1647 = vpack.c.b16 %v1630, %v1629
        %v1648 = vpack.c.b16 %v1632, %v1631
        %v1665 = vld [vmem:[%s1] sm:$0xf]
        %v1666 = vld [vmem:[%s1 + $0x4] sm:$0xf]
        %v1667 = vld [vmem:[%s1 + $0x8] sm:$0xf]
        %v1668 = vld [vmem:[%s1 + $0xc] sm:$0xf]
        %v1669 = vld [vmem:[%s1 + $0x10] sm:$0xf]
        %v1670 = vld [vmem:[%s1 + $0x14] sm:$0xf]
        %v1671 = vld [vmem:[%s1 + $0x18] sm:$0xf]
        %v1672 = vld [vmem:[%s1 + $0x1c] sm:$0xf]
        %v1673 = vld [vmem:[%s1 + $0x20] sm:$0xf]
        %v1674 = vld [vmem:[%s1 + $0x24] sm:$0xf]
        %v1675 = vld [vmem:[%s1 + $0x28] sm:$0xf]
        %v1676 = vld [vmem:[%s1 + $0x2c] sm:$0xf]
        %v1677 = vld [vmem:[%s1 + $0x30] sm:$0xf]
        %v1678 = vld [vmem:[%s1 + $0x34] sm:$0xf]
        %v1679 = vld [vmem:[%s1 + $0x38] sm:$0xf]
        %v1680 = vld [vmem:[%s1 + $0x3c] sm:$0xf]
        %v1681 = vld [vmem:[%s1 + $0x40] sm:$0xf]
        %v1682 = vld [vmem:[%s1 + $0x44] sm:$0xf]
        %v1683 = vld [vmem:[%s1 + $0x48] sm:$0xf]
        %v1684 = vld [vmem:[%s1 + $0x4c] sm:$0xf]
        %v1685 = vld [vmem:[%s1 + $0x50] sm:$0xf]
        %v1686 = vld [vmem:[%s1 + $0x54] sm:$0xf]
        %v1687 = vld [vmem:[%s1 + $0x58] sm:$0xf]
        %v1688 = vld [vmem:[%s1 + $0x5c] sm:$0xf]
        %v1689 = vld [vmem:[%s1 + $0x60] sm:$0xf]
        %v1690 = vld [vmem:[%s1 + $0x64] sm:$0xf]
        %v1691 = vld [vmem:[%s1 + $0x68] sm:$0xf]
        %v1692 = vld [vmem:[%s1 + $0x6c] sm:$0xf]
        %v1693 = vld [vmem:[%s1 + $0x70] sm:$0xf]
        %v1694 = vld [vmem:[%s1 + $0x74] sm:$0xf]
        %v1695 = vld [vmem:[%s1 + $0x78] sm:$0xf]
        %v1696 = vld [vmem:[%s1 + $0x7c] sm:$0xf]
        %v1697 = vld [vmem:[%s1 + $0x80] sm:$0xf]
        %v1698 = vld [vmem:[%s1 + $0x84] sm:$0xf]
        %v1699 = vld [vmem:[%s1 + $0x88] sm:$0xf]
        %v1700 = vld [vmem:[%s1 + $0x8c] sm:$0xf]
        %v1701 = vld [vmem:[%s1 + $0x90] sm:$0xf]
        %v1702 = vld [vmem:[%s1 + $0x94] sm:$0xf]
        %v1703 = vld [vmem:[%s1 + $0x98] sm:$0xf]
        %v1704 = vld [vmem:[%s1 + $0x9c] sm:$0xf]
        %v1705 = vld [vmem:[%s1 + $0xa0] sm:$0xf]
        %v1706 = vld [vmem:[%s1 + $0xa4] sm:$0xf]
        %v1707 = vld [vmem:[%s1 + $0xa8] sm:$0xf]
        %v1708 = vld [vmem:[%s1 + $0xac] sm:$0xf]
        %v1709 = vld [vmem:[%s1 + $0xb0] sm:$0xf]
        %v1710 = vld [vmem:[%s1 + $0xb4] sm:$0xf]
        %v1711 = vld [vmem:[%s1 + $0xb8] sm:$0xf]
        %v1712 = vld [vmem:[%s1 + $0xbc] sm:$0xf]
        %v1713 = vld [vmem:[%s1 + $0xc0] sm:$0xf]
        %v1714 = vld [vmem:[%s1 + $0xc4] sm:$0xf]
        %v1715 = vld [vmem:[%s1 + $0xc8] sm:$0xf]
        %v1716 = vld [vmem:[%s1 + $0xcc] sm:$0xf]
        %v1717 = vld [vmem:[%s1 + $0xd0] sm:$0xf]
        %v1718 = vld [vmem:[%s1 + $0xd4] sm:$0xf]
        %v1719 = vld [vmem:[%s1 + $0xd8] sm:$0xf]
        %v1720 = vld [vmem:[%s1 + $0xdc] sm:$0xf]
        %v1721 = vld [vmem:[%s1 + $0xe0] sm:$0xf]
        %v1722 = vld [vmem:[%s1 + $0xe4] sm:$0xf]
        %v1723 = vld [vmem:[%s1 + $0xe8] sm:$0xf]
        %v1724 = vld [vmem:[%s1 + $0xec] sm:$0xf]
        %v1725 = vld [vmem:[%s1 + $0xf0] sm:$0xf]
        %v1726 = vld [vmem:[%s1 + $0xf4] sm:$0xf]
        %v1727 = vld [vmem:[%s1 + $0xf8] sm:$0xf]
        %v1728 = vld [vmem:[%s1 + $0xfc] sm:$0xf]
        %v1729 = vld [vmem:[%s1 + $0x100] sm:$0xf]
        %v1730 = vld [vmem:[%s1 + $0x104] sm:$0xf]
        %v1731 = vld [vmem:[%s1 + $0x108] sm:$0xf]
        %v1732 = vld [vmem:[%s1 + $0x10c] sm:$0xf]
        %v1733 = vld [vmem:[%s1 + $0x110] sm:$0xf]
        %v1734 = vld [vmem:[%s1 + $0x114] sm:$0xf]
        %v1735 = vld [vmem:[%s1 + $0x118] sm:$0xf]
        %v1736 = vld [vmem:[%s1 + $0x11c] sm:$0xf]
        %v1737 = vld [vmem:[%s1 + $0x120] sm:$0xf]
        %v1738 = vld [vmem:[%s1 + $0x124] sm:$0xf]
        %v1739 = vld [vmem:[%s1 + $0x128] sm:$0xf]
        %v1740 = vld [vmem:[%s1 + $0x12c] sm:$0xf]
        %v1741 = vld [vmem:[%s1 + $0x130] sm:$0xf]
        %v1742 = vld [vmem:[%s1 + $0x134] sm:$0xf]
        %v1743 = vld [vmem:[%s1 + $0x138] sm:$0xf]
        %v1744 = vld [vmem:[%s1 + $0x13c] sm:$0xf]
        %v1745 = vld [vmem:[%s1 + $0x140] sm:$0xf]
        %v1746 = vld [vmem:[%s1 + $0x144] sm:$0xf]
        %v1747 = vld [vmem:[%s1 + $0x148] sm:$0xf]
        %v1748 = vld [vmem:[%s1 + $0x14c] sm:$0xf]
        %v1749 = vld [vmem:[%s1 + $0x150] sm:$0xf]
        %v1750 = vld [vmem:[%s1 + $0x154] sm:$0xf]
        %v1751 = vld [vmem:[%s1 + $0x158] sm:$0xf]
        %v1752 = vld [vmem:[%s1 + $0x15c] sm:$0xf]
        %v1753 = vld [vmem:[%s1 + $0x160] sm:$0xf]
        %v1754 = vld [vmem:[%s1 + $0x164] sm:$0xf]
        %v1755 = vld [vmem:[%s1 + $0x168] sm:$0xf]
        %v1756 = vld [vmem:[%s1 + $0x16c] sm:$0xf]
        %v1757 = vld [vmem:[%s1 + $0x170] sm:$0xf]
        %v1758 = vld [vmem:[%s1 + $0x174] sm:$0xf]
        %v1759 = vld [vmem:[%s1 + $0x178] sm:$0xf]
        %v1760 = vld [vmem:[%s1 + $0x17c] sm:$0xf]
        %v1761 = vld [vmem:[%s1 + $0x180] sm:$0xf]
        %v1762 = vld [vmem:[%s1 + $0x184] sm:$0xf]
        %v1763 = vld [vmem:[%s1 + $0x188] sm:$0xf]
        %v1764 = vld [vmem:[%s1 + $0x18c] sm:$0xf]
        %v1765 = vld [vmem:[%s1 + $0x190] sm:$0xf]
        %v1766 = vld [vmem:[%s1 + $0x194] sm:$0xf]
        %v1767 = vld [vmem:[%s1 + $0x198] sm:$0xf]
        %v1768 = vld [vmem:[%s1 + $0x19c] sm:$0xf]
        %v1769 = vld [vmem:[%s1 + $0x1a0] sm:$0xf]
        %v1770 = vld [vmem:[%s1 + $0x1a4] sm:$0xf]
        %v1771 = vld [vmem:[%s1 + $0x1a8] sm:$0xf]
        %v1772 = vld [vmem:[%s1 + $0x1ac] sm:$0xf]
        %v1773 = vld [vmem:[%s1 + $0x1b0] sm:$0xf]
        %v1774 = vld [vmem:[%s1 + $0x1b4] sm:$0xf]
        %v1775 = vld [vmem:[%s1 + $0x1b8] sm:$0xf]
        %v1776 = vld [vmem:[%s1 + $0x1bc] sm:$0xf]
        %v1777 = vld [vmem:[%s1 + $0x1c0] sm:$0xf]
        %v1778 = vld [vmem:[%s1 + $0x1c4] sm:$0xf]
        %v1779 = vld [vmem:[%s1 + $0x1c8] sm:$0xf]
        %v1780 = vld [vmem:[%s1 + $0x1cc] sm:$0xf]
        %v1781 = vld [vmem:[%s1 + $0x1d0] sm:$0xf]
        %v1782 = vld [vmem:[%s1 + $0x1d4] sm:$0xf]
        %v1783 = vld [vmem:[%s1 + $0x1d8] sm:$0xf]
        %v1784 = vld [vmem:[%s1 + $0x1dc] sm:$0xf]
        %v1785 = vld [vmem:[%s1 + $0x1e0] sm:$0xf]
        %v1786 = vld [vmem:[%s1 + $0x1e4] sm:$0xf]
        %v1787 = vld [vmem:[%s1 + $0x1e8] sm:$0xf]
        %v1788 = vld [vmem:[%s1 + $0x1ec] sm:$0xf]
        %v1789 = vld [vmem:[%s1 + $0x1f0] sm:$0xf]
        %v1790 = vld [vmem:[%s1 + $0x1f4] sm:$0xf]
        %v1791 = vld [vmem:[%s1 + $0x1f8] sm:$0xf]
        %v1792 = vld [vmem:[%s1 + $0x1fc] sm:$0xf]
        %v1793 = vld [vmem:[%s1 + $0x200] sm:$0xf]
        %v1794 = vld [vmem:[%s1 + $0x204] sm:$0xf]
        %v1795 = vld [vmem:[%s1 + $0x208] sm:$0xf]
        %v1796 = vld [vmem:[%s1 + $0x20c] sm:$0xf]
        %v1797 = vld [vmem:[%s1 + $0x210] sm:$0xf]
        %v1798 = vld [vmem:[%s1 + $0x214] sm:$0xf]
        %v1799 = vld [vmem:[%s1 + $0x218] sm:$0xf]
        %v1800 = vld [vmem:[%s1 + $0x21c] sm:$0xf]
        %v1801 = vld [vmem:[%s1 + $0x220] sm:$0xf]
        %v1802 = vld [vmem:[%s1 + $0x224] sm:$0xf]
        %v1803 = vld [vmem:[%s1 + $0x228] sm:$0xf]
        %v1804 = vld [vmem:[%s1 + $0x22c] sm:$0xf]
        %v1805 = vld [vmem:[%s1 + $0x230] sm:$0xf]
        %v1806 = vld [vmem:[%s1 + $0x234] sm:$0xf]
        %v1807 = vld [vmem:[%s1 + $0x238] sm:$0xf]
        %v1808 = vld [vmem:[%s1 + $0x23c] sm:$0xf]
        %v1809 = vld [vmem:[%s2] sm:$0x1]
        %v1811 = vperm.slane %v1809, 0
        %v1957 = vunpack.c.l.b16 %v1665
        %v1958 = vunpack.c.l.b16 %v1666
        %v1959 = vunpack.c.l.b16 %v1667
        %v1960 = vunpack.c.l.b16 %v1668
        %v1961 = vunpack.c.l.b16 %v1669
        %v1962 = vunpack.c.l.b16 %v1670
        %v1963 = vunpack.c.l.b16 %v1671
        %v1964 = vunpack.c.l.b16 %v1672
        %v1965 = vunpack.c.l.b16 %v1673
        %v1966 = vunpack.c.l.b16 %v1674
        %v1967 = vunpack.c.l.b16 %v1675
        %v1968 = vunpack.c.l.b16 %v1676
        %v1969 = vunpack.c.l.b16 %v1677
        %v1970 = vunpack.c.l.b16 %v1678
        %v1971 = vunpack.c.l.b16 %v1679
        %v1972 = vunpack.c.l.b16 %v1680
        %v1973 = vunpack.c.l.b16 %v1681
        %v1974 = vunpack.c.l.b16 %v1682
        %v1975 = vunpack.c.l.b16 %v1683
        %v1976 = vunpack.c.l.b16 %v1684
        %v1977 = vunpack.c.l.b16 %v1685
        %v1978 = vunpack.c.l.b16 %v1686
        %v1979 = vunpack.c.l.b16 %v1687
        %v1980 = vunpack.c.l.b16 %v1688
        %v1981 = vunpack.c.l.b16 %v1689
        %v1982 = vunpack.c.l.b16 %v1690
        %v1983 = vunpack.c.l.b16 %v1691
        %v1984 = vunpack.c.l.b16 %v1692
        %v1985 = vunpack.c.l.b16 %v1693
        %v1986 = vunpack.c.l.b16 %v1694
        %v1987 = vunpack.c.l.b16 %v1695
        %v1988 = vunpack.c.l.b16 %v1696
        %v1989 = vunpack.c.l.b16 %v1697
        %v1990 = vunpack.c.l.b16 %v1698
        %v1991 = vunpack.c.l.b16 %v1699
        %v1992 = vunpack.c.l.b16 %v1700
        %v1993 = vunpack.c.l.b16 %v1701
        %v1994 = vunpack.c.l.b16 %v1702
        %v1995 = vunpack.c.l.b16 %v1703
        %v1996 = vunpack.c.l.b16 %v1704
        %v1997 = vunpack.c.l.b16 %v1705
        %v1998 = vunpack.c.l.b16 %v1706
        %v1999 = vunpack.c.l.b16 %v1707
        %v2000 = vunpack.c.l.b16 %v1708
        %v2001 = vunpack.c.l.b16 %v1709
        %v2002 = vunpack.c.l.b16 %v1710
        %v2003 = vunpack.c.l.b16 %v1711
        %v2004 = vunpack.c.l.b16 %v1712
        %v2005 = vunpack.c.l.b16 %v1713
        %v2006 = vunpack.c.l.b16 %v1714
        %v2007 = vunpack.c.l.b16 %v1715
        %v2008 = vunpack.c.l.b16 %v1716
        %v2009 = vunpack.c.l.b16 %v1717
        %v2010 = vunpack.c.l.b16 %v1718
        %v2011 = vunpack.c.l.b16 %v1719
        %v2012 = vunpack.c.l.b16 %v1720
        %v2013 = vunpack.c.l.b16 %v1721
        %v2014 = vunpack.c.l.b16 %v1722
        %v2015 = vunpack.c.l.b16 %v1723
        %v2016 = vunpack.c.l.b16 %v1724
        %v2017 = vunpack.c.l.b16 %v1725
        %v2018 = vunpack.c.l.b16 %v1726
        %v2019 = vunpack.c.l.b16 %v1727
        %v2020 = vunpack.c.l.b16 %v1728
        %v2021 = vunpack.c.l.b16 %v1729
        %v2022 = vunpack.c.l.b16 %v1730
        %v2023 = vunpack.c.l.b16 %v1731
        %v2024 = vunpack.c.l.b16 %v1732
        %v2025 = vunpack.c.l.b16 %v1733
        %v2026 = vunpack.c.l.b16 %v1734
        %v2027 = vunpack.c.l.b16 %v1735
        %v2028 = vunpack.c.l.b16 %v1736
        %v2029 = vunpack.c.l.b16 %v1737
        %v2030 = vunpack.c.l.b16 %v1738
        %v2031 = vunpack.c.l.b16 %v1739
        %v2032 = vunpack.c.l.b16 %v1740
        %v2033 = vunpack.c.l.b16 %v1741
        %v2034 = vunpack.c.l.b16 %v1742
        %v2035 = vunpack.c.l.b16 %v1743
        %v2036 = vunpack.c.l.b16 %v1744
        %v2037 = vunpack.c.l.b16 %v1745
        %v2038 = vunpack.c.l.b16 %v1746
        %v2039 = vunpack.c.l.b16 %v1747
        %v2040 = vunpack.c.l.b16 %v1748
        %v2041 = vunpack.c.l.b16 %v1749
        %v2042 = vunpack.c.l.b16 %v1750
        %v2043 = vunpack.c.l.b16 %v1751
        %v2044 = vunpack.c.l.b16 %v1752
        %v2045 = vunpack.c.l.b16 %v1753
        %v2046 = vunpack.c.l.b16 %v1754
        %v2047 = vunpack.c.l.b16 %v1755
        %v2048 = vunpack.c.l.b16 %v1756
        %v2049 = vunpack.c.l.b16 %v1757
        %v2050 = vunpack.c.l.b16 %v1758
        %v2051 = vunpack.c.l.b16 %v1759
        %v2052 = vunpack.c.l.b16 %v1760
        %v2053 = vunpack.c.l.b16 %v1761
        %v2054 = vunpack.c.l.b16 %v1762
        %v2055 = vunpack.c.l.b16 %v1763
        %v2056 = vunpack.c.l.b16 %v1764
        %v2057 = vunpack.c.l.b16 %v1765
        %v2058 = vunpack.c.l.b16 %v1766
        %v2059 = vunpack.c.l.b16 %v1767
        %v2060 = vunpack.c.l.b16 %v1768
        %v2061 = vunpack.c.l.b16 %v1769
        %v2062 = vunpack.c.l.b16 %v1770
        %v2063 = vunpack.c.l.b16 %v1771
        %v2064 = vunpack.c.l.b16 %v1772
        %v2065 = vunpack.c.l.b16 %v1773
        %v2066 = vunpack.c.l.b16 %v1774
        %v2067 = vunpack.c.l.b16 %v1775
        %v2068 = vunpack.c.l.b16 %v1776
        %v2069 = vunpack.c.l.b16 %v1777
        %v2070 = vunpack.c.l.b16 %v1778
        %v2071 = vunpack.c.l.b16 %v1779
        %v2072 = vunpack.c.l.b16 %v1780
        %v2073 = vunpack.c.l.b16 %v1781
        %v2074 = vunpack.c.l.b16 %v1782
        %v2075 = vunpack.c.l.b16 %v1783
        %v2076 = vunpack.c.l.b16 %v1784
        %v2077 = vunpack.c.l.b16 %v1785
        %v2078 = vunpack.c.l.b16 %v1786
        %v2079 = vunpack.c.l.b16 %v1787
        %v2080 = vunpack.c.l.b16 %v1788
        %v2081 = vunpack.c.l.b16 %v1789
        %v2082 = vunpack.c.l.b16 %v1790
        %v2083 = vunpack.c.l.b16 %v1791
        %v2084 = vunpack.c.l.b16 %v1792
        %v2085 = vunpack.c.l.b16 %v1793
        %v2086 = vunpack.c.l.b16 %v1794
        %v2087 = vunpack.c.l.b16 %v1795
        %v2088 = vunpack.c.l.b16 %v1796
        %v2089 = vunpack.c.l.b16 %v1797
        %v2090 = vunpack.c.l.b16 %v1798
        %v2091 = vunpack.c.l.b16 %v1799
        %v2092 = vunpack.c.l.b16 %v1800
        %v2093 = vunpack.c.l.b16 %v1801
        %v2094 = vunpack.c.l.b16 %v1802
        %v2095 = vunpack.c.l.b16 %v1803
        %v2096 = vunpack.c.l.b16 %v1804
        %v2097 = vunpack.c.l.b16 %v1805
        %v2098 = vunpack.c.l.b16 %v1806
        %v2099 = vunpack.c.l.b16 %v1807
        %v2100 = vunpack.c.l.b16 %v1808
        %v2101 = vpack.c.b16 %v1958, %v1957
        %v2102 = vpack.c.b16 %v1960, %v1959
        %v2103 = vpack.c.b16 %v1962, %v1961
        %v2104 = vpack.c.b16 %v1964, %v1963
        %v2105 = vpack.c.b16 %v1966, %v1965
        %v2106 = vpack.c.b16 %v1968, %v1967
        %v2107 = vpack.c.b16 %v1970, %v1969
        %v2108 = vpack.c.b16 %v1972, %v1971
        %v2109 = vpack.c.b16 %v1974, %v1973
        %v2110 = vpack.c.b16 %v1976, %v1975
        %v2111 = vpack.c.b16 %v1978, %v1977
        %v2112 = vpack.c.b16 %v1980, %v1979
        %v2113 = vpack.c.b16 %v1982, %v1981
        %v2114 = vpack.c.b16 %v1984, %v1983
        %v2115 = vpack.c.b16 %v1986, %v1985
        %v2116 = vpack.c.b16 %v1988, %v1987
        %v2117 = vpack.c.b16 %v1990, %v1989
        %v2118 = vpack.c.b16 %v1992, %v1991
        %v2119 = vpack.c.b16 %v1994, %v1993
        %v2120 = vpack.c.b16 %v1996, %v1995
        %v2121 = vpack.c.b16 %v1998, %v1997
        %v2122 = vpack.c.b16 %v2000, %v1999
        %v2123 = vpack.c.b16 %v2002, %v2001
        %v2124 = vpack.c.b16 %v2004, %v2003
        %v2125 = vpack.c.b16 %v2006, %v2005
        %v2126 = vpack.c.b16 %v2008, %v2007
        %v2127 = vpack.c.b16 %v2010, %v2009
        %v2128 = vpack.c.b16 %v2012, %v2011
        %v2129 = vpack.c.b16 %v2014, %v2013
        %v2130 = vpack.c.b16 %v2016, %v2015
        %v2131 = vpack.c.b16 %v2018, %v2017
        %v2132 = vpack.c.b16 %v2020, %v2019
        %v2133 = vpack.c.b16 %v2022, %v2021
        %v2134 = vpack.c.b16 %v2024, %v2023
        %v2135 = vpack.c.b16 %v2026, %v2025
        %v2136 = vpack.c.b16 %v2028, %v2027
        %v2137 = vpack.c.b16 %v2030, %v2029
        %v2138 = vpack.c.b16 %v2032, %v2031
        %v2139 = vpack.c.b16 %v2034, %v2033
        %v2140 = vpack.c.b16 %v2036, %v2035
        %v2141 = vpack.c.b16 %v2038, %v2037
        %v2142 = vpack.c.b16 %v2040, %v2039
        %v2143 = vpack.c.b16 %v2042, %v2041
        %v2144 = vpack.c.b16 %v2044, %v2043
        %v2145 = vpack.c.b16 %v2046, %v2045
        %v2146 = vpack.c.b16 %v2048, %v2047
        %v2147 = vpack.c.b16 %v2050, %v2049
        %v2148 = vpack.c.b16 %v2052, %v2051
        %v2149 = vpack.c.b16 %v2054, %v2053
        %v2150 = vpack.c.b16 %v2056, %v2055
        %v2151 = vpack.c.b16 %v2058, %v2057
        %v2152 = vpack.c.b16 %v2060, %v2059
        %v2153 = vpack.c.b16 %v2062, %v2061
        %v2154 = vpack.c.b16 %v2064, %v2063
        %v2155 = vpack.c.b16 %v2066, %v2065
        %v2156 = vpack.c.b16 %v2068, %v2067
        %v2157 = vpack.c.b16 %v2070, %v2069
        %v2158 = vpack.c.b16 %v2072, %v2071
        %v2159 = vpack.c.b16 %v2074, %v2073
        %v2160 = vpack.c.b16 %v2076, %v2075
        %v2161 = vpack.c.b16 %v2078, %v2077
        %v2162 = vpack.c.b16 %v2080, %v2079
        %v2163 = vpack.c.b16 %v2082, %v2081
        %v2164 = vpack.c.b16 %v2084, %v2083
        %v2165 = vpack.c.b16 %v2086, %v2085
        %v2166 = vpack.c.b16 %v2088, %v2087
        %v2167 = vpack.c.b16 %v2090, %v2089
        %v2168 = vpack.c.b16 %v2092, %v2091
        %v2169 = vpack.c.b16 %v2094, %v2093
        %v2170 = vpack.c.b16 %v2096, %v2095
        %v2171 = vpack.c.b16 %v2098, %v2097
        %v2172 = vpack.c.b16 %v2100, %v2099
        %2245 = vmatpush.bf16.msra.mxu0 %v2108
        %2246 = vmatpush.bf16.msra.mxu0 %v2107
        %2247 = vmatpush.bf16.msra.mxu0 %v2106
        %2248 = vmatpush.bf16.msra.mxu0 %v2105
        %2249 = vmatpush.bf16.msra.mxu0 %v2104
        %2250 = vmatpush.bf16.msra.mxu0 %v2103
        %2251 = vmatpush.bf16.msra.mxu0 %v2102
        %2252 = vmatpush.bf16.msra.mxu0 %v2101
        %2253 = vmatmul.bf16.gmra.mxu0 %v865
        %v2254 = vpop.f32.mrf.mxu0
        %v2255 = vadd.f32 %v1811, %v2254
        %v2256 = vpop.f32.mrf.mxu0
        %v2257 = vadd.f32 %v1811, %v2256
        %2258 = vmatmul.bf16.gmra.mxu0 %v866
        %v2259 = vpop.f32.mrf.mxu0
        %v2260 = vadd.f32 %v1811, %v2259
        %v2261 = vpop.f32.mrf.mxu0
        %v2262 = vadd.f32 %v1811, %v2261
        %2263 = vmatmul.bf16.gmra.mxu0 %v867
        %v2264 = vpop.f32.mrf.mxu0
        %v2265 = vadd.f32 %v1811, %v2264
        %v2266 = vpop.f32.mrf.mxu0
        %v2267 = vadd.f32 %v1811, %v2266
        %2268 = vmatmul.bf16.gmra.mxu0 %v868
        %v2269 = vpop.f32.mrf.mxu0
        %v2270 = vadd.f32 %v1811, %v2269
        %v2271 = vpop.f32.mrf.mxu0
        %v2272 = vadd.f32 %v1811, %v2271
        %2273 = vmatmul.bf16.gmra.mxu0 %v869
        %v2274 = vpop.f32.mrf.mxu0
        %v2275 = vadd.f32 %v1811, %v2274
        %v2276 = vpop.f32.mrf.mxu0
        %v2277 = vadd.f32 %v1811, %v2276
        %2278 = vmatmul.bf16.gmra.mxu0 %v870
        %v2279 = vpop.f32.mrf.mxu0
        %v2280 = vadd.f32 %v1811, %v2279
        %v2281 = vpop.f32.mrf.mxu0
        %v2282 = vadd.f32 %v1811, %v2281
        %2283 = vmatmul.bf16.gmra.mxu0 %v871
        %v2284 = vpop.f32.mrf.mxu0
        %v2285 = vadd.f32 %v1811, %v2284
        %v2286 = vpop.f32.mrf.mxu0
        %v2287 = vadd.f32 %v1811, %v2286
        %2288 = vmatmul.bf16.gmra.mxu0 %v872
        %v2289 = vpop.f32.mrf.mxu0
        %v2290 = vadd.f32 %v1811, %v2289
        %v2291 = vpop.f32.mrf.mxu0
        %v2292 = vadd.f32 %v1811, %v2291
        %2293 = vmatmul.bf16.gmra.mxu0 %v873
        %v2294 = vpop.f32.mrf.mxu0
        %v2295 = vadd.f32 %v1811, %v2294
        %v2296 = vpop.f32.mrf.mxu0
        %v2297 = vadd.f32 %v1811, %v2296
        %2298 = vmatmul.bf16.gmra.mxu0 %v874
        %v2299 = vpop.f32.mrf.mxu0
        %v2300 = vadd.f32 %v1811, %v2299
        %v2301 = vpop.f32.mrf.mxu0
        %v2302 = vadd.f32 %v1811, %v2301
        %2303 = vmatmul.bf16.gmra.mxu0 %v875
        %v2304 = vpop.f32.mrf.mxu0
        %v2305 = vadd.f32 %v1811, %v2304
        %v2306 = vpop.f32.mrf.mxu0
        %v2307 = vadd.f32 %v1811, %v2306
        %2308 = vmatmul.bf16.gmra.mxu0 %v876
        %v2309 = vpop.f32.mrf.mxu0
        %v2310 = vadd.f32 %v1811, %v2309
        %v2311 = vpop.f32.mrf.mxu0
        %v2312 = vadd.f32 %v1811, %v2311
        %2313 = vmatmul.bf16.gmra.mxu0 %v877
        %v2314 = vpop.f32.mrf.mxu0
        %v2315 = vadd.f32 %v1811, %v2314
        %v2316 = vpop.f32.mrf.mxu0
        %v2317 = vadd.f32 %v1811, %v2316
        %2318 = vmatmul.bf16.gmra.mxu0 %v878
        %v2319 = vpop.f32.mrf.mxu0
        %v2320 = vadd.f32 %v1811, %v2319
        %v2321 = vpop.f32.mrf.mxu0
        %v2322 = vadd.f32 %v1811, %v2321
        %2323 = vmatmul.bf16.gmra.mxu0 %v879
        %v2324 = vpop.f32.mrf.mxu0
        %v2325 = vadd.f32 %v1811, %v2324
        %v2326 = vpop.f32.mrf.mxu0
        %v2327 = vadd.f32 %v1811, %v2326
        %2328 = vmatmul.bf16.gmra.mxu0 %v880
        %v2329 = vpop.f32.mrf.mxu0
        %v2330 = vadd.f32 %v1811, %v2329
        %v2331 = vpop.f32.mrf.mxu0
        %v2332 = vadd.f32 %v1811, %v2331
        %2333 = vdwg.mxu0
        %2334 = vmatpush.bf16.msra.mxu0 %v2116
        %2335 = vmatpush.bf16.msra.mxu0 %v2115
        %2336 = vmatpush.bf16.msra.mxu0 %v2114
        %2337 = vmatpush.bf16.msra.mxu0 %v2113
        %2338 = vmatpush.bf16.msra.mxu0 %v2112
        %2339 = vmatpush.bf16.msra.mxu0 %v2111
        %2340 = vmatpush.bf16.msra.mxu0 %v2110
        %2341 = vmatpush.bf16.msra.mxu0 %v2109
        %2342 = vmatmul.bf16.gmra.mxu0 %v961
        %v2343 = vpop.f32.mrf.mxu0
        %v2344 = vadd.f32 %v2255, %v2343
        %v2345 = vpop.f32.mrf.mxu0
        %v2346 = vadd.f32 %v2257, %v2345
        %2347 = vmatmul.bf16.gmra.mxu0 %v962
        %v2348 = vpop.f32.mrf.mxu0
        %v2349 = vadd.f32 %v2260, %v2348
        %v2350 = vpop.f32.mrf.mxu0
        %v2351 = vadd.f32 %v2262, %v2350
        %2352 = vmatmul.bf16.gmra.mxu0 %v963
        %v2353 = vpop.f32.mrf.mxu0
        %v2354 = vadd.f32 %v2265, %v2353
        %v2355 = vpop.f32.mrf.mxu0
        %v2356 = vadd.f32 %v2267, %v2355
        %2357 = vmatmul.bf16.gmra.mxu0 %v964
        %v2358 = vpop.f32.mrf.mxu0
        %v2359 = vadd.f32 %v2270, %v2358
        %v2360 = vpop.f32.mrf.mxu0
        %v2361 = vadd.f32 %v2272, %v2360
        %2362 = vmatmul.bf16.gmra.mxu0 %v965
        %v2363 = vpop.f32.mrf.mxu0
        %v2364 = vadd.f32 %v2275, %v2363
        %v2365 = vpop.f32.mrf.mxu0
        %v2366 = vadd.f32 %v2277, %v2365
        %2367 = vmatmul.bf16.gmra.mxu0 %v966
        %v2368 = vpop.f32.mrf.mxu0
        %v2369 = vadd.f32 %v2280, %v2368
        %v2370 = vpop.f32.mrf.mxu0
        %v2371 = vadd.f32 %v2282, %v2370
        %2372 = vmatmul.bf16.gmra.mxu0 %v967
        %v2373 = vpop.f32.mrf.mxu0
        %v2374 = vadd.f32 %v2285, %v2373
        %v2375 = vpop.f32.mrf.mxu0
        %v2376 = vadd.f32 %v2287, %v2375
        %2377 = vmatmul.bf16.gmra.mxu0 %v968
        %v2378 = vpop.f32.mrf.mxu0
        %v2379 = vadd.f32 %v2290, %v2378
        %v2380 = vpop.f32.mrf.mxu0
        %v2381 = vadd.f32 %v2292, %v2380
        %2382 = vmatmul.bf16.gmra.mxu0 %v969
        %v2383 = vpop.f32.mrf.mxu0
        %v2384 = vadd.f32 %v2295, %v2383
        %v2385 = vpop.f32.mrf.mxu0
        %v2386 = vadd.f32 %v2297, %v2385
        %2387 = vmatmul.bf16.gmra.mxu0 %v970
        %v2388 = vpop.f32.mrf.mxu0
        %v2389 = vadd.f32 %v2300, %v2388
        %v2390 = vpop.f32.mrf.mxu0
        %v2391 = vadd.f32 %v2302, %v2390
        %2392 = vmatmul.bf16.gmra.mxu0 %v971
        %v2393 = vpop.f32.mrf.mxu0
        %v2394 = vadd.f32 %v2305, %v2393
        %v2395 = vpop.f32.mrf.mxu0
        %v2396 = vadd.f32 %v2307, %v2395
        %2397 = vmatmul.bf16.gmra.mxu0 %v972
        %v2398 = vpop.f32.mrf.mxu0
        %v2399 = vadd.f32 %v2310, %v2398
        %v2400 = vpop.f32.mrf.mxu0
        %v2401 = vadd.f32 %v2312, %v2400
        %2402 = vmatmul.bf16.gmra.mxu0 %v973
        %v2403 = vpop.f32.mrf.mxu0
        %v2404 = vadd.f32 %v2315, %v2403
        %v2405 = vpop.f32.mrf.mxu0
        %v2406 = vadd.f32 %v2317, %v2405
        %2407 = vmatmul.bf16.gmra.mxu0 %v974
        %v2408 = vpop.f32.mrf.mxu0
        %v2409 = vadd.f32 %v2320, %v2408
        %v2410 = vpop.f32.mrf.mxu0
        %v2411 = vadd.f32 %v2322, %v2410
        %2412 = vmatmul.bf16.gmra.mxu0 %v975
        %v2413 = vpop.f32.mrf.mxu0
        %v2414 = vadd.f32 %v2325, %v2413
        %v2415 = vpop.f32.mrf.mxu0
        %v2416 = vadd.f32 %v2327, %v2415
        %2417 = vmatmul.bf16.gmra.mxu0 %v976
        %v2418 = vpop.f32.mrf.mxu0
        %v2419 = vadd.f32 %v2330, %v2418
        %v2420 = vpop.f32.mrf.mxu0
        %v2421 = vadd.f32 %v2332, %v2420
        %2422 = vdwg.mxu0
        %2423 = vmatpush.bf16.msra.mxu0 %v2124
        %2424 = vmatpush.bf16.msra.mxu0 %v2123
        %2425 = vmatpush.bf16.msra.mxu0 %v2122
        %2426 = vmatpush.bf16.msra.mxu0 %v2121
        %2427 = vmatpush.bf16.msra.mxu0 %v2120
        %2428 = vmatpush.bf16.msra.mxu0 %v2119
        %2429 = vmatpush.bf16.msra.mxu0 %v2118
        %2430 = vmatpush.bf16.msra.mxu0 %v2117
        %2431 = vmatmul.bf16.gmra.mxu0 %v1057
        %v2432 = vpop.f32.mrf.mxu0
        %v2433 = vadd.f32 %v2344, %v2432
        %v2434 = vpop.f32.mrf.mxu0
        %v2435 = vadd.f32 %v2346, %v2434
        %2436 = vmatmul.bf16.gmra.mxu0 %v1058
        %v2437 = vpop.f32.mrf.mxu0
        %v2438 = vadd.f32 %v2349, %v2437
        %v2439 = vpop.f32.mrf.mxu0
        %v2440 = vadd.f32 %v2351, %v2439
        %2441 = vmatmul.bf16.gmra.mxu0 %v1059
        %v2442 = vpop.f32.mrf.mxu0
        %v2443 = vadd.f32 %v2354, %v2442
        %v2444 = vpop.f32.mrf.mxu0
        %v2445 = vadd.f32 %v2356, %v2444
        %2446 = vmatmul.bf16.gmra.mxu0 %v1060
        %v2447 = vpop.f32.mrf.mxu0
        %v2448 = vadd.f32 %v2359, %v2447
        %v2449 = vpop.f32.mrf.mxu0
        %v2450 = vadd.f32 %v2361, %v2449
        %2451 = vmatmul.bf16.gmra.mxu0 %v1061
        %v2452 = vpop.f32.mrf.mxu0
        %v2453 = vadd.f32 %v2364, %v2452
        %v2454 = vpop.f32.mrf.mxu0
        %v2455 = vadd.f32 %v2366, %v2454
        %2456 = vmatmul.bf16.gmra.mxu0 %v1062
        %v2457 = vpop.f32.mrf.mxu0
        %v2458 = vadd.f32 %v2369, %v2457
        %v2459 = vpop.f32.mrf.mxu0
        %v2460 = vadd.f32 %v2371, %v2459
        %2461 = vmatmul.bf16.gmra.mxu0 %v1063
        %v2462 = vpop.f32.mrf.mxu0
        %v2463 = vadd.f32 %v2374, %v2462
        %v2464 = vpop.f32.mrf.mxu0
        %v2465 = vadd.f32 %v2376, %v2464
        %2466 = vmatmul.bf16.gmra.mxu0 %v1064
        %v2467 = vpop.f32.mrf.mxu0
        %v2468 = vadd.f32 %v2379, %v2467
        %v2469 = vpop.f32.mrf.mxu0
        %v2470 = vadd.f32 %v2381, %v2469
        %2471 = vmatmul.bf16.gmra.mxu0 %v1065
        %v2472 = vpop.f32.mrf.mxu0
        %v2473 = vadd.f32 %v2384, %v2472
        %v2474 = vpop.f32.mrf.mxu0
        %v2475 = vadd.f32 %v2386, %v2474
        %2476 = vmatmul.bf16.gmra.mxu0 %v1066
        %v2477 = vpop.f32.mrf.mxu0
        %v2478 = vadd.f32 %v2389, %v2477
        %v2479 = vpop.f32.mrf.mxu0
        %v2480 = vadd.f32 %v2391, %v2479
        %2481 = vmatmul.bf16.gmra.mxu0 %v1067
        %v2482 = vpop.f32.mrf.mxu0
        %v2483 = vadd.f32 %v2394, %v2482
        %v2484 = vpop.f32.mrf.mxu0
        %v2485 = vadd.f32 %v2396, %v2484
        %2486 = vmatmul.bf16.gmra.mxu0 %v1068
        %v2487 = vpop.f32.mrf.mxu0
        %v2488 = vadd.f32 %v2399, %v2487
        %v2489 = vpop.f32.mrf.mxu0
        %v2490 = vadd.f32 %v2401, %v2489
        %2491 = vmatmul.bf16.gmra.mxu0 %v1069
        %v2492 = vpop.f32.mrf.mxu0
        %v2493 = vadd.f32 %v2404, %v2492
        %v2494 = vpop.f32.mrf.mxu0
        %v2495 = vadd.f32 %v2406, %v2494
        %2496 = vmatmul.bf16.gmra.mxu0 %v1070
        %v2497 = vpop.f32.mrf.mxu0
        %v2498 = vadd.f32 %v2409, %v2497
        %v2499 = vpop.f32.mrf.mxu0
        %v2500 = vadd.f32 %v2411, %v2499
        %2501 = vmatmul.bf16.gmra.mxu0 %v1071
        %v2502 = vpop.f32.mrf.mxu0
        %v2503 = vadd.f32 %v2414, %v2502
        %v2504 = vpop.f32.mrf.mxu0
        %v2505 = vadd.f32 %v2416, %v2504
        %2506 = vmatmul.bf16.gmra.mxu0 %v1072
        %v2507 = vpop.f32.mrf.mxu0
        %v2508 = vadd.f32 %v2419, %v2507
        %v2509 = vpop.f32.mrf.mxu0
        %v2510 = vadd.f32 %v2421, %v2509
        %2511 = vdwg.mxu0
        %2512 = vmatpush.bf16.msra.mxu0 %v2132
        %2513 = vmatpush.bf16.msra.mxu0 %v2131
        %2514 = vmatpush.bf16.msra.mxu0 %v2130
        %2515 = vmatpush.bf16.msra.mxu0 %v2129
        %2516 = vmatpush.bf16.msra.mxu0 %v2128
        %2517 = vmatpush.bf16.msra.mxu0 %v2127
        %2518 = vmatpush.bf16.msra.mxu0 %v2126
        %2519 = vmatpush.bf16.msra.mxu0 %v2125
        %2520 = vmatmul.bf16.gmra.mxu0 %v1153
        %v2521 = vpop.f32.mrf.mxu0
        %v2522 = vadd.f32 %v2433, %v2521
        %v2523 = vpop.f32.mrf.mxu0
        %v2524 = vadd.f32 %v2435, %v2523
        %2525 = vmatmul.bf16.gmra.mxu0 %v1154
        %v2526 = vpop.f32.mrf.mxu0
        %v2527 = vadd.f32 %v2438, %v2526
        %v2528 = vpop.f32.mrf.mxu0
        %v2529 = vadd.f32 %v2440, %v2528
        %2530 = vmatmul.bf16.gmra.mxu0 %v1155
        %v2531 = vpop.f32.mrf.mxu0
        %v2532 = vadd.f32 %v2443, %v2531
        %v2533 = vpop.f32.mrf.mxu0
        %v2534 = vadd.f32 %v2445, %v2533
        %2535 = vmatmul.bf16.gmra.mxu0 %v1156
        %v2536 = vpop.f32.mrf.mxu0
        %v2537 = vadd.f32 %v2448, %v2536
        %v2538 = vpop.f32.mrf.mxu0
        %v2539 = vadd.f32 %v2450, %v2538
        %2540 = vmatmul.bf16.gmra.mxu0 %v1157
        %v2541 = vpop.f32.mrf.mxu0
        %v2542 = vadd.f32 %v2453, %v2541
        %v2543 = vpop.f32.mrf.mxu0
        %v2544 = vadd.f32 %v2455, %v2543
        %2545 = vmatmul.bf16.gmra.mxu0 %v1158
        %v2546 = vpop.f32.mrf.mxu0
        %v2547 = vadd.f32 %v2458, %v2546
        %v2548 = vpop.f32.mrf.mxu0
        %v2549 = vadd.f32 %v2460, %v2548
        %2550 = vmatmul.bf16.gmra.mxu0 %v1159
        %v2551 = vpop.f32.mrf.mxu0
        %v2552 = vadd.f32 %v2463, %v2551
        %v2553 = vpop.f32.mrf.mxu0
        %v2554 = vadd.f32 %v2465, %v2553
        %2555 = vmatmul.bf16.gmra.mxu0 %v1160
        %v2556 = vpop.f32.mrf.mxu0
        %v2557 = vadd.f32 %v2468, %v2556
        %v2558 = vpop.f32.mrf.mxu0
        %v2559 = vadd.f32 %v2470, %v2558
        %2560 = vmatmul.bf16.gmra.mxu0 %v1161
        %v2561 = vpop.f32.mrf.mxu0
        %v2562 = vadd.f32 %v2473, %v2561
        %v2563 = vpop.f32.mrf.mxu0
        %v2564 = vadd.f32 %v2475, %v2563
        %2565 = vmatmul.bf16.gmra.mxu0 %v1162
        %v2566 = vpop.f32.mrf.mxu0
        %v2567 = vadd.f32 %v2478, %v2566
        %v2568 = vpop.f32.mrf.mxu0
        %v2569 = vadd.f32 %v2480, %v2568
        %2570 = vmatmul.bf16.gmra.mxu0 %v1163
        %v2571 = vpop.f32.mrf.mxu0
        %v2572 = vadd.f32 %v2483, %v2571
        %v2573 = vpop.f32.mrf.mxu0
        %v2574 = vadd.f32 %v2485, %v2573
        %2575 = vmatmul.bf16.gmra.mxu0 %v1164
        %v2576 = vpop.f32.mrf.mxu0
        %v2577 = vadd.f32 %v2488, %v2576
        %v2578 = vpop.f32.mrf.mxu0
        %v2579 = vadd.f32 %v2490, %v2578
        %2580 = vmatmul.bf16.gmra.mxu0 %v1165
        %v2581 = vpop.f32.mrf.mxu0
        %v2582 = vadd.f32 %v2493, %v2581
        %v2583 = vpop.f32.mrf.mxu0
        %v2584 = vadd.f32 %v2495, %v2583
        %2585 = vmatmul.bf16.gmra.mxu0 %v1166
        %v2586 = vpop.f32.mrf.mxu0
        %v2587 = vadd.f32 %v2498, %v2586
        %v2588 = vpop.f32.mrf.mxu0
        %v2589 = vadd.f32 %v2500, %v2588
        %2590 = vmatmul.bf16.gmra.mxu0 %v1167
        %v2591 = vpop.f32.mrf.mxu0
        %v2592 = vadd.f32 %v2503, %v2591
        %v2593 = vpop.f32.mrf.mxu0
        %v2594 = vadd.f32 %v2505, %v2593
        %2595 = vmatmul.bf16.gmra.mxu0 %v1168
        %v2596 = vpop.f32.mrf.mxu0
        %v2597 = vadd.f32 %v2508, %v2596
        %v2598 = vpop.f32.mrf.mxu0
        %v2599 = vadd.f32 %v2510, %v2598
        %2600 = vdwg.mxu0
        %2601 = vmatpush.bf16.msra.mxu0 %v2140
        %2602 = vmatpush.bf16.msra.mxu0 %v2139
        %2603 = vmatpush.bf16.msra.mxu0 %v2138
        %2604 = vmatpush.bf16.msra.mxu0 %v2137
        %2605 = vmatpush.bf16.msra.mxu0 %v2136
        %2606 = vmatpush.bf16.msra.mxu0 %v2135
        %2607 = vmatpush.bf16.msra.mxu0 %v2134
        %2608 = vmatpush.bf16.msra.mxu0 %v2133
        %2609 = vmatmul.bf16.gmra.mxu0 %v1249
        %v2610 = vpop.f32.mrf.mxu0
        %v2611 = vadd.f32 %v2522, %v2610
        %v2612 = vpop.f32.mrf.mxu0
        %v2613 = vadd.f32 %v2524, %v2612
        %2614 = vmatmul.bf16.gmra.mxu0 %v1250
        %v2615 = vpop.f32.mrf.mxu0
        %v2616 = vadd.f32 %v2527, %v2615
        %v2617 = vpop.f32.mrf.mxu0
        %v2618 = vadd.f32 %v2529, %v2617
        %2619 = vmatmul.bf16.gmra.mxu0 %v1251
        %v2620 = vpop.f32.mrf.mxu0
        %v2621 = vadd.f32 %v2532, %v2620
        %v2622 = vpop.f32.mrf.mxu0
        %v2623 = vadd.f32 %v2534, %v2622
        %2624 = vmatmul.bf16.gmra.mxu0 %v1252
        %v2625 = vpop.f32.mrf.mxu0
        %v2626 = vadd.f32 %v2537, %v2625
        %v2627 = vpop.f32.mrf.mxu0
        %v2628 = vadd.f32 %v2539, %v2627
        %2629 = vmatmul.bf16.gmra.mxu0 %v1253
        %v2630 = vpop.f32.mrf.mxu0
        %v2631 = vadd.f32 %v2542, %v2630
        %v2632 = vpop.f32.mrf.mxu0
        %v2633 = vadd.f32 %v2544, %v2632
        %2634 = vmatmul.bf16.gmra.mxu0 %v1254
        %v2635 = vpop.f32.mrf.mxu0
        %v2636 = vadd.f32 %v2547, %v2635
        %v2637 = vpop.f32.mrf.mxu0
        %v2638 = vadd.f32 %v2549, %v2637
        %2639 = vmatmul.bf16.gmra.mxu0 %v1255
        %v2640 = vpop.f32.mrf.mxu0
        %v2641 = vadd.f32 %v2552, %v2640
        %v2642 = vpop.f32.mrf.mxu0
        %v2643 = vadd.f32 %v2554, %v2642
        %2644 = vmatmul.bf16.gmra.mxu0 %v1256
        %v2645 = vpop.f32.mrf.mxu0
        %v2646 = vadd.f32 %v2557, %v2645
        %v2647 = vpop.f32.mrf.mxu0
        %v2648 = vadd.f32 %v2559, %v2647
        %2649 = vmatmul.bf16.gmra.mxu0 %v1257
        %v2650 = vpop.f32.mrf.mxu0
        %v2651 = vadd.f32 %v2562, %v2650
        %v2652 = vpop.f32.mrf.mxu0
        %v2653 = vadd.f32 %v2564, %v2652
        %2654 = vmatmul.bf16.gmra.mxu0 %v1258
        %v2655 = vpop.f32.mrf.mxu0
        %v2656 = vadd.f32 %v2567, %v2655
        %v2657 = vpop.f32.mrf.mxu0
        %v2658 = vadd.f32 %v2569, %v2657
        %2659 = vmatmul.bf16.gmra.mxu0 %v1259
        %v2660 = vpop.f32.mrf.mxu0
        %v2661 = vadd.f32 %v2572, %v2660
        %v2662 = vpop.f32.mrf.mxu0
        %v2663 = vadd.f32 %v2574, %v2662
        %2664 = vmatmul.bf16.gmra.mxu0 %v1260
        %v2665 = vpop.f32.mrf.mxu0
        %v2666 = vadd.f32 %v2577, %v2665
        %v2667 = vpop.f32.mrf.mxu0
        %v2668 = vadd.f32 %v2579, %v2667
        %2669 = vmatmul.bf16.gmra.mxu0 %v1261
        %v2670 = vpop.f32.mrf.mxu0
        %v2671 = vadd.f32 %v2582, %v2670
        %v2672 = vpop.f32.mrf.mxu0
        %v2673 = vadd.f32 %v2584, %v2672
        %2674 = vmatmul.bf16.gmra.mxu0 %v1262
        %v2675 = vpop.f32.mrf.mxu0
        %v2676 = vadd.f32 %v2587, %v2675
        %v2677 = vpop.f32.mrf.mxu0
        %v2678 = vadd.f32 %v2589, %v2677
        %2679 = vmatmul.bf16.gmra.mxu0 %v1263
        %v2680 = vpop.f32.mrf.mxu0
        %v2681 = vadd.f32 %v2592, %v2680
        %v2682 = vpop.f32.mrf.mxu0
        %v2683 = vadd.f32 %v2594, %v2682
        %2684 = vmatmul.bf16.gmra.mxu0 %v1264
        %v2685 = vpop.f32.mrf.mxu0
        %v2686 = vadd.f32 %v2597, %v2685
        %v2687 = vpop.f32.mrf.mxu0
        %v2688 = vadd.f32 %v2599, %v2687
        %2689 = vdwg.mxu0
        %2690 = vmatpush.bf16.msra.mxu0 %v2148
        %2691 = vmatpush.bf16.msra.mxu0 %v2147
        %2692 = vmatpush.bf16.msra.mxu0 %v2146
        %2693 = vmatpush.bf16.msra.mxu0 %v2145
        %2694 = vmatpush.bf16.msra.mxu0 %v2144
        %2695 = vmatpush.bf16.msra.mxu0 %v2143
        %2696 = vmatpush.bf16.msra.mxu0 %v2142
        %2697 = vmatpush.bf16.msra.mxu0 %v2141
        %2698 = vmatmul.bf16.gmra.mxu0 %v1345
        %v2699 = vpop.f32.mrf.mxu0
        %v2700 = vadd.f32 %v2611, %v2699
        %v2701 = vpop.f32.mrf.mxu0
        %v2702 = vadd.f32 %v2613, %v2701
        %2703 = vmatmul.bf16.gmra.mxu0 %v1346
        %v2704 = vpop.f32.mrf.mxu0
        %v2705 = vadd.f32 %v2616, %v2704
        %v2706 = vpop.f32.mrf.mxu0
        %v2707 = vadd.f32 %v2618, %v2706
        %2708 = vmatmul.bf16.gmra.mxu0 %v1347
        %v2709 = vpop.f32.mrf.mxu0
        %v2710 = vadd.f32 %v2621, %v2709
        %v2711 = vpop.f32.mrf.mxu0
        %v2712 = vadd.f32 %v2623, %v2711
        %2713 = vmatmul.bf16.gmra.mxu0 %v1348
        %v2714 = vpop.f32.mrf.mxu0
        %v2715 = vadd.f32 %v2626, %v2714
        %v2716 = vpop.f32.mrf.mxu0
        %v2717 = vadd.f32 %v2628, %v2716
        %2718 = vmatmul.bf16.gmra.mxu0 %v1349
        %v2719 = vpop.f32.mrf.mxu0
        %v2720 = vadd.f32 %v2631, %v2719
        %v2721 = vpop.f32.mrf.mxu0
        %v2722 = vadd.f32 %v2633, %v2721
        %2723 = vmatmul.bf16.gmra.mxu0 %v1350
        %v2724 = vpop.f32.mrf.mxu0
        %v2725 = vadd.f32 %v2636, %v2724
        %v2726 = vpop.f32.mrf.mxu0
        %v2727 = vadd.f32 %v2638, %v2726
        %2728 = vmatmul.bf16.gmra.mxu0 %v1351
        %v2729 = vpop.f32.mrf.mxu0
        %v2730 = vadd.f32 %v2641, %v2729
        %v2731 = vpop.f32.mrf.mxu0
        %v2732 = vadd.f32 %v2643, %v2731
        %2733 = vmatmul.bf16.gmra.mxu0 %v1352
        %v2734 = vpop.f32.mrf.mxu0
        %v2735 = vadd.f32 %v2646, %v2734
        %v2736 = vpop.f32.mrf.mxu0
        %v2737 = vadd.f32 %v2648, %v2736
        %2738 = vmatmul.bf16.gmra.mxu0 %v1353
        %v2739 = vpop.f32.mrf.mxu0
        %v2740 = vadd.f32 %v2651, %v2739
        %v2741 = vpop.f32.mrf.mxu0
        %v2742 = vadd.f32 %v2653, %v2741
        %2743 = vmatmul.bf16.gmra.mxu0 %v1354
        %v2744 = vpop.f32.mrf.mxu0
        %v2745 = vadd.f32 %v2656, %v2744
        %v2746 = vpop.f32.mrf.mxu0
        %v2747 = vadd.f32 %v2658, %v2746
        %2748 = vmatmul.bf16.gmra.mxu0 %v1355
        %v2749 = vpop.f32.mrf.mxu0
        %v2750 = vadd.f32 %v2661, %v2749
        %v2751 = vpop.f32.mrf.mxu0
        %v2752 = vadd.f32 %v2663, %v2751
        %2753 = vmatmul.bf16.gmra.mxu0 %v1356
        %v2754 = vpop.f32.mrf.mxu0
        %v2755 = vadd.f32 %v2666, %v2754
        %v2756 = vpop.f32.mrf.mxu0
        %v2757 = vadd.f32 %v2668, %v2756
        %2758 = vmatmul.bf16.gmra.mxu0 %v1357
        %v2759 = vpop.f32.mrf.mxu0
        %v2760 = vadd.f32 %v2671, %v2759
        %v2761 = vpop.f32.mrf.mxu0
        %v2762 = vadd.f32 %v2673, %v2761
        %2763 = vmatmul.bf16.gmra.mxu0 %v1358
        %v2764 = vpop.f32.mrf.mxu0
        %v2765 = vadd.f32 %v2676, %v2764
        %v2766 = vpop.f32.mrf.mxu0
        %v2767 = vadd.f32 %v2678, %v2766
        %2768 = vmatmul.bf16.gmra.mxu0 %v1359
        %v2769 = vpop.f32.mrf.mxu0
        %v2770 = vadd.f32 %v2681, %v2769
        %v2771 = vpop.f32.mrf.mxu0
        %v2772 = vadd.f32 %v2683, %v2771
        %2773 = vmatmul.bf16.gmra.mxu0 %v1360
        %v2774 = vpop.f32.mrf.mxu0
        %v2775 = vadd.f32 %v2686, %v2774
        %v2776 = vpop.f32.mrf.mxu0
        %v2777 = vadd.f32 %v2688, %v2776
        %2778 = vdwg.mxu0
        %2779 = vmatpush.bf16.msra.mxu0 %v2156
        %2780 = vmatpush.bf16.msra.mxu0 %v2155
        %2781 = vmatpush.bf16.msra.mxu0 %v2154
        %2782 = vmatpush.bf16.msra.mxu0 %v2153
        %2783 = vmatpush.bf16.msra.mxu0 %v2152
        %2784 = vmatpush.bf16.msra.mxu0 %v2151
        %2785 = vmatpush.bf16.msra.mxu0 %v2150
        %2786 = vmatpush.bf16.msra.mxu0 %v2149
        %2787 = vmatmul.bf16.gmra.mxu0 %v1441
        %v2788 = vpop.f32.mrf.mxu0
        %v2789 = vadd.f32 %v2700, %v2788
        %v2790 = vpop.f32.mrf.mxu0
        %v2791 = vadd.f32 %v2702, %v2790
        %2792 = vmatmul.bf16.gmra.mxu0 %v1442
        %v2793 = vpop.f32.mrf.mxu0
        %v2794 = vadd.f32 %v2705, %v2793
        %v2795 = vpop.f32.mrf.mxu0
        %v2796 = vadd.f32 %v2707, %v2795
        %2797 = vmatmul.bf16.gmra.mxu0 %v1443
        %v2798 = vpop.f32.mrf.mxu0
        %v2799 = vadd.f32 %v2710, %v2798
        %v2800 = vpop.f32.mrf.mxu0
        %v2801 = vadd.f32 %v2712, %v2800
        %2802 = vmatmul.bf16.gmra.mxu0 %v1444
        %v2803 = vpop.f32.mrf.mxu0
        %v2804 = vadd.f32 %v2715, %v2803
        %v2805 = vpop.f32.mrf.mxu0
        %v2806 = vadd.f32 %v2717, %v2805
        %2807 = vmatmul.bf16.gmra.mxu0 %v1445
        %v2808 = vpop.f32.mrf.mxu0
        %v2809 = vadd.f32 %v2720, %v2808
        %v2810 = vpop.f32.mrf.mxu0
        %v2811 = vadd.f32 %v2722, %v2810
        %2812 = vmatmul.bf16.gmra.mxu0 %v1446
        %v2813 = vpop.f32.mrf.mxu0
        %v2814 = vadd.f32 %v2725, %v2813
        %v2815 = vpop.f32.mrf.mxu0
        %v2816 = vadd.f32 %v2727, %v2815
        %2817 = vmatmul.bf16.gmra.mxu0 %v1447
        %v2818 = vpop.f32.mrf.mxu0
        %v2819 = vadd.f32 %v2730, %v2818
        %v2820 = vpop.f32.mrf.mxu0
        %v2821 = vadd.f32 %v2732, %v2820
        %2822 = vmatmul.bf16.gmra.mxu0 %v1448
        %v2823 = vpop.f32.mrf.mxu0
        %v2824 = vadd.f32 %v2735, %v2823
        %v2825 = vpop.f32.mrf.mxu0
        %v2826 = vadd.f32 %v2737, %v2825
        %2827 = vmatmul.bf16.gmra.mxu0 %v1449
        %v2828 = vpop.f32.mrf.mxu0
        %v2829 = vadd.f32 %v2740, %v2828
        %v2830 = vpop.f32.mrf.mxu0
        %v2831 = vadd.f32 %v2742, %v2830
        %2832 = vmatmul.bf16.gmra.mxu0 %v1450
        %v2833 = vpop.f32.mrf.mxu0
        %v2834 = vadd.f32 %v2745, %v2833
        %v2835 = vpop.f32.mrf.mxu0
        %v2836 = vadd.f32 %v2747, %v2835
        %2837 = vmatmul.bf16.gmra.mxu0 %v1451
        %v2838 = vpop.f32.mrf.mxu0
        %v2839 = vadd.f32 %v2750, %v2838
        %v2840 = vpop.f32.mrf.mxu0
        %v2841 = vadd.f32 %v2752, %v2840
        %2842 = vmatmul.bf16.gmra.mxu0 %v1452
        %v2843 = vpop.f32.mrf.mxu0
        %v2844 = vadd.f32 %v2755, %v2843
        %v2845 = vpop.f32.mrf.mxu0
        %v2846 = vadd.f32 %v2757, %v2845
        %2847 = vmatmul.bf16.gmra.mxu0 %v1453
        %v2848 = vpop.f32.mrf.mxu0
        %v2849 = vadd.f32 %v2760, %v2848
        %v2850 = vpop.f32.mrf.mxu0
        %v2851 = vadd.f32 %v2762, %v2850
        %2852 = vmatmul.bf16.gmra.mxu0 %v1454
        %v2853 = vpop.f32.mrf.mxu0
        %v2854 = vadd.f32 %v2765, %v2853
        %v2855 = vpop.f32.mrf.mxu0
        %v2856 = vadd.f32 %v2767, %v2855
        %2857 = vmatmul.bf16.gmra.mxu0 %v1455
        %v2858 = vpop.f32.mrf.mxu0
        %v2859 = vadd.f32 %v2770, %v2858
        %v2860 = vpop.f32.mrf.mxu0
        %v2861 = vadd.f32 %v2772, %v2860
        %2862 = vmatmul.bf16.gmra.mxu0 %v1456
        %v2863 = vpop.f32.mrf.mxu0
        %v2864 = vadd.f32 %v2775, %v2863
        %v2865 = vpop.f32.mrf.mxu0
        %v2866 = vadd.f32 %v2777, %v2865
        %2867 = vdwg.mxu0
        %2868 = vmatpush.bf16.msra.mxu0 %v2164
        %2869 = vmatpush.bf16.msra.mxu0 %v2163
        %2870 = vmatpush.bf16.msra.mxu0 %v2162
        %2871 = vmatpush.bf16.msra.mxu0 %v2161
        %2872 = vmatpush.bf16.msra.mxu0 %v2160
        %2873 = vmatpush.bf16.msra.mxu0 %v2159
        %2874 = vmatpush.bf16.msra.mxu0 %v2158
        %2875 = vmatpush.bf16.msra.mxu0 %v2157
        %2876 = vmatmul.bf16.gmra.mxu0 %v1537
        %v2877 = vpop.f32.mrf.mxu0
        %v2878 = vadd.f32 %v2789, %v2877
        %v2879 = vpop.f32.mrf.mxu0
        %v2880 = vadd.f32 %v2791, %v2879
        %2881 = vmatmul.bf16.gmra.mxu0 %v1538
        %v2882 = vpop.f32.mrf.mxu0
        %v2883 = vadd.f32 %v2794, %v2882
        %v2884 = vpop.f32.mrf.mxu0
        %v2885 = vadd.f32 %v2796, %v2884
        %2886 = vmatmul.bf16.gmra.mxu0 %v1539
        %v2887 = vpop.f32.mrf.mxu0
        %v2888 = vadd.f32 %v2799, %v2887
        %v2889 = vpop.f32.mrf.mxu0
        %v2890 = vadd.f32 %v2801, %v2889
        %2891 = vmatmul.bf16.gmra.mxu0 %v1540
        %v2892 = vpop.f32.mrf.mxu0
        %v2893 = vadd.f32 %v2804, %v2892
        %v2894 = vpop.f32.mrf.mxu0
        %v2895 = vadd.f32 %v2806, %v2894
        %2896 = vmatmul.bf16.gmra.mxu0 %v1541
        %v2897 = vpop.f32.mrf.mxu0
        %v2898 = vadd.f32 %v2809, %v2897
        %v2899 = vpop.f32.mrf.mxu0
        %v2900 = vadd.f32 %v2811, %v2899
        %2901 = vmatmul.bf16.gmra.mxu0 %v1542
        %v2902 = vpop.f32.mrf.mxu0
        %v2903 = vadd.f32 %v2814, %v2902
        %v2904 = vpop.f32.mrf.mxu0
        %v2905 = vadd.f32 %v2816, %v2904
        %2906 = vmatmul.bf16.gmra.mxu0 %v1543
        %v2907 = vpop.f32.mrf.mxu0
        %v2908 = vadd.f32 %v2819, %v2907
        %v2909 = vpop.f32.mrf.mxu0
        %v2910 = vadd.f32 %v2821, %v2909
        %2911 = vmatmul.bf16.gmra.mxu0 %v1544
        %v2912 = vpop.f32.mrf.mxu0
        %v2913 = vadd.f32 %v2824, %v2912
        %v2914 = vpop.f32.mrf.mxu0
        %v2915 = vadd.f32 %v2826, %v2914
        %2916 = vmatmul.bf16.gmra.mxu0 %v1545
        %v2917 = vpop.f32.mrf.mxu0
        %v2918 = vadd.f32 %v2829, %v2917
        %v2919 = vpop.f32.mrf.mxu0
        %v2920 = vadd.f32 %v2831, %v2919
        %2921 = vmatmul.bf16.gmra.mxu0 %v1546
        %v2922 = vpop.f32.mrf.mxu0
        %v2923 = vadd.f32 %v2834, %v2922
        %v2924 = vpop.f32.mrf.mxu0
        %v2925 = vadd.f32 %v2836, %v2924
        %2926 = vmatmul.bf16.gmra.mxu0 %v1547
        %v2927 = vpop.f32.mrf.mxu0
        %v2928 = vadd.f32 %v2839, %v2927
        %v2929 = vpop.f32.mrf.mxu0
        %v2930 = vadd.f32 %v2841, %v2929
        %2931 = vmatmul.bf16.gmra.mxu0 %v1548
        %v2932 = vpop.f32.mrf.mxu0
        %v2933 = vadd.f32 %v2844, %v2932
        %v2934 = vpop.f32.mrf.mxu0
        %v2935 = vadd.f32 %v2846, %v2934
        %2936 = vmatmul.bf16.gmra.mxu0 %v1549
        %v2937 = vpop.f32.mrf.mxu0
        %v2938 = vadd.f32 %v2849, %v2937
        %v2939 = vpop.f32.mrf.mxu0
        %v2940 = vadd.f32 %v2851, %v2939
        %2941 = vmatmul.bf16.gmra.mxu0 %v1550
        %v2942 = vpop.f32.mrf.mxu0
        %v2943 = vadd.f32 %v2854, %v2942
        %v2944 = vpop.f32.mrf.mxu0
        %v2945 = vadd.f32 %v2856, %v2944
        %2946 = vmatmul.bf16.gmra.mxu0 %v1551
        %v2947 = vpop.f32.mrf.mxu0
        %v2948 = vadd.f32 %v2859, %v2947
        %v2949 = vpop.f32.mrf.mxu0
        %v2950 = vadd.f32 %v2861, %v2949
        %2951 = vmatmul.bf16.gmra.mxu0 %v1552
        %v2952 = vpop.f32.mrf.mxu0
        %v2953 = vadd.f32 %v2864, %v2952
        %v2954 = vpop.f32.mrf.mxu0
        %v2955 = vadd.f32 %v2866, %v2954
        %2956 = vdwg.mxu0
        %2957 = vmatpush.bf16.msra.mxu0 %v2172
        %2958 = vmatpush.bf16.msra.mxu0 %v2171
        %2959 = vmatpush.bf16.msra.mxu0 %v2170
        %2960 = vmatpush.bf16.msra.mxu0 %v2169
        %2961 = vmatpush.bf16.msra.mxu0 %v2168
        %2962 = vmatpush.bf16.msra.mxu0 %v2167
        %2963 = vmatpush.bf16.msra.mxu0 %v2166
        %2964 = vmatpush.bf16.msra.mxu0 %v2165
        %2965 = vmatmul.bf16.gmra.mxu0 %v1633
        %v2966 = vpop.f32.mrf.mxu0
        %v2967 = vadd.f32 %v2878, %v2966
        %v2968 = vpop.f32.mrf.mxu0
        %v2969 = vadd.f32 %v2880, %v2968
        %2970 = vmatmul.bf16.gmra.mxu0 %v1634
        %v2971 = vpop.f32.mrf.mxu0
        %v2972 = vadd.f32 %v2883, %v2971
        %v2973 = vpop.f32.mrf.mxu0
        %v2974 = vadd.f32 %v2885, %v2973
        %2975 = vmatmul.bf16.gmra.mxu0 %v1635
        %v2976 = vpop.f32.mrf.mxu0
        %v2977 = vadd.f32 %v2888, %v2976
        %v2978 = vpop.f32.mrf.mxu0
        %v2979 = vadd.f32 %v2890, %v2978
        %2980 = vmatmul.bf16.gmra.mxu0 %v1636
        %v2981 = vpop.f32.mrf.mxu0
        %v2982 = vadd.f32 %v2893, %v2981
        %v2983 = vpop.f32.mrf.mxu0
        %v2984 = vadd.f32 %v2895, %v2983
        %2985 = vmatmul.bf16.gmra.mxu0 %v1637
        %v2986 = vpop.f32.mrf.mxu0
        %v2987 = vadd.f32 %v2898, %v2986
        %v2988 = vpop.f32.mrf.mxu0
        %v2989 = vadd.f32 %v2900, %v2988
        %2990 = vmatmul.bf16.gmra.mxu0 %v1638
        %v2991 = vpop.f32.mrf.mxu0
        %v2992 = vadd.f32 %v2903, %v2991
        %v2993 = vpop.f32.mrf.mxu0
        %v2994 = vadd.f32 %v2905, %v2993
        %2995 = vmatmul.bf16.gmra.mxu0 %v1639
        %v2996 = vpop.f32.mrf.mxu0
        %v2997 = vadd.f32 %v2908, %v2996
        %v2998 = vpop.f32.mrf.mxu0
        %v2999 = vadd.f32 %v2910, %v2998
        %3000 = vmatmul.bf16.gmra.mxu0 %v1640
        %v3001 = vpop.f32.mrf.mxu0
        %v3002 = vadd.f32 %v2913, %v3001
        %v3003 = vpop.f32.mrf.mxu0
        %v3004 = vadd.f32 %v2915, %v3003
        %3005 = vmatmul.bf16.gmra.mxu0 %v1641
        %v3006 = vpop.f32.mrf.mxu0
        %v3007 = vadd.f32 %v2918, %v3006
        %v3008 = vpop.f32.mrf.mxu0
        %v3009 = vadd.f32 %v2920, %v3008
        %3010 = vmatmul.bf16.gmra.mxu0 %v1642
        %v3011 = vpop.f32.mrf.mxu0
        %v3012 = vadd.f32 %v2923, %v3011
        %v3013 = vpop.f32.mrf.mxu0
        %v3014 = vadd.f32 %v2925, %v3013
        %3015 = vmatmul.bf16.gmra.mxu0 %v1643
        %v3016 = vpop.f32.mrf.mxu0
        %v3017 = vadd.f32 %v2928, %v3016
        %v3018 = vpop.f32.mrf.mxu0
        %v3019 = vadd.f32 %v2930, %v3018
        %3020 = vmatmul.bf16.gmra.mxu0 %v1644
        %v3021 = vpop.f32.mrf.mxu0
        %v3022 = vadd.f32 %v2933, %v3021
        %v3023 = vpop.f32.mrf.mxu0
        %v3024 = vadd.f32 %v2935, %v3023
        %3025 = vmatmul.bf16.gmra.mxu0 %v1645
        %v3026 = vpop.f32.mrf.mxu0
        %v3027 = vadd.f32 %v2938, %v3026
        %v3028 = vpop.f32.mrf.mxu0
        %v3029 = vadd.f32 %v2940, %v3028
        %3030 = vmatmul.bf16.gmra.mxu0 %v1646
        %v3031 = vpop.f32.mrf.mxu0
        %v3032 = vadd.f32 %v2943, %v3031
        %v3033 = vpop.f32.mrf.mxu0
        %v3034 = vadd.f32 %v2945, %v3033
        %3035 = vmatmul.bf16.gmra.mxu0 %v1647
        %v3036 = vpop.f32.mrf.mxu0
        %v3037 = vadd.f32 %v2948, %v3036
        %v3038 = vpop.f32.mrf.mxu0
        %v3039 = vadd.f32 %v2950, %v3038
        %3040 = vmatmul.bf16.gmra.mxu0 %v1648
        %v3041 = vpop.f32.mrf.mxu0
        %v3042 = vadd.f32 %v2953, %v3041
        %v3043 = vpop.f32.mrf.mxu0
        %v3044 = vadd.f32 %v2955, %v3043
        %3045 = vdwg.mxu0
        %v3046 = vmax.f32 %v2967, 0.0
        %v3047 = vmax.f32 %v2969, 0.0
        %v3048 = vmax.f32 %v2972, 0.0
        %v3049 = vmax.f32 %v2974, 0.0
        %v3050 = vmax.f32 %v2977, 0.0
        %v3051 = vmax.f32 %v2979, 0.0
        %v3052 = vmax.f32 %v2982, 0.0
        %v3053 = vmax.f32 %v2984, 0.0
        %v3054 = vmax.f32 %v2987, 0.0
        %v3055 = vmax.f32 %v2989, 0.0
        %v3056 = vmax.f32 %v2992, 0.0
        %v3057 = vmax.f32 %v2994, 0.0
        %v3058 = vmax.f32 %v2997, 0.0
        %v3059 = vmax.f32 %v2999, 0.0
        %v3060 = vmax.f32 %v3002, 0.0
        %v3061 = vmax.f32 %v3004, 0.0
        %v3062 = vmax.f32 %v3007, 0.0
        %v3063 = vmax.f32 %v3009, 0.0
        %v3064 = vmax.f32 %v3012, 0.0
        %v3065 = vmax.f32 %v3014, 0.0
        %v3066 = vmax.f32 %v3017, 0.0
        %v3067 = vmax.f32 %v3019, 0.0
        %v3068 = vmax.f32 %v3022, 0.0
        %v3069 = vmax.f32 %v3024, 0.0
        %v3070 = vmax.f32 %v3027, 0.0
        %v3071 = vmax.f32 %v3029, 0.0
        %v3072 = vmax.f32 %v3032, 0.0
        %v3073 = vmax.f32 %v3034, 0.0
        %v3074 = vmax.f32 %v3037, 0.0
        %v3075 = vmax.f32 %v3039, 0.0
        %v3076 = vmax.f32 %v3042, 0.0
        %v3077 = vmax.f32 %v3044, 0.0
        %3078 = vst [vmem:[#allocation2] sm:$0xff] 0.0
        %3079 = vst [vmem:[#allocation2 + $0x8] sm:$0xff] 0.0
        %3080 = vst [vmem:[#allocation2 + $0x10] sm:$0x3] 0.0
        %s3081 = scalar_lea.vmem [#allocation2], 408
        %3082 = vst [vmem:[%s3081] sm:$0xff] 0.0
        %3083 = vst [vmem:[%s3081 + $0x8] sm:$0xff] 0.0
        %3084 = vst [vmem:[%s3081 + $0x10] sm:$0x3] 0.0
        %s3085 = scalar_lea.vmem [#allocation2], 24
        %3086 = vst [vmem:[%s3085] sm:$0x1] 0.0
        %3087 = vst [vmem:[%s3085 + $0x18] sm:$0x1] 0.0
        %3088 = vst [vmem:[%s3085 + $0x30] sm:$0x1] 0.0
        %3089 = vst [vmem:[%s3085 + $0x48] sm:$0x1] 0.0
        %3090 = vst [vmem:[%s3085 + $0x60] sm:$0x1] 0.0
        %3091 = vst [vmem:[%s3085 + $0x78] sm:$0x1] 0.0
        %3092 = vst [vmem:[%s3085 + $0x90] sm:$0x1] 0.0
        %3093 = vst [vmem:[%s3085 + $0xa8] sm:$0x1] 0.0
        %3094 = vst [vmem:[%s3085 + $0xc0] sm:$0x1] 0.0
        %3095 = vst [vmem:[%s3085 + $0xd8] sm:$0x1] 0.0
        %3096 = vst [vmem:[%s3085 + $0xf0] sm:$0x1] 0.0
        %3097 = vst [vmem:[%s3085 + $0x108] sm:$0x1] 0.0
        %3098 = vst [vmem:[%s3085 + $0x120] sm:$0x1] 0.0
        %3099 = vst [vmem:[%s3085 + $0x138] sm:$0x1] 0.0
        %3100 = vst [vmem:[%s3085 + $0x150] sm:$0x1] 0.0
        %3101 = vst [vmem:[%s3085 + $0x168] sm:$0x1] 0.0
        %3102 = vst [vmem:[%s3085 + $0x11] sm:$0x1] 0.0
        %3103 = vst [vmem:[%s3085 + $0x29] sm:$0x1] 0.0
        %3104 = vst [vmem:[%s3085 + $0x41] sm:$0x1] 0.0
        %3105 = vst [vmem:[%s3085 + $0x59] sm:$0x1] 0.0
        %3106 = vst [vmem:[%s3085 + $0x71] sm:$0x1] 0.0
        %3107 = vst [vmem:[%s3085 + $0x89] sm:$0x1] 0.0
        %3108 = vst [vmem:[%s3085 + $0xa1] sm:$0x1] 0.0
        %3109 = vst [vmem:[%s3085 + $0xb9] sm:$0x1] 0.0
        %3110 = vst [vmem:[%s3085 + $0xd1] sm:$0x1] 0.0
        %3111 = vst [vmem:[%s3085 + $0xe9] sm:$0x1] 0.0
        %3112 = vst [vmem:[%s3085 + $0x101] sm:$0x1] 0.0
        %3113 = vst [vmem:[%s3085 + $0x119] sm:$0x1] 0.0
        %3114 = vst [vmem:[%s3085 + $0x131] sm:$0x1] 0.0
        %3115 = vst [vmem:[%s3085 + $0x149] sm:$0x1] 0.0
        %3116 = vst [vmem:[%s3085 + $0x161] sm:$0x1] 0.0
        %3117 = vst [vmem:[%s3085 + $0x179] sm:$0x1] 0.0
        %3118 = vst [vmem:[%s3085 + $0x1] sm:$0xff] %v3046
        %3119 = vst [vmem:[%s3085 + $0x9] sm:$0xff] %v3047
        %3120 = vst [vmem:[%s3085 + $0x19] sm:$0xff] %v3048
        %3121 = vst [vmem:[%s3085 + $0x21] sm:$0xff] %v3049
        %3122 = vst [vmem:[%s3085 + $0x31] sm:$0xff] %v3050
        %3123 = vst [vmem:[%s3085 + $0x39] sm:$0xff] %v3051
        %3124 = vst [vmem:[%s3085 + $0x49] sm:$0xff] %v3052
        %3125 = vst [vmem:[%s3085 + $0x51] sm:$0xff] %v3053
        %3126 = vst [vmem:[%s3085 + $0x61] sm:$0xff] %v3054
        %3127 = vst [vmem:[%s3085 + $0x69] sm:$0xff] %v3055
        %3128 = vst [vmem:[%s3085 + $0x79] sm:$0xff] %v3056
        %3129 = vst [vmem:[%s3085 + $0x81] sm:$0xff] %v3057
        %3130 = vst [vmem:[%s3085 + $0x91] sm:$0xff] %v3058
        %3131 = vst [vmem:[%s3085 + $0x99] sm:$0xff] %v3059
        %3132 = vst [vmem:[%s3085 + $0xa9] sm:$0xff] %v3060
        %3133 = vst [vmem:[%s3085 + $0xb1] sm:$0xff] %v3061
        %3134 = vst [vmem:[%s3085 + $0xc1] sm:$0xff] %v3062
        %3135 = vst [vmem:[%s3085 + $0xc9] sm:$0xff] %v3063
        %3136 = vst [vmem:[%s3085 + $0xd9] sm:$0xff] %v3064
        %3137 = vst [vmem:[%s3085 + $0xe1] sm:$0xff] %v3065
        %3138 = vst [vmem:[%s3085 + $0xf1] sm:$0xff] %v3066
        %3139 = vst [vmem:[%s3085 + $0xf9] sm:$0xff] %v3067
        %3140 = vst [vmem:[%s3085 + $0x109] sm:$0xff] %v3068
        %3141 = vst [vmem:[%s3085 + $0x111] sm:$0xff] %v3069
        %3142 = vst [vmem:[%s3085 + $0x121] sm:$0xff] %v3070
        %3143 = vst [vmem:[%s3085 + $0x129] sm:$0xff] %v3071
        %3144 = vst [vmem:[%s3085 + $0x139] sm:$0xff] %v3072
        %3145 = vst [vmem:[%s3085 + $0x141] sm:$0xff] %v3073
        %3146 = vst [vmem:[%s3085 + $0x151] sm:$0xff] %v3074
        %3147 = vst [vmem:[%s3085 + $0x159] sm:$0xff] %v3075
        %3148 = vst [vmem:[%s3085 + $0x169] sm:$0xff] %v3076
        %3149 = vst [vmem:[%s3085 + $0x171] sm:$0xff] %v3077
        %v3150 = vld [vmem:[#allocation2] sm:$0xff]
        %v3151 = vld [vmem:[#allocation2 + $0x8] sm:$0xff]
        %v3152 = vld [vmem:[#allocation2 + $0x18] sm:$0xff]
        %v3153 = vld [vmem:[#allocation2 + $0x20] sm:$0xff]
        %v3154 = vld [vmem:[#allocation2 + $0x30] sm:$0xff]
        %v3155 = vld [vmem:[#allocation2 + $0x38] sm:$0xff]
        %v3156 = vld [vmem:[#allocation2 + $0x48] sm:$0xff]
        %v3157 = vld [vmem:[#allocation2 + $0x50] sm:$0xff]
        %v3158 = vld [vmem:[#allocation2 + $0x60] sm:$0xff]
        %v3159 = vld [vmem:[#allocation2 + $0x68] sm:$0xff]
        %v3160 = vld [vmem:[#allocation2 + $0x78] sm:$0xff]
        %v3161 = vld [vmem:[#allocation2 + $0x80] sm:$0xff]
        %v3162 = vld [vmem:[#allocation2 + $0x90] sm:$0xff]
        %v3163 = vld [vmem:[#allocation2 + $0x98] sm:$0xff]
        %v3164 = vld [vmem:[#allocation2 + $0xa8] sm:$0xff]
        %v3165 = vld [vmem:[#allocation2 + $0xb0] sm:$0xff]
        %v3166 = vld [vmem:[#allocation2 + $0xc0] sm:$0xff]
        %v3167 = vld [vmem:[#allocation2 + $0xc8] sm:$0xff]
        %v3168 = vld [vmem:[#allocation2 + $0xd8] sm:$0xff]
        %v3169 = vld [vmem:[#allocation2 + $0xe0] sm:$0xff]
        %v3170 = vld [vmem:[#allocation2 + $0xf0] sm:$0xff]
        %v3171 = vld [vmem:[#allocation2 + $0xf8] sm:$0xff]
        %v3172 = vld [vmem:[#allocation2 + $0x108] sm:$0xff]
        %v3173 = vld [vmem:[#allocation2 + $0x110] sm:$0xff]
        %v3174 = vld [vmem:[#allocation2 + $0x120] sm:$0xff]
        %v3175 = vld [vmem:[#allocation2 + $0x128] sm:$0xff]
        %v3176 = vld [vmem:[#allocation2 + $0x138] sm:$0xff]
        %v3177 = vld [vmem:[#allocation2 + $0x140] sm:$0xff]
        %v3178 = vld [vmem:[#allocation2 + $0x150] sm:$0xff]
        %v3179 = vld [vmem:[#allocation2 + $0x158] sm:$0xff]
        %v3180 = vld [vmem:[#allocation2 + $0x168] sm:$0xff]
        %v3181 = vld [vmem:[#allocation2 + $0x170] sm:$0xff]
        %v3182 = vpack.c.bf16 %v3150, %v3150
        %v3183 = vpack.c.bf16 %v3151, %v3151
        %v3184 = vpack.c.bf16 %v3152, %v3152
        %v3185 = vpack.c.bf16 %v3153, %v3153
        %v3186 = vpack.c.bf16 %v3154, %v3154
        %v3187 = vpack.c.bf16 %v3155, %v3155
        %v3188 = vpack.c.bf16 %v3156, %v3156
        %v3189 = vpack.c.bf16 %v3157, %v3157
        %v3190 = vpack.c.bf16 %v3158, %v3158
        %v3191 = vpack.c.bf16 %v3159, %v3159
        %v3192 = vpack.c.bf16 %v3160, %v3160
        %v3193 = vpack.c.bf16 %v3161, %v3161
        %v3194 = vpack.c.bf16 %v3162, %v3162
        %v3195 = vpack.c.bf16 %v3163, %v3163
        %v3196 = vpack.c.bf16 %v3164, %v3164
        %v3197 = vpack.c.bf16 %v3165, %v3165
        %v3198 = vpack.c.bf16 %v3166, %v3166
        %v3199 = vpack.c.bf16 %v3167, %v3167
        %v3200 = vpack.c.bf16 %v3168, %v3168
        %v3201 = vpack.c.bf16 %v3169, %v3169
        %v3202 = vpack.c.bf16 %v3170, %v3170
        %v3203 = vpack.c.bf16 %v3171, %v3171
        %v3204 = vpack.c.bf16 %v3172, %v3172
        %v3205 = vpack.c.bf16 %v3173, %v3173
        %v3206 = vpack.c.bf16 %v3174, %v3174
        %v3207 = vpack.c.bf16 %v3175, %v3175
        %v3208 = vpack.c.bf16 %v3176, %v3176
        %v3209 = vpack.c.bf16 %v3177, %v3177
        %v3210 = vpack.c.bf16 %v3178, %v3178
        %v3211 = vpack.c.bf16 %v3179, %v3179
        %v3212 = vpack.c.bf16 %v3180, %v3180
        %v3213 = vpack.c.bf16 %v3181, %v3181
        %v3214 = vld [vmem:[#allocation2 + $0x1] sm:$0xff]
        %v3215 = vld [vmem:[#allocation2 + $0x9] sm:$0xff]
        %v3216 = vld [vmem:[#allocation2 + $0x19] sm:$0xff]
        %v3217 = vld [vmem:[#allocation2 + $0x21] sm:$0xff]
        %v3218 = vld [vmem:[#allocation2 + $0x31] sm:$0xff]
        %v3219 = vld [vmem:[#allocation2 + $0x39] sm:$0xff]
        %v3220 = vld [vmem:[#allocation2 + $0x49] sm:$0xff]
        %v3221 = vld [vmem:[#allocation2 + $0x51] sm:$0xff]
        %v3222 = vld [vmem:[#allocation2 + $0x61] sm:$0xff]
        %v3223 = vld [vmem:[#allocation2 + $0x69] sm:$0xff]
        %v3224 = vld [vmem:[#allocation2 + $0x79] sm:$0xff]
        %v3225 = vld [vmem:[#allocation2 + $0x81] sm:$0xff]
        %v3226 = vld [vmem:[#allocation2 + $0x91] sm:$0xff]
        %v3227 = vld [vmem:[#allocation2 + $0x99] sm:$0xff]
        %v3228 = vld [vmem:[#allocation2 + $0xa9] sm:$0xff]
        %v3229 = vld [vmem:[#allocation2 + $0xb1] sm:$0xff]
        %v3230 = vld [vmem:[#allocation2 + $0xc1] sm:$0xff]
        %v3231 = vld [vmem:[#allocation2 + $0xc9] sm:$0xff]
        %v3232 = vld [vmem:[#allocation2 + $0xd9] sm:$0xff]
        %v3233 = vld [vmem:[#allocation2 + $0xe1] sm:$0xff]
        %v3234 = vld [vmem:[#allocation2 + $0xf1] sm:$0xff]
        %v3235 = vld [vmem:[#allocation2 + $0xf9] sm:$0xff]
        %v3236 = vld [vmem:[#allocation2 + $0x109] sm:$0xff]
        %v3237 = vld [vmem:[#allocation2 + $0x111] sm:$0xff]
        %v3238 = vld [vmem:[#allocation2 + $0x121] sm:$0xff]
        %v3239 = vld [vmem:[#allocation2 + $0x129] sm:$0xff]
        %v3240 = vld [vmem:[#allocation2 + $0x139] sm:$0xff]
        %v3241 = vld [vmem:[#allocation2 + $0x141] sm:$0xff]
        %v3242 = vld [vmem:[#allocation2 + $0x151] sm:$0xff]
        %v3243 = vld [vmem:[#allocation2 + $0x159] sm:$0xff]
        %v3244 = vld [vmem:[#allocation2 + $0x169] sm:$0xff]
        %v3245 = vld [vmem:[#allocation2 + $0x171] sm:$0xff]
        %v3246 = vpack.c.bf16 %v3214, %v3214
        %v3247 = vpack.c.bf16 %v3215, %v3215
        %v3248 = vpack.c.bf16 %v3216, %v3216
        %v3249 = vpack.c.bf16 %v3217, %v3217
        %v3250 = vpack.c.bf16 %v3218, %v3218
        %v3251 = vpack.c.bf16 %v3219, %v3219
        %v3252 = vpack.c.bf16 %v3220, %v3220
        %v3253 = vpack.c.bf16 %v3221, %v3221
        %v3254 = vpack.c.bf16 %v3222, %v3222
        %v3255 = vpack.c.bf16 %v3223, %v3223
        %v3256 = vpack.c.bf16 %v3224, %v3224
        %v3257 = vpack.c.bf16 %v3225, %v3225
        %v3258 = vpack.c.bf16 %v3226, %v3226
        %v3259 = vpack.c.bf16 %v3227, %v3227
        %v3260 = vpack.c.bf16 %v3228, %v3228
        %v3261 = vpack.c.bf16 %v3229, %v3229
        %v3262 = vpack.c.bf16 %v3230, %v3230
        %v3263 = vpack.c.bf16 %v3231, %v3231
        %v3264 = vpack.c.bf16 %v3232, %v3232
        %v3265 = vpack.c.bf16 %v3233, %v3233
        %v3266 = vpack.c.bf16 %v3234, %v3234
        %v3267 = vpack.c.bf16 %v3235, %v3235
        %v3268 = vpack.c.bf16 %v3236, %v3236
        %v3269 = vpack.c.bf16 %v3237, %v3237
        %v3270 = vpack.c.bf16 %v3238, %v3238
        %v3271 = vpack.c.bf16 %v3239, %v3239
        %v3272 = vpack.c.bf16 %v3240, %v3240
        %v3273 = vpack.c.bf16 %v3241, %v3241
        %v3274 = vpack.c.bf16 %v3242, %v3242
        %v3275 = vpack.c.bf16 %v3243, %v3243
        %v3276 = vpack.c.bf16 %v3244, %v3244
        %v3277 = vpack.c.bf16 %v3245, %v3245
        %v3278 = vld [vmem:[#allocation2 + $0x2] sm:$0xff]
        %v3279 = vld [vmem:[#allocation2 + $0xa] sm:$0xff]
        %v3280 = vld [vmem:[#allocation2 + $0x1a] sm:$0xff]
        %v3281 = vld [vmem:[#allocation2 + $0x22] sm:$0xff]
        %v3282 = vld [vmem:[#allocation2 + $0x32] sm:$0xff]
        %v3283 = vld [vmem:[#allocation2 + $0x3a] sm:$0xff]
        %v3284 = vld [vmem:[#allocation2 + $0x4a] sm:$0xff]
        %v3285 = vld [vmem:[#allocation2 + $0x52] sm:$0xff]
        %v3286 = vld [vmem:[#allocation2 + $0x62] sm:$0xff]
        %v3287 = vld [vmem:[#allocation2 + $0x6a] sm:$0xff]
        %v3288 = vld [vmem:[#allocation2 + $0x7a] sm:$0xff]
        %v3289 = vld [vmem:[#allocation2 + $0x82] sm:$0xff]
        %v3290 = vld [vmem:[#allocation2 + $0x92] sm:$0xff]
        %v3291 = vld [vmem:[#allocation2 + $0x9a] sm:$0xff]
        %v3292 = vld [vmem:[#allocation2 + $0xaa] sm:$0xff]
        %v3293 = vld [vmem:[#allocation2 + $0xb2] sm:$0xff]
        %v3294 = vld [vmem:[#allocation2 + $0xc2] sm:$0xff]
        %v3295 = vld [vmem:[#allocation2 + $0xca] sm:$0xff]
        %v3296 = vld [vmem:[#allocation2 + $0xda] sm:$0xff]
        %v3297 = vld [vmem:[#allocation2 + $0xe2] sm:$0xff]
        %v3298 = vld [vmem:[#allocation2 + $0xf2] sm:$0xff]
        %v3299 = vld [vmem:[#allocation2 + $0xfa] sm:$0xff]
        %v3300 = vld [vmem:[#allocation2 + $0x10a] sm:$0xff]
        %v3301 = vld [vmem:[#allocation2 + $0x112] sm:$0xff]
        %v3302 = vld [vmem:[#allocation2 + $0x122] sm:$0xff]
        %v3303 = vld [vmem:[#allocation2 + $0x12a] sm:$0xff]
        %v3304 = vld [vmem:[#allocation2 + $0x13a] sm:$0xff]
        %v3305 = vld [vmem:[#allocation2 + $0x142] sm:$0xff]
        %v3306 = vld [vmem:[#allocation2 + $0x152] sm:$0xff]
        %v3307 = vld [vmem:[#allocation2 + $0x15a] sm:$0xff]
        %v3308 = vld [vmem:[#allocation2 + $0x16a] sm:$0xff]
        %v3309 = vld [vmem:[#allocation2 + $0x172] sm:$0xff]
        %v3310 = vpack.c.bf16 %v3278, %v3278
        %v3311 = vpack.c.bf16 %v3279, %v3279
        %v3312 = vpack.c.bf16 %v3280, %v3280
        %v3313 = vpack.c.bf16 %v3281, %v3281
        %v3314 = vpack.c.bf16 %v3282, %v3282
        %v3315 = vpack.c.bf16 %v3283, %v3283
        %v3316 = vpack.c.bf16 %v3284, %v3284
        %v3317 = vpack.c.bf16 %v3285, %v3285
        %v3318 = vpack.c.bf16 %v3286, %v3286
        %v3319 = vpack.c.bf16 %v3287, %v3287
        %v3320 = vpack.c.bf16 %v3288, %v3288
        %v3321 = vpack.c.bf16 %v3289, %v3289
        %v3322 = vpack.c.bf16 %v3290, %v3290
        %v3323 = vpack.c.bf16 %v3291, %v3291
        %v3324 = vpack.c.bf16 %v3292, %v3292
        %v3325 = vpack.c.bf16 %v3293, %v3293
        %v3326 = vpack.c.bf16 %v3294, %v3294
        %v3327 = vpack.c.bf16 %v3295, %v3295
        %v3328 = vpack.c.bf16 %v3296, %v3296
        %v3329 = vpack.c.bf16 %v3297, %v3297
        %v3330 = vpack.c.bf16 %v3298, %v3298
        %v3331 = vpack.c.bf16 %v3299, %v3299
        %v3332 = vpack.c.bf16 %v3300, %v3300
        %v3333 = vpack.c.bf16 %v3301, %v3301
        %v3334 = vpack.c.bf16 %v3302, %v3302
        %v3335 = vpack.c.bf16 %v3303, %v3303
        %v3336 = vpack.c.bf16 %v3304, %v3304
        %v3337 = vpack.c.bf16 %v3305, %v3305
        %v3338 = vpack.c.bf16 %v3306, %v3306
        %v3339 = vpack.c.bf16 %v3307, %v3307
        %v3340 = vpack.c.bf16 %v3308, %v3308
        %v3341 = vpack.c.bf16 %v3309, %v3309
        %v3342 = vld [vmem:[%s3085] sm:$0xff]
        %v3343 = vld [vmem:[%s3085 + $0x8] sm:$0xff]
        %v3344 = vld [vmem:[%s3085 + $0x18] sm:$0xff]
        %v3345 = vld [vmem:[%s3085 + $0x20] sm:$0xff]
        %v3346 = vld [vmem:[%s3085 + $0x30] sm:$0xff]
        %v3347 = vld [vmem:[%s3085 + $0x38] sm:$0xff]
        %v3348 = vld [vmem:[%s3085 + $0x48] sm:$0xff]
        %v3349 = vld [vmem:[%s3085 + $0x50] sm:$0xff]
        %v3350 = vld [vmem:[%s3085 + $0x60] sm:$0xff]
        %v3351 = vld [vmem:[%s3085 + $0x68] sm:$0xff]
        %v3352 = vld [vmem:[%s3085 + $0x78] sm:$0xff]
        %v3353 = vld [vmem:[%s3085 + $0x80] sm:$0xff]
        %v3354 = vld [vmem:[%s3085 + $0x90] sm:$0xff]
        %v3355 = vld [vmem:[%s3085 + $0x98] sm:$0xff]
        %v3356 = vld [vmem:[%s3085 + $0xa8] sm:$0xff]
        %v3357 = vld [vmem:[%s3085 + $0xb0] sm:$0xff]
        %v3358 = vld [vmem:[%s3085 + $0xc0] sm:$0xff]
        %v3359 = vld [vmem:[%s3085 + $0xc8] sm:$0xff]
        %v3360 = vld [vmem:[%s3085 + $0xd8] sm:$0xff]
        %v3361 = vld [vmem:[%s3085 + $0xe0] sm:$0xff]
        %v3362 = vld [vmem:[%s3085 + $0xf0] sm:$0xff]
        %v3363 = vld [vmem:[%s3085 + $0xf8] sm:$0xff]
        %v3364 = vld [vmem:[%s3085 + $0x108] sm:$0xff]
        %v3365 = vld [vmem:[%s3085 + $0x110] sm:$0xff]
        %v3366 = vld [vmem:[%s3085 + $0x120] sm:$0xff]
        %v3367 = vld [vmem:[%s3085 + $0x128] sm:$0xff]
        %v3368 = vld [vmem:[%s3085 + $0x138] sm:$0xff]
        %v3369 = vld [vmem:[%s3085 + $0x140] sm:$0xff]
        %v3370 = vld [vmem:[%s3085 + $0x150] sm:$0xff]
        %v3371 = vld [vmem:[%s3085 + $0x158] sm:$0xff]
        %v3372 = vld [vmem:[%s3085 + $0x168] sm:$0xff]
        %v3373 = vld [vmem:[%s3085 + $0x170] sm:$0xff]
        %v3374 = vpack.c.bf16 %v3342, %v3342
        %v3375 = vpack.c.bf16 %v3343, %v3343
        %v3376 = vpack.c.bf16 %v3344, %v3344
        %v3377 = vpack.c.bf16 %v3345, %v3345
        %v3378 = vpack.c.bf16 %v3346, %v3346
        %v3379 = vpack.c.bf16 %v3347, %v3347
        %v3380 = vpack.c.bf16 %v3348, %v3348
        %v3381 = vpack.c.bf16 %v3349, %v3349
        %v3382 = vpack.c.bf16 %v3350, %v3350
        %v3383 = vpack.c.bf16 %v3351, %v3351
        %v3384 = vpack.c.bf16 %v3352, %v3352
        %v3385 = vpack.c.bf16 %v3353, %v3353
        %v3386 = vpack.c.bf16 %v3354, %v3354
        %v3387 = vpack.c.bf16 %v3355, %v3355
        %v3388 = vpack.c.bf16 %v3356, %v3356
        %v3389 = vpack.c.bf16 %v3357, %v3357
        %v3390 = vpack.c.bf16 %v3358, %v3358
        %v3391 = vpack.c.bf16 %v3359, %v3359
        %v3392 = vpack.c.bf16 %v3360, %v3360
        %v3393 = vpack.c.bf16 %v3361, %v3361
        %v3394 = vpack.c.bf16 %v3362, %v3362
        %v3395 = vpack.c.bf16 %v3363, %v3363
        %v3396 = vpack.c.bf16 %v3364, %v3364
        %v3397 = vpack.c.bf16 %v3365, %v3365
        %v3398 = vpack.c.bf16 %v3366, %v3366
        %v3399 = vpack.c.bf16 %v3367, %v3367
        %v3400 = vpack.c.bf16 %v3368, %v3368
        %v3401 = vpack.c.bf16 %v3369, %v3369
        %v3402 = vpack.c.bf16 %v3370, %v3370
        %v3403 = vpack.c.bf16 %v3371, %v3371
        %v3404 = vpack.c.bf16 %v3372, %v3372
        %v3405 = vpack.c.bf16 %v3373, %v3373
        %v3406 = vld [vmem:[%s3085 + $0x1] sm:$0xff]
        %v3407 = vld [vmem:[%s3085 + $0x9] sm:$0xff]
        %v3408 = vld [vmem:[%s3085 + $0x19] sm:$0xff]
        %v3409 = vld [vmem:[%s3085 + $0x21] sm:$0xff]
        %v3410 = vld [vmem:[%s3085 + $0x31] sm:$0xff]
        %v3411 = vld [vmem:[%s3085 + $0x39] sm:$0xff]
        %v3412 = vld [vmem:[%s3085 + $0x49] sm:$0xff]
        %v3413 = vld [vmem:[%s3085 + $0x51] sm:$0xff]
        %v3414 = vld [vmem:[%s3085 + $0x61] sm:$0xff]
        %v3415 = vld [vmem:[%s3085 + $0x69] sm:$0xff]
        %v3416 = vld [vmem:[%s3085 + $0x79] sm:$0xff]
        %v3417 = vld [vmem:[%s3085 + $0x81] sm:$0xff]
        %v3418 = vld [vmem:[%s3085 + $0x91] sm:$0xff]
        %v3419 = vld [vmem:[%s3085 + $0x99] sm:$0xff]
        %v3420 = vld [vmem:[%s3085 + $0xa9] sm:$0xff]
        %v3421 = vld [vmem:[%s3085 + $0xb1] sm:$0xff]
        %v3422 = vld [vmem:[%s3085 + $0xc1] sm:$0xff]
        %v3423 = vld [vmem:[%s3085 + $0xc9] sm:$0xff]
        %v3424 = vld [vmem:[%s3085 + $0xd9] sm:$0xff]
        %v3425 = vld [vmem:[%s3085 + $0xe1] sm:$0xff]
        %v3426 = vld [vmem:[%s3085 + $0xf1] sm:$0xff]
        %v3427 = vld [vmem:[%s3085 + $0xf9] sm:$0xff]
        %v3428 = vld [vmem:[%s3085 + $0x109] sm:$0xff]
        %v3429 = vld [vmem:[%s3085 + $0x111] sm:$0xff]
        %v3430 = vld [vmem:[%s3085 + $0x121] sm:$0xff]
        %v3431 = vld [vmem:[%s3085 + $0x129] sm:$0xff]
        %v3432 = vld [vmem:[%s3085 + $0x139] sm:$0xff]
        %v3433 = vld [vmem:[%s3085 + $0x141] sm:$0xff]
        %v3434 = vld [vmem:[%s3085 + $0x151] sm:$0xff]
        %v3435 = vld [vmem:[%s3085 + $0x159] sm:$0xff]
        %v3436 = vld [vmem:[%s3085 + $0x169] sm:$0xff]
        %v3437 = vld [vmem:[%s3085 + $0x171] sm:$0xff]
        %v3438 = vpack.c.bf16 %v3406, %v3406
        %v3439 = vpack.c.bf16 %v3407, %v3407
        %v3440 = vpack.c.bf16 %v3408, %v3408
        %v3441 = vpack.c.bf16 %v3409, %v3409
        %v3442 = vpack.c.bf16 %v3410, %v3410
        %v3443 = vpack.c.bf16 %v3411, %v3411
        %v3444 = vpack.c.bf16 %v3412, %v3412
        %v3445 = vpack.c.bf16 %v3413, %v3413
        %v3446 = vpack.c.bf16 %v3414, %v3414
        %v3447 = vpack.c.bf16 %v3415, %v3415
        %v3448 = vpack.c.bf16 %v3416, %v3416
        %v3449 = vpack.c.bf16 %v3417, %v3417
        %v3450 = vpack.c.bf16 %v3418, %v3418
        %v3451 = vpack.c.bf16 %v3419, %v3419
        %v3452 = vpack.c.bf16 %v3420, %v3420
        %v3453 = vpack.c.bf16 %v3421, %v3421
        %v3454 = vpack.c.bf16 %v3422, %v3422
        %v3455 = vpack.c.bf16 %v3423, %v3423
        %v3456 = vpack.c.bf16 %v3424, %v3424
        %v3457 = vpack.c.bf16 %v3425, %v3425
        %v3458 = vpack.c.bf16 %v3426, %v3426
        %v3459 = vpack.c.bf16 %v3427, %v3427
        %v3460 = vpack.c.bf16 %v3428, %v3428
        %v3461 = vpack.c.bf16 %v3429, %v3429
        %v3462 = vpack.c.bf16 %v3430, %v3430
        %v3463 = vpack.c.bf16 %v3431, %v3431
        %v3464 = vpack.c.bf16 %v3432, %v3432
        %v3465 = vpack.c.bf16 %v3433, %v3433
        %v3466 = vpack.c.bf16 %v3434, %v3434
        %v3467 = vpack.c.bf16 %v3435, %v3435
        %v3468 = vpack.c.bf16 %v3436, %v3436
        %v3469 = vpack.c.bf16 %v3437, %v3437
        %v3470 = vld [vmem:[%s3085 + $0x2] sm:$0xff]
        %v3471 = vld [vmem:[%s3085 + $0xa] sm:$0xff]
        %v3472 = vld [vmem:[%s3085 + $0x1a] sm:$0xff]
        %v3473 = vld [vmem:[%s3085 + $0x22] sm:$0xff]
        %v3474 = vld [vmem:[%s3085 + $0x32] sm:$0xff]
        %v3475 = vld [vmem:[%s3085 + $0x3a] sm:$0xff]
        %v3476 = vld [vmem:[%s3085 + $0x4a] sm:$0xff]
        %v3477 = vld [vmem:[%s3085 + $0x52] sm:$0xff]
        %v3478 = vld [vmem:[%s3085 + $0x62] sm:$0xff]
        %v3479 = vld [vmem:[%s3085 + $0x6a] sm:$0xff]
        %v3480 = vld [vmem:[%s3085 + $0x7a] sm:$0xff]
        %v3481 = vld [vmem:[%s3085 + $0x82] sm:$0xff]
        %v3482 = vld [vmem:[%s3085 + $0x92] sm:$0xff]
        %v3483 = vld [vmem:[%s3085 + $0x9a] sm:$0xff]
        %v3484 = vld [vmem:[%s3085 + $0xaa] sm:$0xff]
        %v3485 = vld [vmem:[%s3085 + $0xb2] sm:$0xff]
        %v3486 = vld [vmem:[%s3085 + $0xc2] sm:$0xff]
        %v3487 = vld [vmem:[%s3085 + $0xca] sm:$0xff]
        %v3488 = vld [vmem:[%s3085 + $0xda] sm:$0xff]
        %v3489 = vld [vmem:[%s3085 + $0xe2] sm:$0xff]
        %v3490 = vld [vmem:[%s3085 + $0xf2] sm:$0xff]
        %v3491 = vld [vmem:[%s3085 + $0xfa] sm:$0xff]
        %v3492 = vld [vmem:[%s3085 + $0x10a] sm:$0xff]
        %v3493 = vld [vmem:[%s3085 + $0x112] sm:$0xff]
        %v3494 = vld [vmem:[%s3085 + $0x122] sm:$0xff]
        %v3495 = vld [vmem:[%s3085 + $0x12a] sm:$0xff]
        %v3496 = vld [vmem:[%s3085 + $0x13a] sm:$0xff]
        %v3497 = vld [vmem:[%s3085 + $0x142] sm:$0xff]
        %v3498 = vld [vmem:[%s3085 + $0x152] sm:$0xff]
        %v3499 = vld [vmem:[%s3085 + $0x15a] sm:$0xff]
        %v3500 = vld [vmem:[%s3085 + $0x16a] sm:$0xff]
        %v3501 = vld [vmem:[%s3085 + $0x172] sm:$0xff]
        %v3502 = vpack.c.bf16 %v3470, %v3470
        %v3503 = vpack.c.bf16 %v3471, %v3471
        %v3504 = vpack.c.bf16 %v3472, %v3472
        %v3505 = vpack.c.bf16 %v3473, %v3473
        %v3506 = vpack.c.bf16 %v3474, %v3474
        %v3507 = vpack.c.bf16 %v3475, %v3475
        %v3508 = vpack.c.bf16 %v3476, %v3476
        %v3509 = vpack.c.bf16 %v3477, %v3477
        %v3510 = vpack.c.bf16 %v3478, %v3478
        %v3511 = vpack.c.bf16 %v3479, %v3479
        %v3512 = vpack.c.bf16 %v3480, %v3480
        %v3513 = vpack.c.bf16 %v3481, %v3481
        %v3514 = vpack.c.bf16 %v3482, %v3482
        %v3515 = vpack.c.bf16 %v3483, %v3483
        %v3516 = vpack.c.bf16 %v3484, %v3484
        %v3517 = vpack.c.bf16 %v3485, %v3485
        %v3518 = vpack.c.bf16 %v3486, %v3486
        %v3519 = vpack.c.bf16 %v3487, %v3487
        %v3520 = vpack.c.bf16 %v3488, %v3488
        %v3521 = vpack.c.bf16 %v3489, %v3489
        %v3522 = vpack.c.bf16 %v3490, %v3490
        %v3523 = vpack.c.bf16 %v3491, %v3491
        %v3524 = vpack.c.bf16 %v3492, %v3492
        %v3525 = vpack.c.bf16 %v3493, %v3493
        %v3526 = vpack.c.bf16 %v3494, %v3494
        %v3527 = vpack.c.bf16 %v3495, %v3495
        %v3528 = vpack.c.bf16 %v3496, %v3496
        %v3529 = vpack.c.bf16 %v3497, %v3497
        %v3530 = vpack.c.bf16 %v3498, %v3498
        %v3531 = vpack.c.bf16 %v3499, %v3499
        %v3532 = vpack.c.bf16 %v3500, %v3500
        %v3533 = vpack.c.bf16 %v3501, %v3501
        %s3534 = scalar_lea.vmem [#allocation2], 48
        %v3535 = vld [vmem:[%s3534] sm:$0xff]
        %v3536 = vld [vmem:[%s3534 + $0x8] sm:$0xff]
        %v3537 = vld [vmem:[%s3534 + $0x18] sm:$0xff]
        %v3538 = vld [vmem:[%s3534 + $0x20] sm:$0xff]
        %v3539 = vld [vmem:[%s3534 + $0x30] sm:$0xff]
        %v3540 = vld [vmem:[%s3534 + $0x38] sm:$0xff]
        %v3541 = vld [vmem:[%s3534 + $0x48] sm:$0xff]
        %v3542 = vld [vmem:[%s3534 + $0x50] sm:$0xff]
        %v3543 = vld [vmem:[%s3534 + $0x60] sm:$0xff]
        %v3544 = vld [vmem:[%s3534 + $0x68] sm:$0xff]
        %v3545 = vld [vmem:[%s3534 + $0x78] sm:$0xff]
        %v3546 = vld [vmem:[%s3534 + $0x80] sm:$0xff]
        %v3547 = vld [vmem:[%s3534 + $0x90] sm:$0xff]
        %v3548 = vld [vmem:[%s3534 + $0x98] sm:$0xff]
        %v3549 = vld [vmem:[%s3534 + $0xa8] sm:$0xff]
        %v3550 = vld [vmem:[%s3534 + $0xb0] sm:$0xff]
        %v3551 = vld [vmem:[%s3534 + $0xc0] sm:$0xff]
        %v3552 = vld [vmem:[%s3534 + $0xc8] sm:$0xff]
        %v3553 = vld [vmem:[%s3534 + $0xd8] sm:$0xff]
        %v3554 = vld [vmem:[%s3534 + $0xe0] sm:$0xff]
        %v3555 = vld [vmem:[%s3534 + $0xf0] sm:$0xff]
        %v3556 = vld [vmem:[%s3534 + $0xf8] sm:$0xff]
        %v3557 = vld [vmem:[%s3534 + $0x108] sm:$0xff]
        %v3558 = vld [vmem:[%s3534 + $0x110] sm:$0xff]
        %v3559 = vld [vmem:[%s3534 + $0x120] sm:$0xff]
        %v3560 = vld [vmem:[%s3534 + $0x128] sm:$0xff]
        %v3561 = vld [vmem:[%s3534 + $0x138] sm:$0xff]
        %v3562 = vld [vmem:[%s3534 + $0x140] sm:$0xff]
        %v3563 = vld [vmem:[%s3534 + $0x150] sm:$0xff]
        %v3564 = vld [vmem:[%s3534 + $0x158] sm:$0xff]
        %v3565 = vld [vmem:[%s3534 + $0x168] sm:$0xff]
        %v3566 = vld [vmem:[%s3534 + $0x170] sm:$0xff]
        %v3567 = vpack.c.bf16 %v3535, %v3535
        %v3568 = vpack.c.bf16 %v3536, %v3536
        %v3569 = vpack.c.bf16 %v3537, %v3537
        %v3570 = vpack.c.bf16 %v3538, %v3538
        %v3571 = vpack.c.bf16 %v3539, %v3539
        %v3572 = vpack.c.bf16 %v3540, %v3540
        %v3573 = vpack.c.bf16 %v3541, %v3541
        %v3574 = vpack.c.bf16 %v3542, %v3542
        %v3575 = vpack.c.bf16 %v3543, %v3543
        %v3576 = vpack.c.bf16 %v3544, %v3544
        %v3577 = vpack.c.bf16 %v3545, %v3545
        %v3578 = vpack.c.bf16 %v3546, %v3546
        %v3579 = vpack.c.bf16 %v3547, %v3547
        %v3580 = vpack.c.bf16 %v3548, %v3548
        %v3581 = vpack.c.bf16 %v3549, %v3549
        %v3582 = vpack.c.bf16 %v3550, %v3550
        %v3583 = vpack.c.bf16 %v3551, %v3551
        %v3584 = vpack.c.bf16 %v3552, %v3552
        %v3585 = vpack.c.bf16 %v3553, %v3553
        %v3586 = vpack.c.bf16 %v3554, %v3554
        %v3587 = vpack.c.bf16 %v3555, %v3555
        %v3588 = vpack.c.bf16 %v3556, %v3556
        %v3589 = vpack.c.bf16 %v3557, %v3557
        %v3590 = vpack.c.bf16 %v3558, %v3558
        %v3591 = vpack.c.bf16 %v3559, %v3559
        %v3592 = vpack.c.bf16 %v3560, %v3560
        %v3593 = vpack.c.bf16 %v3561, %v3561
        %v3594 = vpack.c.bf16 %v3562, %v3562
        %v3595 = vpack.c.bf16 %v3563, %v3563
        %v3596 = vpack.c.bf16 %v3564, %v3564
        %v3597 = vpack.c.bf16 %v3565, %v3565
        %v3598 = vpack.c.bf16 %v3566, %v3566
        %v3599 = vld [vmem:[%s3534 + $0x1] sm:$0xff]
        %v3600 = vld [vmem:[%s3534 + $0x9] sm:$0xff]
        %v3601 = vld [vmem:[%s3534 + $0x19] sm:$0xff]
        %v3602 = vld [vmem:[%s3534 + $0x21] sm:$0xff]
        %v3603 = vld [vmem:[%s3534 + $0x31] sm:$0xff]
        %v3604 = vld [vmem:[%s3534 + $0x39] sm:$0xff]
        %v3605 = vld [vmem:[%s3534 + $0x49] sm:$0xff]
        %v3606 = vld [vmem:[%s3534 + $0x51] sm:$0xff]
        %v3607 = vld [vmem:[%s3534 + $0x61] sm:$0xff]
        %v3608 = vld [vmem:[%s3534 + $0x69] sm:$0xff]
        %v3609 = vld [vmem:[%s3534 + $0x79] sm:$0xff]
        %v3610 = vld [vmem:[%s3534 + $0x81] sm:$0xff]
        %v3611 = vld [vmem:[%s3534 + $0x91] sm:$0xff]
        %v3612 = vld [vmem:[%s3534 + $0x99] sm:$0xff]
        %v3613 = vld [vmem:[%s3534 + $0xa9] sm:$0xff]
        %v3614 = vld [vmem:[%s3534 + $0xb1] sm:$0xff]
        %v3615 = vld [vmem:[%s3534 + $0xc1] sm:$0xff]
        %v3616 = vld [vmem:[%s3534 + $0xc9] sm:$0xff]
        %v3617 = vld [vmem:[%s3534 + $0xd9] sm:$0xff]
        %v3618 = vld [vmem:[%s3534 + $0xe1] sm:$0xff]
        %v3619 = vld [vmem:[%s3534 + $0xf1] sm:$0xff]
        %v3620 = vld [vmem:[%s3534 + $0xf9] sm:$0xff]
        %v3621 = vld [vmem:[%s3534 + $0x109] sm:$0xff]
        %v3622 = vld [vmem:[%s3534 + $0x111] sm:$0xff]
        %v3623 = vld [vmem:[%s3534 + $0x121] sm:$0xff]
        %v3624 = vld [vmem:[%s3534 + $0x129] sm:$0xff]
        %v3625 = vld [vmem:[%s3534 + $0x139] sm:$0xff]
        %v3626 = vld [vmem:[%s3534 + $0x141] sm:$0xff]
        %v3627 = vld [vmem:[%s3534 + $0x151] sm:$0xff]
        %v3628 = vld [vmem:[%s3534 + $0x159] sm:$0xff]
        %v3629 = vld [vmem:[%s3534 + $0x169] sm:$0xff]
        %v3630 = vld [vmem:[%s3534 + $0x171] sm:$0xff]
        %v3631 = vpack.c.bf16 %v3599, %v3599
        %v3632 = vpack.c.bf16 %v3600, %v3600
        %v3633 = vpack.c.bf16 %v3601, %v3601
        %v3634 = vpack.c.bf16 %v3602, %v3602
        %v3635 = vpack.c.bf16 %v3603, %v3603
        %v3636 = vpack.c.bf16 %v3604, %v3604
        %v3637 = vpack.c.bf16 %v3605, %v3605
        %v3638 = vpack.c.bf16 %v3606, %v3606
        %v3639 = vpack.c.bf16 %v3607, %v3607
        %v3640 = vpack.c.bf16 %v3608, %v3608
        %v3641 = vpack.c.bf16 %v3609, %v3609
        %v3642 = vpack.c.bf16 %v3610, %v3610
        %v3643 = vpack.c.bf16 %v3611, %v3611
        %v3644 = vpack.c.bf16 %v3612, %v3612
        %v3645 = vpack.c.bf16 %v3613, %v3613
        %v3646 = vpack.c.bf16 %v3614, %v3614
        %v3647 = vpack.c.bf16 %v3615, %v3615
        %v3648 = vpack.c.bf16 %v3616, %v3616
        %v3649 = vpack.c.bf16 %v3617, %v3617
        %v3650 = vpack.c.bf16 %v3618, %v3618
        %v3651 = vpack.c.bf16 %v3619, %v3619
        %v3652 = vpack.c.bf16 %v3620, %v3620
        %v3653 = vpack.c.bf16 %v3621, %v3621
        %v3654 = vpack.c.bf16 %v3622, %v3622
        %v3655 = vpack.c.bf16 %v3623, %v3623
        %v3656 = vpack.c.bf16 %v3624, %v3624
        %v3657 = vpack.c.bf16 %v3625, %v3625
        %v3658 = vpack.c.bf16 %v3626, %v3626
        %v3659 = vpack.c.bf16 %v3627, %v3627
        %v3660 = vpack.c.bf16 %v3628, %v3628
        %v3661 = vpack.c.bf16 %v3629, %v3629
        %v3662 = vpack.c.bf16 %v3630, %v3630
        %v3663 = vld [vmem:[%s3534 + $0x2] sm:$0xff]
        %v3664 = vld [vmem:[%s3534 + $0xa] sm:$0xff]
        %v3665 = vld [vmem:[%s3534 + $0x1a] sm:$0xff]
        %v3666 = vld [vmem:[%s3534 + $0x22] sm:$0xff]
        %v3667 = vld [vmem:[%s3534 + $0x32] sm:$0xff]
        %v3668 = vld [vmem:[%s3534 + $0x3a] sm:$0xff]
        %v3669 = vld [vmem:[%s3534 + $0x4a] sm:$0xff]
        %v3670 = vld [vmem:[%s3534 + $0x52] sm:$0xff]
        %v3671 = vld [vmem:[%s3534 + $0x62] sm:$0xff]
        %v3672 = vld [vmem:[%s3534 + $0x6a] sm:$0xff]
        %v3673 = vld [vmem:[%s3534 + $0x7a] sm:$0xff]
        %v3674 = vld [vmem:[%s3534 + $0x82] sm:$0xff]
        %v3675 = vld [vmem:[%s3534 + $0x92] sm:$0xff]
        %v3676 = vld [vmem:[%s3534 + $0x9a] sm:$0xff]
        %v3677 = vld [vmem:[%s3534 + $0xaa] sm:$0xff]
        %v3678 = vld [vmem:[%s3534 + $0xb2] sm:$0xff]
        %v3679 = vld [vmem:[%s3534 + $0xc2] sm:$0xff]
        %v3680 = vld [vmem:[%s3534 + $0xca] sm:$0xff]
        %v3681 = vld [vmem:[%s3534 + $0xda] sm:$0xff]
        %v3682 = vld [vmem:[%s3534 + $0xe2] sm:$0xff]
        %v3683 = vld [vmem:[%s3534 + $0xf2] sm:$0xff]
        %v3684 = vld [vmem:[%s3534 + $0xfa] sm:$0xff]
        %v3685 = vld [vmem:[%s3534 + $0x10a] sm:$0xff]
        %v3686 = vld [vmem:[%s3534 + $0x112] sm:$0xff]
        %v3687 = vld [vmem:[%s3534 + $0x122] sm:$0xff]
        %v3688 = vld [vmem:[%s3534 + $0x12a] sm:$0xff]
        %v3689 = vld [vmem:[%s3534 + $0x13a] sm:$0xff]
        %v3690 = vld [vmem:[%s3534 + $0x142] sm:$0xff]
        %v3691 = vld [vmem:[%s3534 + $0x152] sm:$0xff]
        %v3692 = vld [vmem:[%s3534 + $0x15a] sm:$0xff]
        %v3693 = vld [vmem:[%s3534 + $0x16a] sm:$0xff]
        %v3694 = vld [vmem:[%s3534 + $0x172] sm:$0xff]
        %v3695 = vpack.c.bf16 %v3663, %v3663
        %v3696 = vpack.c.bf16 %v3664, %v3664
        %v3697 = vpack.c.bf16 %v3665, %v3665
        %v3698 = vpack.c.bf16 %v3666, %v3666
        %v3699 = vpack.c.bf16 %v3667, %v3667
        %v3700 = vpack.c.bf16 %v3668, %v3668
        %v3701 = vpack.c.bf16 %v3669, %v3669
        %v3702 = vpack.c.bf16 %v3670, %v3670
        %v3703 = vpack.c.bf16 %v3671, %v3671
        %v3704 = vpack.c.bf16 %v3672, %v3672
        %v3705 = vpack.c.bf16 %v3673, %v3673
        %v3706 = vpack.c.bf16 %v3674, %v3674
        %v3707 = vpack.c.bf16 %v3675, %v3675
        %v3708 = vpack.c.bf16 %v3676, %v3676
        %v3709 = vpack.c.bf16 %v3677, %v3677
        %v3710 = vpack.c.bf16 %v3678, %v3678
        %v3711 = vpack.c.bf16 %v3679, %v3679
        %v3712 = vpack.c.bf16 %v3680, %v3680
        %v3713 = vpack.c.bf16 %v3681, %v3681
        %v3714 = vpack.c.bf16 %v3682, %v3682
        %v3715 = vpack.c.bf16 %v3683, %v3683
        %v3716 = vpack.c.bf16 %v3684, %v3684
        %v3717 = vpack.c.bf16 %v3685, %v3685
        %v3718 = vpack.c.bf16 %v3686, %v3686
        %v3719 = vpack.c.bf16 %v3687, %v3687
        %v3720 = vpack.c.bf16 %v3688, %v3688
        %v3721 = vpack.c.bf16 %v3689, %v3689
        %v3722 = vpack.c.bf16 %v3690, %v3690
        %v3723 = vpack.c.bf16 %v3691, %v3691
        %v3724 = vpack.c.bf16 %v3692, %v3692
        %v3725 = vpack.c.bf16 %v3693, %v3693
        %v3726 = vpack.c.bf16 %v3694, %v3694
        %v3759 = vunpack.c.l.b16 %v3182
        %v3760 = vunpack.c.l.b16 %v3183
        %v3761 = vunpack.c.l.b16 %v3184
        %v3762 = vunpack.c.l.b16 %v3185
        %v3763 = vunpack.c.l.b16 %v3186
        %v3764 = vunpack.c.l.b16 %v3187
        %v3765 = vunpack.c.l.b16 %v3188
        %v3766 = vunpack.c.l.b16 %v3189
        %v3767 = vunpack.c.l.b16 %v3190
        %v3768 = vunpack.c.l.b16 %v3191
        %v3769 = vunpack.c.l.b16 %v3192
        %v3770 = vunpack.c.l.b16 %v3193
        %v3771 = vunpack.c.l.b16 %v3194
        %v3772 = vunpack.c.l.b16 %v3195
        %v3773 = vunpack.c.l.b16 %v3196
        %v3774 = vunpack.c.l.b16 %v3197
        %v3775 = vunpack.c.l.b16 %v3198
        %v3776 = vunpack.c.l.b16 %v3199
        %v3777 = vunpack.c.l.b16 %v3200
        %v3778 = vunpack.c.l.b16 %v3201
        %v3779 = vunpack.c.l.b16 %v3202
        %v3780 = vunpack.c.l.b16 %v3203
        %v3781 = vunpack.c.l.b16 %v3204
        %v3782 = vunpack.c.l.b16 %v3205
        %v3783 = vunpack.c.l.b16 %v3206
        %v3784 = vunpack.c.l.b16 %v3207
        %v3785 = vunpack.c.l.b16 %v3208
        %v3786 = vunpack.c.l.b16 %v3209
        %v3787 = vunpack.c.l.b16 %v3210
        %v3788 = vunpack.c.l.b16 %v3211
        %v3789 = vunpack.c.l.b16 %v3212
        %v3790 = vunpack.c.l.b16 %v3213
        %v3791 = vpack.c.b16 %v3760, %v3759
        %v3792 = vpack.c.b16 %v3762, %v3761
        %v3793 = vpack.c.b16 %v3764, %v3763
        %v3794 = vpack.c.b16 %v3766, %v3765
        %v3795 = vpack.c.b16 %v3768, %v3767
        %v3796 = vpack.c.b16 %v3770, %v3769
        %v3797 = vpack.c.b16 %v3772, %v3771
        %v3798 = vpack.c.b16 %v3774, %v3773
        %v3799 = vpack.c.b16 %v3776, %v3775
        %v3800 = vpack.c.b16 %v3778, %v3777
        %v3801 = vpack.c.b16 %v3780, %v3779
        %v3802 = vpack.c.b16 %v3782, %v3781
        %v3803 = vpack.c.b16 %v3784, %v3783
        %v3804 = vpack.c.b16 %v3786, %v3785
        %v3805 = vpack.c.b16 %v3788, %v3787
        %v3806 = vpack.c.b16 %v3790, %v3789
        %v3855 = vunpack.c.l.b16 %v3246
        %v3856 = vunpack.c.l.b16 %v3247
        %v3857 = vunpack.c.l.b16 %v3248
        %v3858 = vunpack.c.l.b16 %v3249
        %v3859 = vunpack.c.l.b16 %v3250
        %v3860 = vunpack.c.l.b16 %v3251
        %v3861 = vunpack.c.l.b16 %v3252
        %v3862 = vunpack.c.l.b16 %v3253
        %v3863 = vunpack.c.l.b16 %v3254
        %v3864 = vunpack.c.l.b16 %v3255
        %v3865 = vunpack.c.l.b16 %v3256
        %v3866 = vunpack.c.l.b16 %v3257
        %v3867 = vunpack.c.l.b16 %v3258
        %v3868 = vunpack.c.l.b16 %v3259
        %v3869 = vunpack.c.l.b16 %v3260
        %v3870 = vunpack.c.l.b16 %v3261
        %v3871 = vunpack.c.l.b16 %v3262
        %v3872 = vunpack.c.l.b16 %v3263
        %v3873 = vunpack.c.l.b16 %v3264
        %v3874 = vunpack.c.l.b16 %v3265
        %v3875 = vunpack.c.l.b16 %v3266
        %v3876 = vunpack.c.l.b16 %v3267
        %v3877 = vunpack.c.l.b16 %v3268
        %v3878 = vunpack.c.l.b16 %v3269
        %v3879 = vunpack.c.l.b16 %v3270
        %v3880 = vunpack.c.l.b16 %v3271
        %v3881 = vunpack.c.l.b16 %v3272
        %v3882 = vunpack.c.l.b16 %v3273
        %v3883 = vunpack.c.l.b16 %v3274
        %v3884 = vunpack.c.l.b16 %v3275
        %v3885 = vunpack.c.l.b16 %v3276
        %v3886 = vunpack.c.l.b16 %v3277
        %v3887 = vpack.c.b16 %v3856, %v3855
        %v3888 = vpack.c.b16 %v3858, %v3857
        %v3889 = vpack.c.b16 %v3860, %v3859
        %v3890 = vpack.c.b16 %v3862, %v3861
        %v3891 = vpack.c.b16 %v3864, %v3863
        %v3892 = vpack.c.b16 %v3866, %v3865
        %v3893 = vpack.c.b16 %v3868, %v3867
        %v3894 = vpack.c.b16 %v3870, %v3869
        %v3895 = vpack.c.b16 %v3872, %v3871
        %v3896 = vpack.c.b16 %v3874, %v3873
        %v3897 = vpack.c.b16 %v3876, %v3875
        %v3898 = vpack.c.b16 %v3878, %v3877
        %v3899 = vpack.c.b16 %v3880, %v3879
        %v3900 = vpack.c.b16 %v3882, %v3881
        %v3901 = vpack.c.b16 %v3884, %v3883
        %v3902 = vpack.c.b16 %v3886, %v3885
        %v3951 = vunpack.c.l.b16 %v3310
        %v3952 = vunpack.c.l.b16 %v3311
        %v3953 = vunpack.c.l.b16 %v3312
        %v3954 = vunpack.c.l.b16 %v3313
        %v3955 = vunpack.c.l.b16 %v3314
        %v3956 = vunpack.c.l.b16 %v3315
        %v3957 = vunpack.c.l.b16 %v3316
        %v3958 = vunpack.c.l.b16 %v3317
        %v3959 = vunpack.c.l.b16 %v3318
        %v3960 = vunpack.c.l.b16 %v3319
        %v3961 = vunpack.c.l.b16 %v3320
        %v3962 = vunpack.c.l.b16 %v3321
        %v3963 = vunpack.c.l.b16 %v3322
        %v3964 = vunpack.c.l.b16 %v3323
        %v3965 = vunpack.c.l.b16 %v3324
        %v3966 = vunpack.c.l.b16 %v3325
        %v3967 = vunpack.c.l.b16 %v3326
        %v3968 = vunpack.c.l.b16 %v3327
        %v3969 = vunpack.c.l.b16 %v3328
        %v3970 = vunpack.c.l.b16 %v3329
        %v3971 = vunpack.c.l.b16 %v3330
        %v3972 = vunpack.c.l.b16 %v3331
        %v3973 = vunpack.c.l.b16 %v3332
        %v3974 = vunpack.c.l.b16 %v3333
        %v3975 = vunpack.c.l.b16 %v3334
        %v3976 = vunpack.c.l.b16 %v3335
        %v3977 = vunpack.c.l.b16 %v3336
        %v3978 = vunpack.c.l.b16 %v3337
        %v3979 = vunpack.c.l.b16 %v3338
        %v3980 = vunpack.c.l.b16 %v3339
        %v3981 = vunpack.c.l.b16 %v3340
        %v3982 = vunpack.c.l.b16 %v3341
        %v3983 = vpack.c.b16 %v3952, %v3951
        %v3984 = vpack.c.b16 %v3954, %v3953
        %v3985 = vpack.c.b16 %v3956, %v3955
        %v3986 = vpack.c.b16 %v3958, %v3957
        %v3987 = vpack.c.b16 %v3960, %v3959
        %v3988 = vpack.c.b16 %v3962, %v3961
        %v3989 = vpack.c.b16 %v3964, %v3963
        %v3990 = vpack.c.b16 %v3966, %v3965
        %v3991 = vpack.c.b16 %v3968, %v3967
        %v3992 = vpack.c.b16 %v3970, %v3969
        %v3993 = vpack.c.b16 %v3972, %v3971
        %v3994 = vpack.c.b16 %v3974, %v3973
        %v3995 = vpack.c.b16 %v3976, %v3975
        %v3996 = vpack.c.b16 %v3978, %v3977
        %v3997 = vpack.c.b16 %v3980, %v3979
        %v3998 = vpack.c.b16 %v3982, %v3981
        %v4047 = vunpack.c.l.b16 %v3374
        %v4048 = vunpack.c.l.b16 %v3375
        %v4049 = vunpack.c.l.b16 %v3376
        %v4050 = vunpack.c.l.b16 %v3377
        %v4051 = vunpack.c.l.b16 %v3378
        %v4052 = vunpack.c.l.b16 %v3379
        %v4053 = vunpack.c.l.b16 %v3380
        %v4054 = vunpack.c.l.b16 %v3381
        %v4055 = vunpack.c.l.b16 %v3382
        %v4056 = vunpack.c.l.b16 %v3383
        %v4057 = vunpack.c.l.b16 %v3384
        %v4058 = vunpack.c.l.b16 %v3385
        %v4059 = vunpack.c.l.b16 %v3386
        %v4060 = vunpack.c.l.b16 %v3387
        %v4061 = vunpack.c.l.b16 %v3388
        %v4062 = vunpack.c.l.b16 %v3389
        %v4063 = vunpack.c.l.b16 %v3390
        %v4064 = vunpack.c.l.b16 %v3391
        %v4065 = vunpack.c.l.b16 %v3392
        %v4066 = vunpack.c.l.b16 %v3393
        %v4067 = vunpack.c.l.b16 %v3394
        %v4068 = vunpack.c.l.b16 %v3395
        %v4069 = vunpack.c.l.b16 %v3396
        %v4070 = vunpack.c.l.b16 %v3397
        %v4071 = vunpack.c.l.b16 %v3398
        %v4072 = vunpack.c.l.b16 %v3399
        %v4073 = vunpack.c.l.b16 %v3400
        %v4074 = vunpack.c.l.b16 %v3401
        %v4075 = vunpack.c.l.b16 %v3402
        %v4076 = vunpack.c.l.b16 %v3403
        %v4077 = vunpack.c.l.b16 %v3404
        %v4078 = vunpack.c.l.b16 %v3405
        %v4079 = vpack.c.b16 %v4048, %v4047
        %v4080 = vpack.c.b16 %v4050, %v4049
        %v4081 = vpack.c.b16 %v4052, %v4051
        %v4082 = vpack.c.b16 %v4054, %v4053
        %v4083 = vpack.c.b16 %v4056, %v4055
        %v4084 = vpack.c.b16 %v4058, %v4057
        %v4085 = vpack.c.b16 %v4060, %v4059
        %v4086 = vpack.c.b16 %v4062, %v4061
        %v4087 = vpack.c.b16 %v4064, %v4063
        %v4088 = vpack.c.b16 %v4066, %v4065
        %v4089 = vpack.c.b16 %v4068, %v4067
        %v4090 = vpack.c.b16 %v4070, %v4069
        %v4091 = vpack.c.b16 %v4072, %v4071
        %v4092 = vpack.c.b16 %v4074, %v4073
        %v4093 = vpack.c.b16 %v4076, %v4075
        %v4094 = vpack.c.b16 %v4078, %v4077
        %v4143 = vunpack.c.l.b16 %v3438
        %v4144 = vunpack.c.l.b16 %v3439
        %v4145 = vunpack.c.l.b16 %v3440
        %v4146 = vunpack.c.l.b16 %v3441
        %v4147 = vunpack.c.l.b16 %v3442
        %v4148 = vunpack.c.l.b16 %v3443
        %v4149 = vunpack.c.l.b16 %v3444
        %v4150 = vunpack.c.l.b16 %v3445
        %v4151 = vunpack.c.l.b16 %v3446
        %v4152 = vunpack.c.l.b16 %v3447
        %v4153 = vunpack.c.l.b16 %v3448
        %v4154 = vunpack.c.l.b16 %v3449
        %v4155 = vunpack.c.l.b16 %v3450
        %v4156 = vunpack.c.l.b16 %v3451
        %v4157 = vunpack.c.l.b16 %v3452
        %v4158 = vunpack.c.l.b16 %v3453
        %v4159 = vunpack.c.l.b16 %v3454
        %v4160 = vunpack.c.l.b16 %v3455
        %v4161 = vunpack.c.l.b16 %v3456
        %v4162 = vunpack.c.l.b16 %v3457
        %v4163 = vunpack.c.l.b16 %v3458
        %v4164 = vunpack.c.l.b16 %v3459
        %v4165 = vunpack.c.l.b16 %v3460
        %v4166 = vunpack.c.l.b16 %v3461
        %v4167 = vunpack.c.l.b16 %v3462
        %v4168 = vunpack.c.l.b16 %v3463
        %v4169 = vunpack.c.l.b16 %v3464
        %v4170 = vunpack.c.l.b16 %v3465
        %v4171 = vunpack.c.l.b16 %v3466
        %v4172 = vunpack.c.l.b16 %v3467
        %v4173 = vunpack.c.l.b16 %v3468
        %v4174 = vunpack.c.l.b16 %v3469
        %v4175 = vpack.c.b16 %v4144, %v4143
        %v4176 = vpack.c.b16 %v4146, %v4145
        %v4177 = vpack.c.b16 %v4148, %v4147
        %v4178 = vpack.c.b16 %v4150, %v4149
        %v4179 = vpack.c.b16 %v4152, %v4151
        %v4180 = vpack.c.b16 %v4154, %v4153
        %v4181 = vpack.c.b16 %v4156, %v4155
        %v4182 = vpack.c.b16 %v4158, %v4157
        %v4183 = vpack.c.b16 %v4160, %v4159
        %v4184 = vpack.c.b16 %v4162, %v4161
        %v4185 = vpack.c.b16 %v4164, %v4163
        %v4186 = vpack.c.b16 %v4166, %v4165
        %v4187 = vpack.c.b16 %v4168, %v4167
        %v4188 = vpack.c.b16 %v4170, %v4169
        %v4189 = vpack.c.b16 %v4172, %v4171
        %v4190 = vpack.c.b16 %v4174, %v4173
        %v4239 = vunpack.c.l.b16 %v3502
        %v4240 = vunpack.c.l.b16 %v3503
        %v4241 = vunpack.c.l.b16 %v3504
        %v4242 = vunpack.c.l.b16 %v3505
        %v4243 = vunpack.c.l.b16 %v3506
        %v4244 = vunpack.c.l.b16 %v3507
        %v4245 = vunpack.c.l.b16 %v3508
        %v4246 = vunpack.c.l.b16 %v3509
        %v4247 = vunpack.c.l.b16 %v3510
        %v4248 = vunpack.c.l.b16 %v3511
        %v4249 = vunpack.c.l.b16 %v3512
        %v4250 = vunpack.c.l.b16 %v3513
        %v4251 = vunpack.c.l.b16 %v3514
        %v4252 = vunpack.c.l.b16 %v3515
        %v4253 = vunpack.c.l.b16 %v3516
        %v4254 = vunpack.c.l.b16 %v3517
        %v4255 = vunpack.c.l.b16 %v3518
        %v4256 = vunpack.c.l.b16 %v3519
        %v4257 = vunpack.c.l.b16 %v3520
        %v4258 = vunpack.c.l.b16 %v3521
        %v4259 = vunpack.c.l.b16 %v3522
        %v4260 = vunpack.c.l.b16 %v3523
        %v4261 = vunpack.c.l.b16 %v3524
        %v4262 = vunpack.c.l.b16 %v3525
        %v4263 = vunpack.c.l.b16 %v3526
        %v4264 = vunpack.c.l.b16 %v3527
        %v4265 = vunpack.c.l.b16 %v3528
        %v4266 = vunpack.c.l.b16 %v3529
        %v4267 = vunpack.c.l.b16 %v3530
        %v4268 = vunpack.c.l.b16 %v3531
        %v4269 = vunpack.c.l.b16 %v3532
        %v4270 = vunpack.c.l.b16 %v3533
        %v4271 = vpack.c.b16 %v4240, %v4239
        %v4272 = vpack.c.b16 %v4242, %v4241
        %v4273 = vpack.c.b16 %v4244, %v4243
        %v4274 = vpack.c.b16 %v4246, %v4245
        %v4275 = vpack.c.b16 %v4248, %v4247
        %v4276 = vpack.c.b16 %v4250, %v4249
        %v4277 = vpack.c.b16 %v4252, %v4251
        %v4278 = vpack.c.b16 %v4254, %v4253
        %v4279 = vpack.c.b16 %v4256, %v4255
        %v4280 = vpack.c.b16 %v4258, %v4257
        %v4281 = vpack.c.b16 %v4260, %v4259
        %v4282 = vpack.c.b16 %v4262, %v4261
        %v4283 = vpack.c.b16 %v4264, %v4263
        %v4284 = vpack.c.b16 %v4266, %v4265
        %v4285 = vpack.c.b16 %v4268, %v4267
        %v4286 = vpack.c.b16 %v4270, %v4269
        %v4335 = vunpack.c.l.b16 %v3567
        %v4336 = vunpack.c.l.b16 %v3568
        %v4337 = vunpack.c.l.b16 %v3569
        %v4338 = vunpack.c.l.b16 %v3570
        %v4339 = vunpack.c.l.b16 %v3571
        %v4340 = vunpack.c.l.b16 %v3572
        %v4341 = vunpack.c.l.b16 %v3573
        %v4342 = vunpack.c.l.b16 %v3574
        %v4343 = vunpack.c.l.b16 %v3575
        %v4344 = vunpack.c.l.b16 %v3576
        %v4345 = vunpack.c.l.b16 %v3577
        %v4346 = vunpack.c.l.b16 %v3578
        %v4347 = vunpack.c.l.b16 %v3579
        %v4348 = vunpack.c.l.b16 %v3580
        %v4349 = vunpack.c.l.b16 %v3581
        %v4350 = vunpack.c.l.b16 %v3582
        %v4351 = vunpack.c.l.b16 %v3583
        %v4352 = vunpack.c.l.b16 %v3584
        %v4353 = vunpack.c.l.b16 %v3585
        %v4354 = vunpack.c.l.b16 %v3586
        %v4355 = vunpack.c.l.b16 %v3587
        %v4356 = vunpack.c.l.b16 %v3588
        %v4357 = vunpack.c.l.b16 %v3589
        %v4358 = vunpack.c.l.b16 %v3590
        %v4359 = vunpack.c.l.b16 %v3591
        %v4360 = vunpack.c.l.b16 %v3592
        %v4361 = vunpack.c.l.b16 %v3593
        %v4362 = vunpack.c.l.b16 %v3594
        %v4363 = vunpack.c.l.b16 %v3595
        %v4364 = vunpack.c.l.b16 %v3596
        %v4365 = vunpack.c.l.b16 %v3597
        %v4366 = vunpack.c.l.b16 %v3598
        %v4367 = vpack.c.b16 %v4336, %v4335
        %v4368 = vpack.c.b16 %v4338, %v4337
        %v4369 = vpack.c.b16 %v4340, %v4339
        %v4370 = vpack.c.b16 %v4342, %v4341
        %v4371 = vpack.c.b16 %v4344, %v4343
        %v4372 = vpack.c.b16 %v4346, %v4345
        %v4373 = vpack.c.b16 %v4348, %v4347
        %v4374 = vpack.c.b16 %v4350, %v4349
        %v4375 = vpack.c.b16 %v4352, %v4351
        %v4376 = vpack.c.b16 %v4354, %v4353
        %v4377 = vpack.c.b16 %v4356, %v4355
        %v4378 = vpack.c.b16 %v4358, %v4357
        %v4379 = vpack.c.b16 %v4360, %v4359
        %v4380 = vpack.c.b16 %v4362, %v4361
        %v4381 = vpack.c.b16 %v4364, %v4363
        %v4382 = vpack.c.b16 %v4366, %v4365
        %v4431 = vunpack.c.l.b16 %v3631
        %v4432 = vunpack.c.l.b16 %v3632
        %v4433 = vunpack.c.l.b16 %v3633
        %v4434 = vunpack.c.l.b16 %v3634
        %v4435 = vunpack.c.l.b16 %v3635
        %v4436 = vunpack.c.l.b16 %v3636
        %v4437 = vunpack.c.l.b16 %v3637
        %v4438 = vunpack.c.l.b16 %v3638
        %v4439 = vunpack.c.l.b16 %v3639
        %v4440 = vunpack.c.l.b16 %v3640
        %v4441 = vunpack.c.l.b16 %v3641
        %v4442 = vunpack.c.l.b16 %v3642
        %v4443 = vunpack.c.l.b16 %v3643
        %v4444 = vunpack.c.l.b16 %v3644
        %v4445 = vunpack.c.l.b16 %v3645
        %v4446 = vunpack.c.l.b16 %v3646
        %v4447 = vunpack.c.l.b16 %v3647
        %v4448 = vunpack.c.l.b16 %v3648
        %v4449 = vunpack.c.l.b16 %v3649
        %v4450 = vunpack.c.l.b16 %v3650
        %v4451 = vunpack.c.l.b16 %v3651
        %v4452 = vunpack.c.l.b16 %v3652
        %v4453 = vunpack.c.l.b16 %v3653
        %v4454 = vunpack.c.l.b16 %v3654
        %v4455 = vunpack.c.l.b16 %v3655
        %v4456 = vunpack.c.l.b16 %v3656
        %v4457 = vunpack.c.l.b16 %v3657
        %v4458 = vunpack.c.l.b16 %v3658
        %v4459 = vunpack.c.l.b16 %v3659
        %v4460 = vunpack.c.l.b16 %v3660
        %v4461 = vunpack.c.l.b16 %v3661
        %v4462 = vunpack.c.l.b16 %v3662
        %v4463 = vpack.c.b16 %v4432, %v4431
        %v4464 = vpack.c.b16 %v4434, %v4433
        %v4465 = vpack.c.b16 %v4436, %v4435
        %v4466 = vpack.c.b16 %v4438, %v4437
        %v4467 = vpack.c.b16 %v4440, %v4439
        %v4468 = vpack.c.b16 %v4442, %v4441
        %v4469 = vpack.c.b16 %v4444, %v4443
        %v4470 = vpack.c.b16 %v4446, %v4445
        %v4471 = vpack.c.b16 %v4448, %v4447
        %v4472 = vpack.c.b16 %v4450, %v4449
        %v4473 = vpack.c.b16 %v4452, %v4451
        %v4474 = vpack.c.b16 %v4454, %v4453
        %v4475 = vpack.c.b16 %v4456, %v4455
        %v4476 = vpack.c.b16 %v4458, %v4457
        %v4477 = vpack.c.b16 %v4460, %v4459
        %v4478 = vpack.c.b16 %v4462, %v4461
        %v4527 = vunpack.c.l.b16 %v3695
        %v4528 = vunpack.c.l.b16 %v3696
        %v4529 = vunpack.c.l.b16 %v3697
        %v4530 = vunpack.c.l.b16 %v3698
        %v4531 = vunpack.c.l.b16 %v3699
        %v4532 = vunpack.c.l.b16 %v3700
        %v4533 = vunpack.c.l.b16 %v3701
        %v4534 = vunpack.c.l.b16 %v3702
        %v4535 = vunpack.c.l.b16 %v3703
        %v4536 = vunpack.c.l.b16 %v3704
        %v4537 = vunpack.c.l.b16 %v3705
        %v4538 = vunpack.c.l.b16 %v3706
        %v4539 = vunpack.c.l.b16 %v3707
        %v4540 = vunpack.c.l.b16 %v3708
        %v4541 = vunpack.c.l.b16 %v3709
        %v4542 = vunpack.c.l.b16 %v3710
        %v4543 = vunpack.c.l.b16 %v3711
        %v4544 = vunpack.c.l.b16 %v3712
        %v4545 = vunpack.c.l.b16 %v3713
        %v4546 = vunpack.c.l.b16 %v3714
        %v4547 = vunpack.c.l.b16 %v3715
        %v4548 = vunpack.c.l.b16 %v3716
        %v4549 = vunpack.c.l.b16 %v3717
        %v4550 = vunpack.c.l.b16 %v3718
        %v4551 = vunpack.c.l.b16 %v3719
        %v4552 = vunpack.c.l.b16 %v3720
        %v4553 = vunpack.c.l.b16 %v3721
        %v4554 = vunpack.c.l.b16 %v3722
        %v4555 = vunpack.c.l.b16 %v3723
        %v4556 = vunpack.c.l.b16 %v3724
        %v4557 = vunpack.c.l.b16 %v3725
        %v4558 = vunpack.c.l.b16 %v3726
        %v4559 = vpack.c.b16 %v4528, %v4527
        %v4560 = vpack.c.b16 %v4530, %v4529
        %v4561 = vpack.c.b16 %v4532, %v4531
        %v4562 = vpack.c.b16 %v4534, %v4533
        %v4563 = vpack.c.b16 %v4536, %v4535
        %v4564 = vpack.c.b16 %v4538, %v4537
        %v4565 = vpack.c.b16 %v4540, %v4539
        %v4566 = vpack.c.b16 %v4542, %v4541
        %v4567 = vpack.c.b16 %v4544, %v4543
        %v4568 = vpack.c.b16 %v4546, %v4545
        %v4569 = vpack.c.b16 %v4548, %v4547
        %v4570 = vpack.c.b16 %v4550, %v4549
        %v4571 = vpack.c.b16 %v4552, %v4551
        %v4572 = vpack.c.b16 %v4554, %v4553
        %v4573 = vpack.c.b16 %v4556, %v4555
        %v4574 = vpack.c.b16 %v4558, %v4557
        %v4591 = vld [vmem:[%s3] sm:$0xf]
        %v4592 = vld [vmem:[%s3 + $0x4] sm:$0xf]
        %v4593 = vld [vmem:[%s3 + $0x8] sm:$0xf]
        %v4594 = vld [vmem:[%s3 + $0xc] sm:$0xf]
        %v4595 = vld [vmem:[%s3 + $0x10] sm:$0xf]
        %v4596 = vld [vmem:[%s3 + $0x14] sm:$0xf]
        %v4597 = vld [vmem:[%s3 + $0x18] sm:$0xf]
        %v4598 = vld [vmem:[%s3 + $0x1c] sm:$0xf]
        %v4599 = vld [vmem:[%s3 + $0x20] sm:$0xf]
        %v4600 = vld [vmem:[%s3 + $0x24] sm:$0xf]
        %v4601 = vld [vmem:[%s3 + $0x28] sm:$0xf]
        %v4602 = vld [vmem:[%s3 + $0x2c] sm:$0xf]
        %v4603 = vld [vmem:[%s3 + $0x30] sm:$0xf]
        %v4604 = vld [vmem:[%s3 + $0x34] sm:$0xf]
        %v4605 = vld [vmem:[%s3 + $0x38] sm:$0xf]
        %v4606 = vld [vmem:[%s3 + $0x3c] sm:$0xf]
        %v4607 = vld [vmem:[%s3 + $0x40] sm:$0xf]
        %v4608 = vld [vmem:[%s3 + $0x44] sm:$0xf]
        %v4609 = vld [vmem:[%s3 + $0x48] sm:$0xf]
        %v4610 = vld [vmem:[%s3 + $0x4c] sm:$0xf]
        %v4611 = vld [vmem:[%s3 + $0x50] sm:$0xf]
        %v4612 = vld [vmem:[%s3 + $0x54] sm:$0xf]
        %v4613 = vld [vmem:[%s3 + $0x58] sm:$0xf]
        %v4614 = vld [vmem:[%s3 + $0x5c] sm:$0xf]
        %v4615 = vld [vmem:[%s3 + $0x60] sm:$0xf]
        %v4616 = vld [vmem:[%s3 + $0x64] sm:$0xf]
        %v4617 = vld [vmem:[%s3 + $0x68] sm:$0xf]
        %v4618 = vld [vmem:[%s3 + $0x6c] sm:$0xf]
        %v4619 = vld [vmem:[%s3 + $0x70] sm:$0xf]
        %v4620 = vld [vmem:[%s3 + $0x74] sm:$0xf]
        %v4621 = vld [vmem:[%s3 + $0x78] sm:$0xf]
        %v4622 = vld [vmem:[%s3 + $0x7c] sm:$0xf]
        %v4623 = vld [vmem:[%s3 + $0x80] sm:$0xf]
        %v4624 = vld [vmem:[%s3 + $0x84] sm:$0xf]
        %v4625 = vld [vmem:[%s3 + $0x88] sm:$0xf]
        %v4626 = vld [vmem:[%s3 + $0x8c] sm:$0xf]
        %v4627 = vld [vmem:[%s3 + $0x90] sm:$0xf]
        %v4628 = vld [vmem:[%s3 + $0x94] sm:$0xf]
        %v4629 = vld [vmem:[%s3 + $0x98] sm:$0xf]
        %v4630 = vld [vmem:[%s3 + $0x9c] sm:$0xf]
        %v4631 = vld [vmem:[%s3 + $0xa0] sm:$0xf]
        %v4632 = vld [vmem:[%s3 + $0xa4] sm:$0xf]
        %v4633 = vld [vmem:[%s3 + $0xa8] sm:$0xf]
        %v4634 = vld [vmem:[%s3 + $0xac] sm:$0xf]
        %v4635 = vld [vmem:[%s3 + $0xb0] sm:$0xf]
        %v4636 = vld [vmem:[%s3 + $0xb4] sm:$0xf]
        %v4637 = vld [vmem:[%s3 + $0xb8] sm:$0xf]
        %v4638 = vld [vmem:[%s3 + $0xbc] sm:$0xf]
        %v4639 = vld [vmem:[%s3 + $0xc0] sm:$0xf]
        %v4640 = vld [vmem:[%s3 + $0xc4] sm:$0xf]
        %v4641 = vld [vmem:[%s3 + $0xc8] sm:$0xf]
        %v4642 = vld [vmem:[%s3 + $0xcc] sm:$0xf]
        %v4643 = vld [vmem:[%s3 + $0xd0] sm:$0xf]
        %v4644 = vld [vmem:[%s3 + $0xd4] sm:$0xf]
        %v4645 = vld [vmem:[%s3 + $0xd8] sm:$0xf]
        %v4646 = vld [vmem:[%s3 + $0xdc] sm:$0xf]
        %v4647 = vld [vmem:[%s3 + $0xe0] sm:$0xf]
        %v4648 = vld [vmem:[%s3 + $0xe4] sm:$0xf]
        %v4649 = vld [vmem:[%s3 + $0xe8] sm:$0xf]
        %v4650 = vld [vmem:[%s3 + $0xec] sm:$0xf]
        %v4651 = vld [vmem:[%s3 + $0xf0] sm:$0xf]
        %v4652 = vld [vmem:[%s3 + $0xf4] sm:$0xf]
        %v4653 = vld [vmem:[%s3 + $0xf8] sm:$0xf]
        %v4654 = vld [vmem:[%s3 + $0xfc] sm:$0xf]
        %v4655 = vld [vmem:[%s3 + $0x100] sm:$0xf]
        %v4656 = vld [vmem:[%s3 + $0x104] sm:$0xf]
        %v4657 = vld [vmem:[%s3 + $0x108] sm:$0xf]
        %v4658 = vld [vmem:[%s3 + $0x10c] sm:$0xf]
        %v4659 = vld [vmem:[%s3 + $0x110] sm:$0xf]
        %v4660 = vld [vmem:[%s3 + $0x114] sm:$0xf]
        %v4661 = vld [vmem:[%s3 + $0x118] sm:$0xf]
        %v4662 = vld [vmem:[%s3 + $0x11c] sm:$0xf]
        %v4663 = vld [vmem:[%s3 + $0x120] sm:$0xf]
        %v4664 = vld [vmem:[%s3 + $0x124] sm:$0xf]
        %v4665 = vld [vmem:[%s3 + $0x128] sm:$0xf]
        %v4666 = vld [vmem:[%s3 + $0x12c] sm:$0xf]
        %v4667 = vld [vmem:[%s3 + $0x130] sm:$0xf]
        %v4668 = vld [vmem:[%s3 + $0x134] sm:$0xf]
        %v4669 = vld [vmem:[%s3 + $0x138] sm:$0xf]
        %v4670 = vld [vmem:[%s3 + $0x13c] sm:$0xf]
        %v4671 = vld [vmem:[%s3 + $0x140] sm:$0xf]
        %v4672 = vld [vmem:[%s3 + $0x144] sm:$0xf]
        %v4673 = vld [vmem:[%s3 + $0x148] sm:$0xf]
        %v4674 = vld [vmem:[%s3 + $0x14c] sm:$0xf]
        %v4675 = vld [vmem:[%s3 + $0x150] sm:$0xf]
        %v4676 = vld [vmem:[%s3 + $0x154] sm:$0xf]
        %v4677 = vld [vmem:[%s3 + $0x158] sm:$0xf]
        %v4678 = vld [vmem:[%s3 + $0x15c] sm:$0xf]
        %v4679 = vld [vmem:[%s3 + $0x160] sm:$0xf]
        %v4680 = vld [vmem:[%s3 + $0x164] sm:$0xf]
        %v4681 = vld [vmem:[%s3 + $0x168] sm:$0xf]
        %v4682 = vld [vmem:[%s3 + $0x16c] sm:$0xf]
        %v4683 = vld [vmem:[%s3 + $0x170] sm:$0xf]
        %v4684 = vld [vmem:[%s3 + $0x174] sm:$0xf]
        %v4685 = vld [vmem:[%s3 + $0x178] sm:$0xf]
        %v4686 = vld [vmem:[%s3 + $0x17c] sm:$0xf]
        %v4687 = vld [vmem:[%s3 + $0x180] sm:$0xf]
        %v4688 = vld [vmem:[%s3 + $0x184] sm:$0xf]
        %v4689 = vld [vmem:[%s3 + $0x188] sm:$0xf]
        %v4690 = vld [vmem:[%s3 + $0x18c] sm:$0xf]
        %v4691 = vld [vmem:[%s3 + $0x190] sm:$0xf]
        %v4692 = vld [vmem:[%s3 + $0x194] sm:$0xf]
        %v4693 = vld [vmem:[%s3 + $0x198] sm:$0xf]
        %v4694 = vld [vmem:[%s3 + $0x19c] sm:$0xf]
        %v4695 = vld [vmem:[%s3 + $0x1a0] sm:$0xf]
        %v4696 = vld [vmem:[%s3 + $0x1a4] sm:$0xf]
        %v4697 = vld [vmem:[%s3 + $0x1a8] sm:$0xf]
        %v4698 = vld [vmem:[%s3 + $0x1ac] sm:$0xf]
        %v4699 = vld [vmem:[%s3 + $0x1b0] sm:$0xf]
        %v4700 = vld [vmem:[%s3 + $0x1b4] sm:$0xf]
        %v4701 = vld [vmem:[%s3 + $0x1b8] sm:$0xf]
        %v4702 = vld [vmem:[%s3 + $0x1bc] sm:$0xf]
        %v4703 = vld [vmem:[%s3 + $0x1c0] sm:$0xf]
        %v4704 = vld [vmem:[%s3 + $0x1c4] sm:$0xf]
        %v4705 = vld [vmem:[%s3 + $0x1c8] sm:$0xf]
        %v4706 = vld [vmem:[%s3 + $0x1cc] sm:$0xf]
        %v4707 = vld [vmem:[%s3 + $0x1d0] sm:$0xf]
        %v4708 = vld [vmem:[%s3 + $0x1d4] sm:$0xf]
        %v4709 = vld [vmem:[%s3 + $0x1d8] sm:$0xf]
        %v4710 = vld [vmem:[%s3 + $0x1dc] sm:$0xf]
        %v4711 = vld [vmem:[%s3 + $0x1e0] sm:$0xf]
        %v4712 = vld [vmem:[%s3 + $0x1e4] sm:$0xf]
        %v4713 = vld [vmem:[%s3 + $0x1e8] sm:$0xf]
        %v4714 = vld [vmem:[%s3 + $0x1ec] sm:$0xf]
        %v4715 = vld [vmem:[%s3 + $0x1f0] sm:$0xf]
        %v4716 = vld [vmem:[%s3 + $0x1f4] sm:$0xf]
        %v4717 = vld [vmem:[%s3 + $0x1f8] sm:$0xf]
        %v4718 = vld [vmem:[%s3 + $0x1fc] sm:$0xf]
        %v4719 = vld [vmem:[%s3 + $0x200] sm:$0xf]
        %v4720 = vld [vmem:[%s3 + $0x204] sm:$0xf]
        %v4721 = vld [vmem:[%s3 + $0x208] sm:$0xf]
        %v4722 = vld [vmem:[%s3 + $0x20c] sm:$0xf]
        %v4723 = vld [vmem:[%s3 + $0x210] sm:$0xf]
        %v4724 = vld [vmem:[%s3 + $0x214] sm:$0xf]
        %v4725 = vld [vmem:[%s3 + $0x218] sm:$0xf]
        %v4726 = vld [vmem:[%s3 + $0x21c] sm:$0xf]
        %v4727 = vld [vmem:[%s3 + $0x220] sm:$0xf]
        %v4728 = vld [vmem:[%s3 + $0x224] sm:$0xf]
        %v4729 = vld [vmem:[%s3 + $0x228] sm:$0xf]
        %v4730 = vld [vmem:[%s3 + $0x22c] sm:$0xf]
        %v4731 = vld [vmem:[%s3 + $0x230] sm:$0xf]
        %v4732 = vld [vmem:[%s3 + $0x234] sm:$0xf]
        %v4733 = vld [vmem:[%s3 + $0x238] sm:$0xf]
        %v4734 = vld [vmem:[%s3 + $0x23c] sm:$0xf]
        %v4735 = vld [vmem:[%s4] sm:$0x1]
        %v4737 = vperm.slane %v4735, 0
        %v4883 = vunpack.c.l.b16 %v4591
        %v4884 = vunpack.c.l.b16 %v4592
        %v4885 = vunpack.c.l.b16 %v4593
        %v4886 = vunpack.c.l.b16 %v4594
        %v4887 = vunpack.c.l.b16 %v4595
        %v4888 = vunpack.c.l.b16 %v4596
        %v4889 = vunpack.c.l.b16 %v4597
        %v4890 = vunpack.c.l.b16 %v4598
        %v4891 = vunpack.c.l.b16 %v4599
        %v4892 = vunpack.c.l.b16 %v4600
        %v4893 = vunpack.c.l.b16 %v4601
        %v4894 = vunpack.c.l.b16 %v4602
        %v4895 = vunpack.c.l.b16 %v4603
        %v4896 = vunpack.c.l.b16 %v4604
        %v4897 = vunpack.c.l.b16 %v4605
        %v4898 = vunpack.c.l.b16 %v4606
        %v4899 = vunpack.c.l.b16 %v4607
        %v4900 = vunpack.c.l.b16 %v4608
        %v4901 = vunpack.c.l.b16 %v4609
        %v4902 = vunpack.c.l.b16 %v4610
        %v4903 = vunpack.c.l.b16 %v4611
        %v4904 = vunpack.c.l.b16 %v4612
        %v4905 = vunpack.c.l.b16 %v4613
        %v4906 = vunpack.c.l.b16 %v4614
        %v4907 = vunpack.c.l.b16 %v4615
        %v4908 = vunpack.c.l.b16 %v4616
        %v4909 = vunpack.c.l.b16 %v4617
        %v4910 = vunpack.c.l.b16 %v4618
        %v4911 = vunpack.c.l.b16 %v4619
        %v4912 = vunpack.c.l.b16 %v4620
        %v4913 = vunpack.c.l.b16 %v4621
        %v4914 = vunpack.c.l.b16 %v4622
        %v4915 = vunpack.c.l.b16 %v4623
        %v4916 = vunpack.c.l.b16 %v4624
        %v4917 = vunpack.c.l.b16 %v4625
        %v4918 = vunpack.c.l.b16 %v4626
        %v4919 = vunpack.c.l.b16 %v4627
        %v4920 = vunpack.c.l.b16 %v4628
        %v4921 = vunpack.c.l.b16 %v4629
        %v4922 = vunpack.c.l.b16 %v4630
        %v4923 = vunpack.c.l.b16 %v4631
        %v4924 = vunpack.c.l.b16 %v4632
        %v4925 = vunpack.c.l.b16 %v4633
        %v4926 = vunpack.c.l.b16 %v4634
        %v4927 = vunpack.c.l.b16 %v4635
        %v4928 = vunpack.c.l.b16 %v4636
        %v4929 = vunpack.c.l.b16 %v4637
        %v4930 = vunpack.c.l.b16 %v4638
        %v4931 = vunpack.c.l.b16 %v4639
        %v4932 = vunpack.c.l.b16 %v4640
        %v4933 = vunpack.c.l.b16 %v4641
        %v4934 = vunpack.c.l.b16 %v4642
        %v4935 = vunpack.c.l.b16 %v4643
        %v4936 = vunpack.c.l.b16 %v4644
        %v4937 = vunpack.c.l.b16 %v4645
        %v4938 = vunpack.c.l.b16 %v4646
        %v4939 = vunpack.c.l.b16 %v4647
        %v4940 = vunpack.c.l.b16 %v4648
        %v4941 = vunpack.c.l.b16 %v4649
        %v4942 = vunpack.c.l.b16 %v4650
        %v4943 = vunpack.c.l.b16 %v4651
        %v4944 = vunpack.c.l.b16 %v4652
        %v4945 = vunpack.c.l.b16 %v4653
        %v4946 = vunpack.c.l.b16 %v4654
        %v4947 = vunpack.c.l.b16 %v4655
        %v4948 = vunpack.c.l.b16 %v4656
        %v4949 = vunpack.c.l.b16 %v4657
        %v4950 = vunpack.c.l.b16 %v4658
        %v4951 = vunpack.c.l.b16 %v4659
        %v4952 = vunpack.c.l.b16 %v4660
        %v4953 = vunpack.c.l.b16 %v4661
        %v4954 = vunpack.c.l.b16 %v4662
        %v4955 = vunpack.c.l.b16 %v4663
        %v4956 = vunpack.c.l.b16 %v4664
        %v4957 = vunpack.c.l.b16 %v4665
        %v4958 = vunpack.c.l.b16 %v4666
        %v4959 = vunpack.c.l.b16 %v4667
        %v4960 = vunpack.c.l.b16 %v4668
        %v4961 = vunpack.c.l.b16 %v4669
        %v4962 = vunpack.c.l.b16 %v4670
        %v4963 = vunpack.c.l.b16 %v4671
        %v4964 = vunpack.c.l.b16 %v4672
        %v4965 = vunpack.c.l.b16 %v4673
        %v4966 = vunpack.c.l.b16 %v4674
        %v4967 = vunpack.c.l.b16 %v4675
        %v4968 = vunpack.c.l.b16 %v4676
        %v4969 = vunpack.c.l.b16 %v4677
        %v4970 = vunpack.c.l.b16 %v4678
        %v4971 = vunpack.c.l.b16 %v4679
        %v4972 = vunpack.c.l.b16 %v4680
        %v4973 = vunpack.c.l.b16 %v4681
        %v4974 = vunpack.c.l.b16 %v4682
        %v4975 = vunpack.c.l.b16 %v4683
        %v4976 = vunpack.c.l.b16 %v4684
        %v4977 = vunpack.c.l.b16 %v4685
        %v4978 = vunpack.c.l.b16 %v4686
        %v4979 = vunpack.c.l.b16 %v4687
        %v4980 = vunpack.c.l.b16 %v4688
        %v4981 = vunpack.c.l.b16 %v4689
        %v4982 = vunpack.c.l.b16 %v4690
        %v4983 = vunpack.c.l.b16 %v4691
        %v4984 = vunpack.c.l.b16 %v4692
        %v4985 = vunpack.c.l.b16 %v4693
        %v4986 = vunpack.c.l.b16 %v4694
        %v4987 = vunpack.c.l.b16 %v4695
        %v4988 = vunpack.c.l.b16 %v4696
        %v4989 = vunpack.c.l.b16 %v4697
        %v4990 = vunpack.c.l.b16 %v4698
        %v4991 = vunpack.c.l.b16 %v4699
        %v4992 = vunpack.c.l.b16 %v4700
        %v4993 = vunpack.c.l.b16 %v4701
        %v4994 = vunpack.c.l.b16 %v4702
        %v4995 = vunpack.c.l.b16 %v4703
        %v4996 = vunpack.c.l.b16 %v4704
        %v4997 = vunpack.c.l.b16 %v4705
        %v4998 = vunpack.c.l.b16 %v4706
        %v4999 = vunpack.c.l.b16 %v4707
        %v5000 = vunpack.c.l.b16 %v4708
        %v5001 = vunpack.c.l.b16 %v4709
        %v5002 = vunpack.c.l.b16 %v4710
        %v5003 = vunpack.c.l.b16 %v4711
        %v5004 = vunpack.c.l.b16 %v4712
        %v5005 = vunpack.c.l.b16 %v4713
        %v5006 = vunpack.c.l.b16 %v4714
        %v5007 = vunpack.c.l.b16 %v4715
        %v5008 = vunpack.c.l.b16 %v4716
        %v5009 = vunpack.c.l.b16 %v4717
        %v5010 = vunpack.c.l.b16 %v4718
        %v5011 = vunpack.c.l.b16 %v4719
        %v5012 = vunpack.c.l.b16 %v4720
        %v5013 = vunpack.c.l.b16 %v4721
        %v5014 = vunpack.c.l.b16 %v4722
        %v5015 = vunpack.c.l.b16 %v4723
        %v5016 = vunpack.c.l.b16 %v4724
        %v5017 = vunpack.c.l.b16 %v4725
        %v5018 = vunpack.c.l.b16 %v4726
        %v5019 = vunpack.c.l.b16 %v4727
        %v5020 = vunpack.c.l.b16 %v4728
        %v5021 = vunpack.c.l.b16 %v4729
        %v5022 = vunpack.c.l.b16 %v4730
        %v5023 = vunpack.c.l.b16 %v4731
        %v5024 = vunpack.c.l.b16 %v4732
        %v5025 = vunpack.c.l.b16 %v4733
        %v5026 = vunpack.c.l.b16 %v4734
        %v5027 = vpack.c.b16 %v4884, %v4883
        %v5028 = vpack.c.b16 %v4886, %v4885
        %v5029 = vpack.c.b16 %v4888, %v4887
        %v5030 = vpack.c.b16 %v4890, %v4889
        %v5031 = vpack.c.b16 %v4892, %v4891
        %v5032 = vpack.c.b16 %v4894, %v4893
        %v5033 = vpack.c.b16 %v4896, %v4895
        %v5034 = vpack.c.b16 %v4898, %v4897
        %v5035 = vpack.c.b16 %v4900, %v4899
        %v5036 = vpack.c.b16 %v4902, %v4901
        %v5037 = vpack.c.b16 %v4904, %v4903
        %v5038 = vpack.c.b16 %v4906, %v4905
        %v5039 = vpack.c.b16 %v4908, %v4907
        %v5040 = vpack.c.b16 %v4910, %v4909
        %v5041 = vpack.c.b16 %v4912, %v4911
        %v5042 = vpack.c.b16 %v4914, %v4913
        %v5043 = vpack.c.b16 %v4916, %v4915
        %v5044 = vpack.c.b16 %v4918, %v4917
        %v5045 = vpack.c.b16 %v4920, %v4919
        %v5046 = vpack.c.b16 %v4922, %v4921
        %v5047 = vpack.c.b16 %v4924, %v4923
        %v5048 = vpack.c.b16 %v4926, %v4925
        %v5049 = vpack.c.b16 %v4928, %v4927
        %v5050 = vpack.c.b16 %v4930, %v4929
        %v5051 = vpack.c.b16 %v4932, %v4931
        %v5052 = vpack.c.b16 %v4934, %v4933
        %v5053 = vpack.c.b16 %v4936, %v4935
        %v5054 = vpack.c.b16 %v4938, %v4937
        %v5055 = vpack.c.b16 %v4940, %v4939
        %v5056 = vpack.c.b16 %v4942, %v4941
        %v5057 = vpack.c.b16 %v4944, %v4943
        %v5058 = vpack.c.b16 %v4946, %v4945
        %v5059 = vpack.c.b16 %v4948, %v4947
        %v5060 = vpack.c.b16 %v4950, %v4949
        %v5061 = vpack.c.b16 %v4952, %v4951
        %v5062 = vpack.c.b16 %v4954, %v4953
        %v5063 = vpack.c.b16 %v4956, %v4955
        %v5064 = vpack.c.b16 %v4958, %v4957
        %v5065 = vpack.c.b16 %v4960, %v4959
        %v5066 = vpack.c.b16 %v4962, %v4961
        %v5067 = vpack.c.b16 %v4964, %v4963
        %v5068 = vpack.c.b16 %v4966, %v4965
        %v5069 = vpack.c.b16 %v4968, %v4967
        %v5070 = vpack.c.b16 %v4970, %v4969
        %v5071 = vpack.c.b16 %v4972, %v4971
        %v5072 = vpack.c.b16 %v4974, %v4973
        %v5073 = vpack.c.b16 %v4976, %v4975
        %v5074 = vpack.c.b16 %v4978, %v4977
        %v5075 = vpack.c.b16 %v4980, %v4979
        %v5076 = vpack.c.b16 %v4982, %v4981
        %v5077 = vpack.c.b16 %v4984, %v4983
        %v5078 = vpack.c.b16 %v4986, %v4985
        %v5079 = vpack.c.b16 %v4988, %v4987
        %v5080 = vpack.c.b16 %v4990, %v4989
        %v5081 = vpack.c.b16 %v4992, %v4991
        %v5082 = vpack.c.b16 %v4994, %v4993
        %v5083 = vpack.c.b16 %v4996, %v4995
        %v5084 = vpack.c.b16 %v4998, %v4997
        %v5085 = vpack.c.b16 %v5000, %v4999
        %v5086 = vpack.c.b16 %v5002, %v5001
        %v5087 = vpack.c.b16 %v5004, %v5003
        %v5088 = vpack.c.b16 %v5006, %v5005
        %v5089 = vpack.c.b16 %v5008, %v5007
        %v5090 = vpack.c.b16 %v5010, %v5009
        %v5091 = vpack.c.b16 %v5012, %v5011
        %v5092 = vpack.c.b16 %v5014, %v5013
        %v5093 = vpack.c.b16 %v5016, %v5015
        %v5094 = vpack.c.b16 %v5018, %v5017
        %v5095 = vpack.c.b16 %v5020, %v5019
        %v5096 = vpack.c.b16 %v5022, %v5021
        %v5097 = vpack.c.b16 %v5024, %v5023
        %v5098 = vpack.c.b16 %v5026, %v5025
        %5171 = vmatpush.bf16.msra.mxu0 %v5034
        %5172 = vmatpush.bf16.msra.mxu0 %v5033
        %5173 = vmatpush.bf16.msra.mxu0 %v5032
        %5174 = vmatpush.bf16.msra.mxu0 %v5031
        %5175 = vmatpush.bf16.msra.mxu0 %v5030
        %5176 = vmatpush.bf16.msra.mxu0 %v5029
        %5177 = vmatpush.bf16.msra.mxu0 %v5028
        %5178 = vmatpush.bf16.msra.mxu0 %v5027
        %5179 = vmatmul.bf16.gmra.mxu0 %v3791
        %v5180 = vpop.f32.mrf.mxu0
        %v5181 = vadd.f32 %v4737, %v5180
        %v5182 = vpop.f32.mrf.mxu0
        %v5183 = vadd.f32 %v4737, %v5182
        %5184 = vmatmul.bf16.gmra.mxu0 %v3792
        %v5185 = vpop.f32.mrf.mxu0
        %v5186 = vadd.f32 %v4737, %v5185
        %v5187 = vpop.f32.mrf.mxu0
        %v5188 = vadd.f32 %v4737, %v5187
        %5189 = vmatmul.bf16.gmra.mxu0 %v3793
        %v5190 = vpop.f32.mrf.mxu0
        %v5191 = vadd.f32 %v4737, %v5190
        %v5192 = vpop.f32.mrf.mxu0
        %v5193 = vadd.f32 %v4737, %v5192
        %5194 = vmatmul.bf16.gmra.mxu0 %v3794
        %v5195 = vpop.f32.mrf.mxu0
        %v5196 = vadd.f32 %v4737, %v5195
        %v5197 = vpop.f32.mrf.mxu0
        %v5198 = vadd.f32 %v4737, %v5197
        %5199 = vmatmul.bf16.gmra.mxu0 %v3795
        %v5200 = vpop.f32.mrf.mxu0
        %v5201 = vadd.f32 %v4737, %v5200
        %v5202 = vpop.f32.mrf.mxu0
        %v5203 = vadd.f32 %v4737, %v5202
        %5204 = vmatmul.bf16.gmra.mxu0 %v3796
        %v5205 = vpop.f32.mrf.mxu0
        %v5206 = vadd.f32 %v4737, %v5205
        %v5207 = vpop.f32.mrf.mxu0
        %v5208 = vadd.f32 %v4737, %v5207
        %5209 = vmatmul.bf16.gmra.mxu0 %v3797
        %v5210 = vpop.f32.mrf.mxu0
        %v5211 = vadd.f32 %v4737, %v5210
        %v5212 = vpop.f32.mrf.mxu0
        %v5213 = vadd.f32 %v4737, %v5212
        %5214 = vmatmul.bf16.gmra.mxu0 %v3798
        %v5215 = vpop.f32.mrf.mxu0
        %v5216 = vadd.f32 %v4737, %v5215
        %v5217 = vpop.f32.mrf.mxu0
        %v5218 = vadd.f32 %v4737, %v5217
        %5219 = vmatmul.bf16.gmra.mxu0 %v3799
        %v5220 = vpop.f32.mrf.mxu0
        %v5221 = vadd.f32 %v4737, %v5220
        %v5222 = vpop.f32.mrf.mxu0
        %v5223 = vadd.f32 %v4737, %v5222
        %5224 = vmatmul.bf16.gmra.mxu0 %v3800
        %v5225 = vpop.f32.mrf.mxu0
        %v5226 = vadd.f32 %v4737, %v5225
        %v5227 = vpop.f32.mrf.mxu0
        %v5228 = vadd.f32 %v4737, %v5227
        %5229 = vmatmul.bf16.gmra.mxu0 %v3801
        %v5230 = vpop.f32.mrf.mxu0
        %v5231 = vadd.f32 %v4737, %v5230
        %v5232 = vpop.f32.mrf.mxu0
        %v5233 = vadd.f32 %v4737, %v5232
        %5234 = vmatmul.bf16.gmra.mxu0 %v3802
        %v5235 = vpop.f32.mrf.mxu0
        %v5236 = vadd.f32 %v4737, %v5235
        %v5237 = vpop.f32.mrf.mxu0
        %v5238 = vadd.f32 %v4737, %v5237
        %5239 = vmatmul.bf16.gmra.mxu0 %v3803
        %v5240 = vpop.f32.mrf.mxu0
        %v5241 = vadd.f32 %v4737, %v5240
        %v5242 = vpop.f32.mrf.mxu0
        %v5243 = vadd.f32 %v4737, %v5242
        %5244 = vmatmul.bf16.gmra.mxu0 %v3804
        %v5245 = vpop.f32.mrf.mxu0
        %v5246 = vadd.f32 %v4737, %v5245
        %v5247 = vpop.f32.mrf.mxu0
        %v5248 = vadd.f32 %v4737, %v5247
        %5249 = vmatmul.bf16.gmra.mxu0 %v3805
        %v5250 = vpop.f32.mrf.mxu0
        %v5251 = vadd.f32 %v4737, %v5250
        %v5252 = vpop.f32.mrf.mxu0
        %v5253 = vadd.f32 %v4737, %v5252
        %5254 = vmatmul.bf16.gmra.mxu0 %v3806
        %v5255 = vpop.f32.mrf.mxu0
        %v5256 = vadd.f32 %v4737, %v5255
        %v5257 = vpop.f32.mrf.mxu0
        %v5258 = vadd.f32 %v4737, %v5257
        %5259 = vdwg.mxu0
        %5260 = vmatpush.bf16.msra.mxu0 %v5042
        %5261 = vmatpush.bf16.msra.mxu0 %v5041
        %5262 = vmatpush.bf16.msra.mxu0 %v5040
        %5263 = vmatpush.bf16.msra.mxu0 %v5039
        %5264 = vmatpush.bf16.msra.mxu0 %v5038
        %5265 = vmatpush.bf16.msra.mxu0 %v5037
        %5266 = vmatpush.bf16.msra.mxu0 %v5036
        %5267 = vmatpush.bf16.msra.mxu0 %v5035
        %5268 = vmatmul.bf16.gmra.mxu0 %v3887
        %v5269 = vpop.f32.mrf.mxu0
        %v5270 = vadd.f32 %v5181, %v5269
        %v5271 = vpop.f32.mrf.mxu0
        %v5272 = vadd.f32 %v5183, %v5271
        %5273 = vmatmul.bf16.gmra.mxu0 %v3888
        %v5274 = vpop.f32.mrf.mxu0
        %v5275 = vadd.f32 %v5186, %v5274
        %v5276 = vpop.f32.mrf.mxu0
        %v5277 = vadd.f32 %v5188, %v5276
        %5278 = vmatmul.bf16.gmra.mxu0 %v3889
        %v5279 = vpop.f32.mrf.mxu0
        %v5280 = vadd.f32 %v5191, %v5279
        %v5281 = vpop.f32.mrf.mxu0
        %v5282 = vadd.f32 %v5193, %v5281
        %5283 = vmatmul.bf16.gmra.mxu0 %v3890
        %v5284 = vpop.f32.mrf.mxu0
        %v5285 = vadd.f32 %v5196, %v5284
        %v5286 = vpop.f32.mrf.mxu0
        %v5287 = vadd.f32 %v5198, %v5286
        %5288 = vmatmul.bf16.gmra.mxu0 %v3891
        %v5289 = vpop.f32.mrf.mxu0
        %v5290 = vadd.f32 %v5201, %v5289
        %v5291 = vpop.f32.mrf.mxu0
        %v5292 = vadd.f32 %v5203, %v5291
        %5293 = vmatmul.bf16.gmra.mxu0 %v3892
        %v5294 = vpop.f32.mrf.mxu0
        %v5295 = vadd.f32 %v5206, %v5294
        %v5296 = vpop.f32.mrf.mxu0
        %v5297 = vadd.f32 %v5208, %v5296
        %5298 = vmatmul.bf16.gmra.mxu0 %v3893
        %v5299 = vpop.f32.mrf.mxu0
        %v5300 = vadd.f32 %v5211, %v5299
        %v5301 = vpop.f32.mrf.mxu0
        %v5302 = vadd.f32 %v5213, %v5301
        %5303 = vmatmul.bf16.gmra.mxu0 %v3894
        %v5304 = vpop.f32.mrf.mxu0
        %v5305 = vadd.f32 %v5216, %v5304
        %v5306 = vpop.f32.mrf.mxu0
        %v5307 = vadd.f32 %v5218, %v5306
        %5308 = vmatmul.bf16.gmra.mxu0 %v3895
        %v5309 = vpop.f32.mrf.mxu0
        %v5310 = vadd.f32 %v5221, %v5309
        %v5311 = vpop.f32.mrf.mxu0
        %v5312 = vadd.f32 %v5223, %v5311
        %5313 = vmatmul.bf16.gmra.mxu0 %v3896
        %v5314 = vpop.f32.mrf.mxu0
        %v5315 = vadd.f32 %v5226, %v5314
        %v5316 = vpop.f32.mrf.mxu0
        %v5317 = vadd.f32 %v5228, %v5316
        %5318 = vmatmul.bf16.gmra.mxu0 %v3897
        %v5319 = vpop.f32.mrf.mxu0
        %v5320 = vadd.f32 %v5231, %v5319
        %v5321 = vpop.f32.mrf.mxu0
        %v5322 = vadd.f32 %v5233, %v5321
        %5323 = vmatmul.bf16.gmra.mxu0 %v3898
        %v5324 = vpop.f32.mrf.mxu0
        %v5325 = vadd.f32 %v5236, %v5324
        %v5326 = vpop.f32.mrf.mxu0
        %v5327 = vadd.f32 %v5238, %v5326
        %5328 = vmatmul.bf16.gmra.mxu0 %v3899
        %v5329 = vpop.f32.mrf.mxu0
        %v5330 = vadd.f32 %v5241, %v5329
        %v5331 = vpop.f32.mrf.mxu0
        %v5332 = vadd.f32 %v5243, %v5331
        %5333 = vmatmul.bf16.gmra.mxu0 %v3900
        %v5334 = vpop.f32.mrf.mxu0
        %v5335 = vadd.f32 %v5246, %v5334
        %v5336 = vpop.f32.mrf.mxu0
        %v5337 = vadd.f32 %v5248, %v5336
        %5338 = vmatmul.bf16.gmra.mxu0 %v3901
        %v5339 = vpop.f32.mrf.mxu0
        %v5340 = vadd.f32 %v5251, %v5339
        %v5341 = vpop.f32.mrf.mxu0
        %v5342 = vadd.f32 %v5253, %v5341
        %5343 = vmatmul.bf16.gmra.mxu0 %v3902
        %v5344 = vpop.f32.mrf.mxu0
        %v5345 = vadd.f32 %v5256, %v5344
        %v5346 = vpop.f32.mrf.mxu0
        %v5347 = vadd.f32 %v5258, %v5346
        %5348 = vdwg.mxu0
        %5349 = vmatpush.bf16.msra.mxu0 %v5050
        %5350 = vmatpush.bf16.msra.mxu0 %v5049
        %5351 = vmatpush.bf16.msra.mxu0 %v5048
        %5352 = vmatpush.bf16.msra.mxu0 %v5047
        %5353 = vmatpush.bf16.msra.mxu0 %v5046
        %5354 = vmatpush.bf16.msra.mxu0 %v5045
        %5355 = vmatpush.bf16.msra.mxu0 %v5044
        %5356 = vmatpush.bf16.msra.mxu0 %v5043
        %5357 = vmatmul.bf16.gmra.mxu0 %v3983
        %v5358 = vpop.f32.mrf.mxu0
        %v5359 = vadd.f32 %v5270, %v5358
        %v5360 = vpop.f32.mrf.mxu0
        %v5361 = vadd.f32 %v5272, %v5360
        %5362 = vmatmul.bf16.gmra.mxu0 %v3984
        %v5363 = vpop.f32.mrf.mxu0
        %v5364 = vadd.f32 %v5275, %v5363
        %v5365 = vpop.f32.mrf.mxu0
        %v5366 = vadd.f32 %v5277, %v5365
        %5367 = vmatmul.bf16.gmra.mxu0 %v3985
        %v5368 = vpop.f32.mrf.mxu0
        %v5369 = vadd.f32 %v5280, %v5368
        %v5370 = vpop.f32.mrf.mxu0
        %v5371 = vadd.f32 %v5282, %v5370
        %5372 = vmatmul.bf16.gmra.mxu0 %v3986
        %v5373 = vpop.f32.mrf.mxu0
        %v5374 = vadd.f32 %v5285, %v5373
        %v5375 = vpop.f32.mrf.mxu0
        %v5376 = vadd.f32 %v5287, %v5375
        %5377 = vmatmul.bf16.gmra.mxu0 %v3987
        %v5378 = vpop.f32.mrf.mxu0
        %v5379 = vadd.f32 %v5290, %v5378
        %v5380 = vpop.f32.mrf.mxu0
        %v5381 = vadd.f32 %v5292, %v5380
        %5382 = vmatmul.bf16.gmra.mxu0 %v3988
        %v5383 = vpop.f32.mrf.mxu0
        %v5384 = vadd.f32 %v5295, %v5383
        %v5385 = vpop.f32.mrf.mxu0
        %v5386 = vadd.f32 %v5297, %v5385
        %5387 = vmatmul.bf16.gmra.mxu0 %v3989
        %v5388 = vpop.f32.mrf.mxu0
        %v5389 = vadd.f32 %v5300, %v5388
        %v5390 = vpop.f32.mrf.mxu0
        %v5391 = vadd.f32 %v5302, %v5390
        %5392 = vmatmul.bf16.gmra.mxu0 %v3990
        %v5393 = vpop.f32.mrf.mxu0
        %v5394 = vadd.f32 %v5305, %v5393
        %v5395 = vpop.f32.mrf.mxu0
        %v5396 = vadd.f32 %v5307, %v5395
        %5397 = vmatmul.bf16.gmra.mxu0 %v3991
        %v5398 = vpop.f32.mrf.mxu0
        %v5399 = vadd.f32 %v5310, %v5398
        %v5400 = vpop.f32.mrf.mxu0
        %v5401 = vadd.f32 %v5312, %v5400
        %5402 = vmatmul.bf16.gmra.mxu0 %v3992
        %v5403 = vpop.f32.mrf.mxu0
        %v5404 = vadd.f32 %v5315, %v5403
        %v5405 = vpop.f32.mrf.mxu0
        %v5406 = vadd.f32 %v5317, %v5405
        %5407 = vmatmul.bf16.gmra.mxu0 %v3993
        %v5408 = vpop.f32.mrf.mxu0
        %v5409 = vadd.f32 %v5320, %v5408
        %v5410 = vpop.f32.mrf.mxu0
        %v5411 = vadd.f32 %v5322, %v5410
        %5412 = vmatmul.bf16.gmra.mxu0 %v3994
        %v5413 = vpop.f32.mrf.mxu0
        %v5414 = vadd.f32 %v5325, %v5413
        %v5415 = vpop.f32.mrf.mxu0
        %v5416 = vadd.f32 %v5327, %v5415
        %5417 = vmatmul.bf16.gmra.mxu0 %v3995
        %v5418 = vpop.f32.mrf.mxu0
        %v5419 = vadd.f32 %v5330, %v5418
        %v5420 = vpop.f32.mrf.mxu0
        %v5421 = vadd.f32 %v5332, %v5420
        %5422 = vmatmul.bf16.gmra.mxu0 %v3996
        %v5423 = vpop.f32.mrf.mxu0
        %v5424 = vadd.f32 %v5335, %v5423
        %v5425 = vpop.f32.mrf.mxu0
        %v5426 = vadd.f32 %v5337, %v5425
        %5427 = vmatmul.bf16.gmra.mxu0 %v3997
        %v5428 = vpop.f32.mrf.mxu0
        %v5429 = vadd.f32 %v5340, %v5428
        %v5430 = vpop.f32.mrf.mxu0
        %v5431 = vadd.f32 %v5342, %v5430
        %5432 = vmatmul.bf16.gmra.mxu0 %v3998
        %v5433 = vpop.f32.mrf.mxu0
        %v5434 = vadd.f32 %v5345, %v5433
        %v5435 = vpop.f32.mrf.mxu0
        %v5436 = vadd.f32 %v5347, %v5435
        %5437 = vdwg.mxu0
        %5438 = vmatpush.bf16.msra.mxu0 %v5058
        %5439 = vmatpush.bf16.msra.mxu0 %v5057
        %5440 = vmatpush.bf16.msra.mxu0 %v5056
        %5441 = vmatpush.bf16.msra.mxu0 %v5055
        %5442 = vmatpush.bf16.msra.mxu0 %v5054
        %5443 = vmatpush.bf16.msra.mxu0 %v5053
        %5444 = vmatpush.bf16.msra.mxu0 %v5052
        %5445 = vmatpush.bf16.msra.mxu0 %v5051
        %5446 = vmatmul.bf16.gmra.mxu0 %v4079
        %v5447 = vpop.f32.mrf.mxu0
        %v5448 = vadd.f32 %v5359, %v5447
        %v5449 = vpop.f32.mrf.mxu0
        %v5450 = vadd.f32 %v5361, %v5449
        %5451 = vmatmul.bf16.gmra.mxu0 %v4080
        %v5452 = vpop.f32.mrf.mxu0
        %v5453 = vadd.f32 %v5364, %v5452
        %v5454 = vpop.f32.mrf.mxu0
        %v5455 = vadd.f32 %v5366, %v5454
        %5456 = vmatmul.bf16.gmra.mxu0 %v4081
        %v5457 = vpop.f32.mrf.mxu0
        %v5458 = vadd.f32 %v5369, %v5457
        %v5459 = vpop.f32.mrf.mxu0
        %v5460 = vadd.f32 %v5371, %v5459
        %5461 = vmatmul.bf16.gmra.mxu0 %v4082
        %v5462 = vpop.f32.mrf.mxu0
        %v5463 = vadd.f32 %v5374, %v5462
        %v5464 = vpop.f32.mrf.mxu0
        %v5465 = vadd.f32 %v5376, %v5464
        %5466 = vmatmul.bf16.gmra.mxu0 %v4083
        %v5467 = vpop.f32.mrf.mxu0
        %v5468 = vadd.f32 %v5379, %v5467
        %v5469 = vpop.f32.mrf.mxu0
        %v5470 = vadd.f32 %v5381, %v5469
        %5471 = vmatmul.bf16.gmra.mxu0 %v4084
        %v5472 = vpop.f32.mrf.mxu0
        %v5473 = vadd.f32 %v5384, %v5472
        %v5474 = vpop.f32.mrf.mxu0
        %v5475 = vadd.f32 %v5386, %v5474
        %5476 = vmatmul.bf16.gmra.mxu0 %v4085
        %v5477 = vpop.f32.mrf.mxu0
        %v5478 = vadd.f32 %v5389, %v5477
        %v5479 = vpop.f32.mrf.mxu0
        %v5480 = vadd.f32 %v5391, %v5479
        %5481 = vmatmul.bf16.gmra.mxu0 %v4086
        %v5482 = vpop.f32.mrf.mxu0
        %v5483 = vadd.f32 %v5394, %v5482
        %v5484 = vpop.f32.mrf.mxu0
        %v5485 = vadd.f32 %v5396, %v5484
        %5486 = vmatmul.bf16.gmra.mxu0 %v4087
        %v5487 = vpop.f32.mrf.mxu0
        %v5488 = vadd.f32 %v5399, %v5487
        %v5489 = vpop.f32.mrf.mxu0
        %v5490 = vadd.f32 %v5401, %v5489
        %5491 = vmatmul.bf16.gmra.mxu0 %v4088
        %v5492 = vpop.f32.mrf.mxu0
        %v5493 = vadd.f32 %v5404, %v5492
        %v5494 = vpop.f32.mrf.mxu0
        %v5495 = vadd.f32 %v5406, %v5494
        %5496 = vmatmul.bf16.gmra.mxu0 %v4089
        %v5497 = vpop.f32.mrf.mxu0
        %v5498 = vadd.f32 %v5409, %v5497
        %v5499 = vpop.f32.mrf.mxu0
        %v5500 = vadd.f32 %v5411, %v5499
        %5501 = vmatmul.bf16.gmra.mxu0 %v4090
        %v5502 = vpop.f32.mrf.mxu0
        %v5503 = vadd.f32 %v5414, %v5502
        %v5504 = vpop.f32.mrf.mxu0
        %v5505 = vadd.f32 %v5416, %v5504
        %5506 = vmatmul.bf16.gmra.mxu0 %v4091
        %v5507 = vpop.f32.mrf.mxu0
        %v5508 = vadd.f32 %v5419, %v5507
        %v5509 = vpop.f32.mrf.mxu0
        %v5510 = vadd.f32 %v5421, %v5509
        %5511 = vmatmul.bf16.gmra.mxu0 %v4092
        %v5512 = vpop.f32.mrf.mxu0
        %v5513 = vadd.f32 %v5424, %v5512
        %v5514 = vpop.f32.mrf.mxu0
        %v5515 = vadd.f32 %v5426, %v5514
        %5516 = vmatmul.bf16.gmra.mxu0 %v4093
        %v5517 = vpop.f32.mrf.mxu0
        %v5518 = vadd.f32 %v5429, %v5517
        %v5519 = vpop.f32.mrf.mxu0
        %v5520 = vadd.f32 %v5431, %v5519
        %5521 = vmatmul.bf16.gmra.mxu0 %v4094
        %v5522 = vpop.f32.mrf.mxu0
        %v5523 = vadd.f32 %v5434, %v5522
        %v5524 = vpop.f32.mrf.mxu0
        %v5525 = vadd.f32 %v5436, %v5524
        %5526 = vdwg.mxu0
        %5527 = vmatpush.bf16.msra.mxu0 %v5066
        %5528 = vmatpush.bf16.msra.mxu0 %v5065
        %5529 = vmatpush.bf16.msra.mxu0 %v5064
        %5530 = vmatpush.bf16.msra.mxu0 %v5063
        %5531 = vmatpush.bf16.msra.mxu0 %v5062
        %5532 = vmatpush.bf16.msra.mxu0 %v5061
        %5533 = vmatpush.bf16.msra.mxu0 %v5060
        %5534 = vmatpush.bf16.msra.mxu0 %v5059
        %5535 = vmatmul.bf16.gmra.mxu0 %v4175
        %v5536 = vpop.f32.mrf.mxu0
        %v5537 = vadd.f32 %v5448, %v5536
        %v5538 = vpop.f32.mrf.mxu0
        %v5539 = vadd.f32 %v5450, %v5538
        %5540 = vmatmul.bf16.gmra.mxu0 %v4176
        %v5541 = vpop.f32.mrf.mxu0
        %v5542 = vadd.f32 %v5453, %v5541
        %v5543 = vpop.f32.mrf.mxu0
        %v5544 = vadd.f32 %v5455, %v5543
        %5545 = vmatmul.bf16.gmra.mxu0 %v4177
        %v5546 = vpop.f32.mrf.mxu0
        %v5547 = vadd.f32 %v5458, %v5546
        %v5548 = vpop.f32.mrf.mxu0
        %v5549 = vadd.f32 %v5460, %v5548
        %5550 = vmatmul.bf16.gmra.mxu0 %v4178
        %v5551 = vpop.f32.mrf.mxu0
        %v5552 = vadd.f32 %v5463, %v5551
        %v5553 = vpop.f32.mrf.mxu0
        %v5554 = vadd.f32 %v5465, %v5553
        %5555 = vmatmul.bf16.gmra.mxu0 %v4179
        %v5556 = vpop.f32.mrf.mxu0
        %v5557 = vadd.f32 %v5468, %v5556
        %v5558 = vpop.f32.mrf.mxu0
        %v5559 = vadd.f32 %v5470, %v5558
        %5560 = vmatmul.bf16.gmra.mxu0 %v4180
        %v5561 = vpop.f32.mrf.mxu0
        %v5562 = vadd.f32 %v5473, %v5561
        %v5563 = vpop.f32.mrf.mxu0
        %v5564 = vadd.f32 %v5475, %v5563
        %5565 = vmatmul.bf16.gmra.mxu0 %v4181
        %v5566 = vpop.f32.mrf.mxu0
        %v5567 = vadd.f32 %v5478, %v5566
        %v5568 = vpop.f32.mrf.mxu0
        %v5569 = vadd.f32 %v5480, %v5568
        %5570 = vmatmul.bf16.gmra.mxu0 %v4182
        %v5571 = vpop.f32.mrf.mxu0
        %v5572 = vadd.f32 %v5483, %v5571
        %v5573 = vpop.f32.mrf.mxu0
        %v5574 = vadd.f32 %v5485, %v5573
        %5575 = vmatmul.bf16.gmra.mxu0 %v4183
        %v5576 = vpop.f32.mrf.mxu0
        %v5577 = vadd.f32 %v5488, %v5576
        %v5578 = vpop.f32.mrf.mxu0
        %v5579 = vadd.f32 %v5490, %v5578
        %5580 = vmatmul.bf16.gmra.mxu0 %v4184
        %v5581 = vpop.f32.mrf.mxu0
        %v5582 = vadd.f32 %v5493, %v5581
        %v5583 = vpop.f32.mrf.mxu0
        %v5584 = vadd.f32 %v5495, %v5583
        %5585 = vmatmul.bf16.gmra.mxu0 %v4185
        %v5586 = vpop.f32.mrf.mxu0
        %v5587 = vadd.f32 %v5498, %v5586
        %v5588 = vpop.f32.mrf.mxu0
        %v5589 = vadd.f32 %v5500, %v5588
        %5590 = vmatmul.bf16.gmra.mxu0 %v4186
        %v5591 = vpop.f32.mrf.mxu0
        %v5592 = vadd.f32 %v5503, %v5591
        %v5593 = vpop.f32.mrf.mxu0
        %v5594 = vadd.f32 %v5505, %v5593
        %5595 = vmatmul.bf16.gmra.mxu0 %v4187
        %v5596 = vpop.f32.mrf.mxu0
        %v5597 = vadd.f32 %v5508, %v5596
        %v5598 = vpop.f32.mrf.mxu0
        %v5599 = vadd.f32 %v5510, %v5598
        %5600 = vmatmul.bf16.gmra.mxu0 %v4188
        %v5601 = vpop.f32.mrf.mxu0
        %v5602 = vadd.f32 %v5513, %v5601
        %v5603 = vpop.f32.mrf.mxu0
        %v5604 = vadd.f32 %v5515, %v5603
        %5605 = vmatmul.bf16.gmra.mxu0 %v4189
        %v5606 = vpop.f32.mrf.mxu0
        %v5607 = vadd.f32 %v5518, %v5606
        %v5608 = vpop.f32.mrf.mxu0
        %v5609 = vadd.f32 %v5520, %v5608
        %5610 = vmatmul.bf16.gmra.mxu0 %v4190
        %v5611 = vpop.f32.mrf.mxu0
        %v5612 = vadd.f32 %v5523, %v5611
        %v5613 = vpop.f32.mrf.mxu0
        %v5614 = vadd.f32 %v5525, %v5613
        %5615 = vdwg.mxu0
        %5616 = vmatpush.bf16.msra.mxu0 %v5074
        %5617 = vmatpush.bf16.msra.mxu0 %v5073
        %5618 = vmatpush.bf16.msra.mxu0 %v5072
        %5619 = vmatpush.bf16.msra.mxu0 %v5071
        %5620 = vmatpush.bf16.msra.mxu0 %v5070
        %5621 = vmatpush.bf16.msra.mxu0 %v5069
        %5622 = vmatpush.bf16.msra.mxu0 %v5068
        %5623 = vmatpush.bf16.msra.mxu0 %v5067
        %5624 = vmatmul.bf16.gmra.mxu0 %v4271
        %v5625 = vpop.f32.mrf.mxu0
        %v5626 = vadd.f32 %v5537, %v5625
        %v5627 = vpop.f32.mrf.mxu0
        %v5628 = vadd.f32 %v5539, %v5627
        %5629 = vmatmul.bf16.gmra.mxu0 %v4272
        %v5630 = vpop.f32.mrf.mxu0
        %v5631 = vadd.f32 %v5542, %v5630
        %v5632 = vpop.f32.mrf.mxu0
        %v5633 = vadd.f32 %v5544, %v5632
        %5634 = vmatmul.bf16.gmra.mxu0 %v4273
        %v5635 = vpop.f32.mrf.mxu0
        %v5636 = vadd.f32 %v5547, %v5635
        %v5637 = vpop.f32.mrf.mxu0
        %v5638 = vadd.f32 %v5549, %v5637
        %5639 = vmatmul.bf16.gmra.mxu0 %v4274
        %v5640 = vpop.f32.mrf.mxu0
        %v5641 = vadd.f32 %v5552, %v5640
        %v5642 = vpop.f32.mrf.mxu0
        %v5643 = vadd.f32 %v5554, %v5642
        %5644 = vmatmul.bf16.gmra.mxu0 %v4275
        %v5645 = vpop.f32.mrf.mxu0
        %v5646 = vadd.f32 %v5557, %v5645
        %v5647 = vpop.f32.mrf.mxu0
        %v5648 = vadd.f32 %v5559, %v5647
        %5649 = vmatmul.bf16.gmra.mxu0 %v4276
        %v5650 = vpop.f32.mrf.mxu0
        %v5651 = vadd.f32 %v5562, %v5650
        %v5652 = vpop.f32.mrf.mxu0
        %v5653 = vadd.f32 %v5564, %v5652
        %5654 = vmatmul.bf16.gmra.mxu0 %v4277
        %v5655 = vpop.f32.mrf.mxu0
        %v5656 = vadd.f32 %v5567, %v5655
        %v5657 = vpop.f32.mrf.mxu0
        %v5658 = vadd.f32 %v5569, %v5657
        %5659 = vmatmul.bf16.gmra.mxu0 %v4278
        %v5660 = vpop.f32.mrf.mxu0
        %v5661 = vadd.f32 %v5572, %v5660
        %v5662 = vpop.f32.mrf.mxu0
        %v5663 = vadd.f32 %v5574, %v5662
        %5664 = vmatmul.bf16.gmra.mxu0 %v4279
        %v5665 = vpop.f32.mrf.mxu0
        %v5666 = vadd.f32 %v5577, %v5665
        %v5667 = vpop.f32.mrf.mxu0
        %v5668 = vadd.f32 %v5579, %v5667
        %5669 = vmatmul.bf16.gmra.mxu0 %v4280
        %v5670 = vpop.f32.mrf.mxu0
        %v5671 = vadd.f32 %v5582, %v5670
        %v5672 = vpop.f32.mrf.mxu0
        %v5673 = vadd.f32 %v5584, %v5672
        %5674 = vmatmul.bf16.gmra.mxu0 %v4281
        %v5675 = vpop.f32.mrf.mxu0
        %v5676 = vadd.f32 %v5587, %v5675
        %v5677 = vpop.f32.mrf.mxu0
        %v5678 = vadd.f32 %v5589, %v5677
        %5679 = vmatmul.bf16.gmra.mxu0 %v4282
        %v5680 = vpop.f32.mrf.mxu0
        %v5681 = vadd.f32 %v5592, %v5680
        %v5682 = vpop.f32.mrf.mxu0
        %v5683 = vadd.f32 %v5594, %v5682
        %5684 = vmatmul.bf16.gmra.mxu0 %v4283
        %v5685 = vpop.f32.mrf.mxu0
        %v5686 = vadd.f32 %v5597, %v5685
        %v5687 = vpop.f32.mrf.mxu0
        %v5688 = vadd.f32 %v5599, %v5687
        %5689 = vmatmul.bf16.gmra.mxu0 %v4284
        %v5690 = vpop.f32.mrf.mxu0
        %v5691 = vadd.f32 %v5602, %v5690
        %v5692 = vpop.f32.mrf.mxu0
        %v5693 = vadd.f32 %v5604, %v5692
        %5694 = vmatmul.bf16.gmra.mxu0 %v4285
        %v5695 = vpop.f32.mrf.mxu0
        %v5696 = vadd.f32 %v5607, %v5695
        %v5697 = vpop.f32.mrf.mxu0
        %v5698 = vadd.f32 %v5609, %v5697
        %5699 = vmatmul.bf16.gmra.mxu0 %v4286
        %v5700 = vpop.f32.mrf.mxu0
        %v5701 = vadd.f32 %v5612, %v5700
        %v5702 = vpop.f32.mrf.mxu0
        %v5703 = vadd.f32 %v5614, %v5702
        %5704 = vdwg.mxu0
        %5705 = vmatpush.bf16.msra.mxu0 %v5082
        %5706 = vmatpush.bf16.msra.mxu0 %v5081
        %5707 = vmatpush.bf16.msra.mxu0 %v5080
        %5708 = vmatpush.bf16.msra.mxu0 %v5079
        %5709 = vmatpush.bf16.msra.mxu0 %v5078
        %5710 = vmatpush.bf16.msra.mxu0 %v5077
        %5711 = vmatpush.bf16.msra.mxu0 %v5076
        %5712 = vmatpush.bf16.msra.mxu0 %v5075
        %5713 = vmatmul.bf16.gmra.mxu0 %v4367
        %v5714 = vpop.f32.mrf.mxu0
        %v5715 = vadd.f32 %v5626, %v5714
        %v5716 = vpop.f32.mrf.mxu0
        %v5717 = vadd.f32 %v5628, %v5716
        %5718 = vmatmul.bf16.gmra.mxu0 %v4368
        %v5719 = vpop.f32.mrf.mxu0
        %v5720 = vadd.f32 %v5631, %v5719
        %v5721 = vpop.f32.mrf.mxu0
        %v5722 = vadd.f32 %v5633, %v5721
        %5723 = vmatmul.bf16.gmra.mxu0 %v4369
        %v5724 = vpop.f32.mrf.mxu0
        %v5725 = vadd.f32 %v5636, %v5724
        %v5726 = vpop.f32.mrf.mxu0
        %v5727 = vadd.f32 %v5638, %v5726
        %5728 = vmatmul.bf16.gmra.mxu0 %v4370
        %v5729 = vpop.f32.mrf.mxu0
        %v5730 = vadd.f32 %v5641, %v5729
        %v5731 = vpop.f32.mrf.mxu0
        %v5732 = vadd.f32 %v5643, %v5731
        %5733 = vmatmul.bf16.gmra.mxu0 %v4371
        %v5734 = vpop.f32.mrf.mxu0
        %v5735 = vadd.f32 %v5646, %v5734
        %v5736 = vpop.f32.mrf.mxu0
        %v5737 = vadd.f32 %v5648, %v5736
        %5738 = vmatmul.bf16.gmra.mxu0 %v4372
        %v5739 = vpop.f32.mrf.mxu0
        %v5740 = vadd.f32 %v5651, %v5739
        %v5741 = vpop.f32.mrf.mxu0
        %v5742 = vadd.f32 %v5653, %v5741
        %5743 = vmatmul.bf16.gmra.mxu0 %v4373
        %v5744 = vpop.f32.mrf.mxu0
        %v5745 = vadd.f32 %v5656, %v5744
        %v5746 = vpop.f32.mrf.mxu0
        %v5747 = vadd.f32 %v5658, %v5746
        %5748 = vmatmul.bf16.gmra.mxu0 %v4374
        %v5749 = vpop.f32.mrf.mxu0
        %v5750 = vadd.f32 %v5661, %v5749
        %v5751 = vpop.f32.mrf.mxu0
        %v5752 = vadd.f32 %v5663, %v5751
        %5753 = vmatmul.bf16.gmra.mxu0 %v4375
        %v5754 = vpop.f32.mrf.mxu0
        %v5755 = vadd.f32 %v5666, %v5754
        %v5756 = vpop.f32.mrf.mxu0
        %v5757 = vadd.f32 %v5668, %v5756
        %5758 = vmatmul.bf16.gmra.mxu0 %v4376
        %v5759 = vpop.f32.mrf.mxu0
        %v5760 = vadd.f32 %v5671, %v5759
        %v5761 = vpop.f32.mrf.mxu0
        %v5762 = vadd.f32 %v5673, %v5761
        %5763 = vmatmul.bf16.gmra.mxu0 %v4377
        %v5764 = vpop.f32.mrf.mxu0
        %v5765 = vadd.f32 %v5676, %v5764
        %v5766 = vpop.f32.mrf.mxu0
        %v5767 = vadd.f32 %v5678, %v5766
        %5768 = vmatmul.bf16.gmra.mxu0 %v4378
        %v5769 = vpop.f32.mrf.mxu0
        %v5770 = vadd.f32 %v5681, %v5769
        %v5771 = vpop.f32.mrf.mxu0
        %v5772 = vadd.f32 %v5683, %v5771
        %5773 = vmatmul.bf16.gmra.mxu0 %v4379
        %v5774 = vpop.f32.mrf.mxu0
        %v5775 = vadd.f32 %v5686, %v5774
        %v5776 = vpop.f32.mrf.mxu0
        %v5777 = vadd.f32 %v5688, %v5776
        %5778 = vmatmul.bf16.gmra.mxu0 %v4380
        %v5779 = vpop.f32.mrf.mxu0
        %v5780 = vadd.f32 %v5691, %v5779
        %v5781 = vpop.f32.mrf.mxu0
        %v5782 = vadd.f32 %v5693, %v5781
        %5783 = vmatmul.bf16.gmra.mxu0 %v4381
        %v5784 = vpop.f32.mrf.mxu0
        %v5785 = vadd.f32 %v5696, %v5784
        %v5786 = vpop.f32.mrf.mxu0
        %v5787 = vadd.f32 %v5698, %v5786
        %5788 = vmatmul.bf16.gmra.mxu0 %v4382
        %v5789 = vpop.f32.mrf.mxu0
        %v5790 = vadd.f32 %v5701, %v5789
        %v5791 = vpop.f32.mrf.mxu0
        %v5792 = vadd.f32 %v5703, %v5791
        %5793 = vdwg.mxu0
        %5794 = vmatpush.bf16.msra.mxu0 %v5090
        %5795 = vmatpush.bf16.msra.mxu0 %v5089
        %5796 = vmatpush.bf16.msra.mxu0 %v5088
        %5797 = vmatpush.bf16.msra.mxu0 %v5087
        %5798 = vmatpush.bf16.msra.mxu0 %v5086
        %5799 = vmatpush.bf16.msra.mxu0 %v5085
        %5800 = vmatpush.bf16.msra.mxu0 %v5084
        %5801 = vmatpush.bf16.msra.mxu0 %v5083
        %5802 = vmatmul.bf16.gmra.mxu0 %v4463
        %v5803 = vpop.f32.mrf.mxu0
        %v5804 = vadd.f32 %v5715, %v5803
        %v5805 = vpop.f32.mrf.mxu0
        %v5806 = vadd.f32 %v5717, %v5805
        %5807 = vmatmul.bf16.gmra.mxu0 %v4464
        %v5808 = vpop.f32.mrf.mxu0
        %v5809 = vadd.f32 %v5720, %v5808
        %v5810 = vpop.f32.mrf.mxu0
        %v5811 = vadd.f32 %v5722, %v5810
        %5812 = vmatmul.bf16.gmra.mxu0 %v4465
        %v5813 = vpop.f32.mrf.mxu0
        %v5814 = vadd.f32 %v5725, %v5813
        %v5815 = vpop.f32.mrf.mxu0
        %v5816 = vadd.f32 %v5727, %v5815
        %5817 = vmatmul.bf16.gmra.mxu0 %v4466
        %v5818 = vpop.f32.mrf.mxu0
        %v5819 = vadd.f32 %v5730, %v5818
        %v5820 = vpop.f32.mrf.mxu0
        %v5821 = vadd.f32 %v5732, %v5820
        %5822 = vmatmul.bf16.gmra.mxu0 %v4467
        %v5823 = vpop.f32.mrf.mxu0
        %v5824 = vadd.f32 %v5735, %v5823
        %v5825 = vpop.f32.mrf.mxu0
        %v5826 = vadd.f32 %v5737, %v5825
        %5827 = vmatmul.bf16.gmra.mxu0 %v4468
        %v5828 = vpop.f32.mrf.mxu0
        %v5829 = vadd.f32 %v5740, %v5828
        %v5830 = vpop.f32.mrf.mxu0
        %v5831 = vadd.f32 %v5742, %v5830
        %5832 = vmatmul.bf16.gmra.mxu0 %v4469
        %v5833 = vpop.f32.mrf.mxu0
        %v5834 = vadd.f32 %v5745, %v5833
        %v5835 = vpop.f32.mrf.mxu0
        %v5836 = vadd.f32 %v5747, %v5835
        %5837 = vmatmul.bf16.gmra.mxu0 %v4470
        %v5838 = vpop.f32.mrf.mxu0
        %v5839 = vadd.f32 %v5750, %v5838
        %v5840 = vpop.f32.mrf.mxu0
        %v5841 = vadd.f32 %v5752, %v5840
        %5842 = vmatmul.bf16.gmra.mxu0 %v4471
        %v5843 = vpop.f32.mrf.mxu0
        %v5844 = vadd.f32 %v5755, %v5843
        %v5845 = vpop.f32.mrf.mxu0
        %v5846 = vadd.f32 %v5757, %v5845
        %5847 = vmatmul.bf16.gmra.mxu0 %v4472
        %v5848 = vpop.f32.mrf.mxu0
        %v5849 = vadd.f32 %v5760, %v5848
        %v5850 = vpop.f32.mrf.mxu0
        %v5851 = vadd.f32 %v5762, %v5850
        %5852 = vmatmul.bf16.gmra.mxu0 %v4473
        %v5853 = vpop.f32.mrf.mxu0
        %v5854 = vadd.f32 %v5765, %v5853
        %v5855 = vpop.f32.mrf.mxu0
        %v5856 = vadd.f32 %v5767, %v5855
        %5857 = vmatmul.bf16.gmra.mxu0 %v4474
        %v5858 = vpop.f32.mrf.mxu0
        %v5859 = vadd.f32 %v5770, %v5858
        %v5860 = vpop.f32.mrf.mxu0
        %v5861 = vadd.f32 %v5772, %v5860
        %5862 = vmatmul.bf16.gmra.mxu0 %v4475
        %v5863 = vpop.f32.mrf.mxu0
        %v5864 = vadd.f32 %v5775, %v5863
        %v5865 = vpop.f32.mrf.mxu0
        %v5866 = vadd.f32 %v5777, %v5865
        %5867 = vmatmul.bf16.gmra.mxu0 %v4476
        %v5868 = vpop.f32.mrf.mxu0
        %v5869 = vadd.f32 %v5780, %v5868
        %v5870 = vpop.f32.mrf.mxu0
        %v5871 = vadd.f32 %v5782, %v5870
        %5872 = vmatmul.bf16.gmra.mxu0 %v4477
        %v5873 = vpop.f32.mrf.mxu0
        %v5874 = vadd.f32 %v5785, %v5873
        %v5875 = vpop.f32.mrf.mxu0
        %v5876 = vadd.f32 %v5787, %v5875
        %5877 = vmatmul.bf16.gmra.mxu0 %v4478
        %v5878 = vpop.f32.mrf.mxu0
        %v5879 = vadd.f32 %v5790, %v5878
        %v5880 = vpop.f32.mrf.mxu0
        %v5881 = vadd.f32 %v5792, %v5880
        %5882 = vdwg.mxu0
        %5883 = vmatpush.bf16.msra.mxu0 %v5098
        %5884 = vmatpush.bf16.msra.mxu0 %v5097
        %5885 = vmatpush.bf16.msra.mxu0 %v5096
        %5886 = vmatpush.bf16.msra.mxu0 %v5095
        %5887 = vmatpush.bf16.msra.mxu0 %v5094
        %5888 = vmatpush.bf16.msra.mxu0 %v5093
        %5889 = vmatpush.bf16.msra.mxu0 %v5092
        %5890 = vmatpush.bf16.msra.mxu0 %v5091
        %5891 = vmatmul.bf16.gmra.mxu0 %v4559
        %v5892 = vpop.f32.mrf.mxu0
        %v5893 = vadd.f32 %v5804, %v5892
        %v5894 = vpop.f32.mrf.mxu0
        %v5895 = vadd.f32 %v5806, %v5894
        %5896 = vmatmul.bf16.gmra.mxu0 %v4560
        %v5897 = vpop.f32.mrf.mxu0
        %v5898 = vadd.f32 %v5809, %v5897
        %v5899 = vpop.f32.mrf.mxu0
        %v5900 = vadd.f32 %v5811, %v5899
        %5901 = vmatmul.bf16.gmra.mxu0 %v4561
        %v5902 = vpop.f32.mrf.mxu0
        %v5903 = vadd.f32 %v5814, %v5902
        %v5904 = vpop.f32.mrf.mxu0
        %v5905 = vadd.f32 %v5816, %v5904
        %5906 = vmatmul.bf16.gmra.mxu0 %v4562
        %v5907 = vpop.f32.mrf.mxu0
        %v5908 = vadd.f32 %v5819, %v5907
        %v5909 = vpop.f32.mrf.mxu0
        %v5910 = vadd.f32 %v5821, %v5909
        %5911 = vmatmul.bf16.gmra.mxu0 %v4563
        %v5912 = vpop.f32.mrf.mxu0
        %v5913 = vadd.f32 %v5824, %v5912
        %v5914 = vpop.f32.mrf.mxu0
        %v5915 = vadd.f32 %v5826, %v5914
        %5916 = vmatmul.bf16.gmra.mxu0 %v4564
        %v5917 = vpop.f32.mrf.mxu0
        %v5918 = vadd.f32 %v5829, %v5917
        %v5919 = vpop.f32.mrf.mxu0
        %v5920 = vadd.f32 %v5831, %v5919
        %5921 = vmatmul.bf16.gmra.mxu0 %v4565
        %v5922 = vpop.f32.mrf.mxu0
        %v5923 = vadd.f32 %v5834, %v5922
        %v5924 = vpop.f32.mrf.mxu0
        %v5925 = vadd.f32 %v5836, %v5924
        %5926 = vmatmul.bf16.gmra.mxu0 %v4566
        %v5927 = vpop.f32.mrf.mxu0
        %v5928 = vadd.f32 %v5839, %v5927
        %v5929 = vpop.f32.mrf.mxu0
        %v5930 = vadd.f32 %v5841, %v5929
        %5931 = vmatmul.bf16.gmra.mxu0 %v4567
        %v5932 = vpop.f32.mrf.mxu0
        %v5933 = vadd.f32 %v5844, %v5932
        %v5934 = vpop.f32.mrf.mxu0
        %v5935 = vadd.f32 %v5846, %v5934
        %5936 = vmatmul.bf16.gmra.mxu0 %v4568
        %v5937 = vpop.f32.mrf.mxu0
        %v5938 = vadd.f32 %v5849, %v5937
        %v5939 = vpop.f32.mrf.mxu0
        %v5940 = vadd.f32 %v5851, %v5939
        %5941 = vmatmul.bf16.gmra.mxu0 %v4569
        %v5942 = vpop.f32.mrf.mxu0
        %v5943 = vadd.f32 %v5854, %v5942
        %v5944 = vpop.f32.mrf.mxu0
        %v5945 = vadd.f32 %v5856, %v5944
        %5946 = vmatmul.bf16.gmra.mxu0 %v4570
        %v5947 = vpop.f32.mrf.mxu0
        %v5948 = vadd.f32 %v5859, %v5947
        %v5949 = vpop.f32.mrf.mxu0
        %v5950 = vadd.f32 %v5861, %v5949
        %5951 = vmatmul.bf16.gmra.mxu0 %v4571
        %v5952 = vpop.f32.mrf.mxu0
        %v5953 = vadd.f32 %v5864, %v5952
        %v5954 = vpop.f32.mrf.mxu0
        %v5955 = vadd.f32 %v5866, %v5954
        %5956 = vmatmul.bf16.gmra.mxu0 %v4572
        %v5957 = vpop.f32.mrf.mxu0
        %v5958 = vadd.f32 %v5869, %v5957
        %v5959 = vpop.f32.mrf.mxu0
        %v5960 = vadd.f32 %v5871, %v5959
        %5961 = vmatmul.bf16.gmra.mxu0 %v4573
        %v5962 = vpop.f32.mrf.mxu0
        %v5963 = vadd.f32 %v5874, %v5962
        %v5964 = vpop.f32.mrf.mxu0
        %v5965 = vadd.f32 %v5876, %v5964
        %5966 = vmatmul.bf16.gmra.mxu0 %v4574
        %v5967 = vpop.f32.mrf.mxu0
        %v5968 = vadd.f32 %v5879, %v5967
        %v5969 = vpop.f32.mrf.mxu0
        %v5970 = vadd.f32 %v5881, %v5969
        %5971 = vdwg.mxu0
        %v5972 = vadd.f32 %v480, %v5893
        %v5973 = vadd.f32 %v481, %v5895
        %v5974 = vadd.f32 %v482, %v5898
        %v5975 = vadd.f32 %v483, %v5900
        %v5976 = vadd.f32 %v484, %v5903
        %v5977 = vadd.f32 %v485, %v5905
        %v5978 = vadd.f32 %v486, %v5908
        %v5979 = vadd.f32 %v487, %v5910
        %v5980 = vadd.f32 %v488, %v5913
        %v5981 = vadd.f32 %v489, %v5915
        %v5982 = vadd.f32 %v490, %v5918
        %v5983 = vadd.f32 %v491, %v5920
        %v5984 = vadd.f32 %v492, %v5923
        %v5985 = vadd.f32 %v493, %v5925
        %v5986 = vadd.f32 %v494, %v5928
        %v5987 = vadd.f32 %v495, %v5930
        %v5988 = vadd.f32 %v496, %v5933
        %v5989 = vadd.f32 %v497, %v5935
        %v5990 = vadd.f32 %v498, %v5938
        %v5991 = vadd.f32 %v499, %v5940
        %v5992 = vadd.f32 %v500, %v5943
        %v5993 = vadd.f32 %v501, %v5945
        %v5994 = vadd.f32 %v502, %v5948
        %v5995 = vadd.f32 %v503, %v5950
        %v5996 = vadd.f32 %v504, %v5953
        %v5997 = vadd.f32 %v505, %v5955
        %v5998 = vadd.f32 %v506, %v5958
        %v5999 = vadd.f32 %v507, %v5960
        %v6000 = vadd.f32 %v508, %v5963
        %v6001 = vadd.f32 %v509, %v5965
        %v6002 = vadd.f32 %v510, %v5968
        %v6003 = vadd.f32 %v511, %v5970
        %v6004 = vmax.f32 %v5972, 0.0
        %v6005 = vmax.f32 %v5973, 0.0
        %v6006 = vmax.f32 %v5974, 0.0
        %v6007 = vmax.f32 %v5975, 0.0
        %v6008 = vmax.f32 %v5976, 0.0
        %v6009 = vmax.f32 %v5977, 0.0
        %v6010 = vmax.f32 %v5978, 0.0
        %v6011 = vmax.f32 %v5979, 0.0
        %v6012 = vmax.f32 %v5980, 0.0
        %v6013 = vmax.f32 %v5981, 0.0
        %v6014 = vmax.f32 %v5982, 0.0
        %v6015 = vmax.f32 %v5983, 0.0
        %v6016 = vmax.f32 %v5984, 0.0
        %v6017 = vmax.f32 %v5985, 0.0
        %v6018 = vmax.f32 %v5986, 0.0
        %v6019 = vmax.f32 %v5987, 0.0
        %v6020 = vmax.f32 %v5988, 0.0
        %v6021 = vmax.f32 %v5989, 0.0
        %v6022 = vmax.f32 %v5990, 0.0
        %v6023 = vmax.f32 %v5991, 0.0
        %v6024 = vmax.f32 %v5992, 0.0
        %v6025 = vmax.f32 %v5993, 0.0
        %v6026 = vmax.f32 %v5994, 0.0
        %v6027 = vmax.f32 %v5995, 0.0
        %v6028 = vmax.f32 %v5996, 0.0
        %v6029 = vmax.f32 %v5997, 0.0
        %v6030 = vmax.f32 %v5998, 0.0
        %v6031 = vmax.f32 %v5999, 0.0
        %v6032 = vmax.f32 %v6000, 0.0
        %v6033 = vmax.f32 %v6001, 0.0
        %v6034 = vmax.f32 %v6002, 0.0
        %v6035 = vmax.f32 %v6003, 0.0
        %6036 = vst [vmem:[%s217] sm:$0xff] %v6004
        %6037 = vst [vmem:[%s217 + $0x8] sm:$0xff] %v6005
        %6038 = vst [vmem:[%s217 + $0x10] sm:$0xff] %v6006
        %6039 = vst [vmem:[%s217 + $0x18] sm:$0xff] %v6007
        %6040 = vst [vmem:[%s217 + $0x20] sm:$0xff] %v6008
        %6041 = vst [vmem:[%s217 + $0x28] sm:$0xff] %v6009
        %6042 = vst [vmem:[%s217 + $0x30] sm:$0xff] %v6010
        %6043 = vst [vmem:[%s217 + $0x38] sm:$0xff] %v6011
        %6044 = vst [vmem:[%s217 + $0x40] sm:$0xff] %v6012
        %6045 = vst [vmem:[%s217 + $0x48] sm:$0xff] %v6013
        %6046 = vst [vmem:[%s217 + $0x50] sm:$0xff] %v6014
        %6047 = vst [vmem:[%s217 + $0x58] sm:$0xff] %v6015
        %6048 = vst [vmem:[%s217 + $0x60] sm:$0xff] %v6016
        %6049 = vst [vmem:[%s217 + $0x68] sm:$0xff] %v6017
        %6050 = vst [vmem:[%s217 + $0x70] sm:$0xff] %v6018
        %6051 = vst [vmem:[%s217 + $0x78] sm:$0xff] %v6019
        %6052 = vst [vmem:[%s217 + $0x80] sm:$0xff] %v6020
        %6053 = vst [vmem:[%s217 + $0x88] sm:$0xff] %v6021
        %6054 = vst [vmem:[%s217 + $0x90] sm:$0xff] %v6022
        %6055 = vst [vmem:[%s217 + $0x98] sm:$0xff] %v6023
        %6056 = vst [vmem:[%s217 + $0xa0] sm:$0xff] %v6024
        %6057 = vst [vmem:[%s217 + $0xa8] sm:$0xff] %v6025
        %6058 = vst [vmem:[%s217 + $0xb0] sm:$0xff] %v6026
        %6059 = vst [vmem:[%s217 + $0xb8] sm:$0xff] %v6027
        %6060 = vst [vmem:[%s217 + $0xc0] sm:$0xff] %v6028
        %6061 = vst [vmem:[%s217 + $0xc8] sm:$0xff] %v6029
        %6062 = vst [vmem:[%s217 + $0xd0] sm:$0xff] %v6030
        %6063 = vst [vmem:[%s217 + $0xd8] sm:$0xff] %v6031
        %6064 = vst [vmem:[%s217 + $0xe0] sm:$0xff] %v6032
        %6065 = vst [vmem:[%s217 + $0xe8] sm:$0xff] %v6033
        %6066 = vst [vmem:[%s217 + $0xf0] sm:$0xff] %v6034
        %6067 = vst [vmem:[%s217 + $0xf8] sm:$0xff] %v6035
        %s6068 = sand.u32 %s137, 1
        %s6069 = scalar_lea.sflag [#allocation4], %s6068
        %s6070 = sand.u32 %s137, 1
        %s6071 = smul.addr %s6070, 256
        %s6072 = scalar_lea.vmem [#allocation3], %s6071
        // Predicated region
        $region41: #{tpu_custom_call.1} parent=39 // pred_check
          %p6073 = pneg %p147
        $region42: #{tpu_custom_call.1} parent=39 // pred_check_branch
          %6075 = sbr.rel (%p6073) target = $region44
        $region43: #{tpu_custom_call.1} parent=39 // pred_region
          %6077 = vsyncadd %s6069, 0
          %s6078 = smul.addr %s19, 32
          %s6079 = smul.addr %s6078, 8
          %s6080 = scalar_lea.hbm %s5, %s6079
          %s6081 = sshll.u32 %s6072, 4
          %s6082 = int_to_ptr.vmem [resolvable:$true] %s6081
          %s6083 = sshll.u32 %s6080, 4
          %s6084 = int_to_ptr.hbm [resolvable:$true] %s6083
          %6089 = dma.vmem_to_hbm [thread:$0]  %s6082, 4096, %s6084, %s6069, 128, 128, 8
        $region44: #{tpu_custom_call.1} parent=39 // pred_fallthru
          _
      $region40: #{tpu_custom_call.1} parent=5 // pred_fallthru
        _
      %p6090 = scmp.le.s32.totalorder 2, %s14
      // Predicated region
      $region45: #{tpu_custom_call.1} parent=5 // pred_check
        %p6091 = pneg %p6090
      $region46: #{tpu_custom_call.1} parent=5 // pred_check_branch
        %6093 = sbr.rel (%p6091) target = $region48
      $region47: #{tpu_custom_call.1} parent=5 // pred_region
        %s6094 = ssub.s32 %s14, 2
        // Predicated region
        $region49: #{tpu_custom_call.1} parent=47 // pred_check
          %p6095 = pneg %p153
        $region50: #{tpu_custom_call.1} parent=47 // pred_check_branch
          %6097 = sbr.rel (%p6095) target = $region52
        $region51: #{tpu_custom_call.1} parent=47 // pred_region
          %s6098 = sand.u32 %s138, 1
          %s6099 = scalar_lea.sflag [#allocation4], %s6098
          %s6100 = sand.u32 %s138, 1
          %s6101 = smul.addr %s6100, 256
          %s6102 = scalar_lea.vmem [#allocation3], %s6101
          %6104 = dma.done %s6099, 4096
        $region52: #{tpu_custom_call.1} parent=47 // pred_fallthru
          _
      $region48: #{tpu_custom_call.1} parent=5 // pred_fallthru
        _
    $region6: #{tpu_custom_call.1} parent=1 // loop_footer
      %s18 = sadd.s32 1, %s14
    $region7: #{tpu_custom_call.1} parent=1 // loop_footer_branch
      %13 = sbr.rel target = $region3
    $region8: #{tpu_custom_call.1} parent=1 // loop_exit
      _
    %6105 = vsyncpa [#allocation4], 1
    %s6106 = scalar_lea.sflag [#allocation4], 1
    %6107 = vsyncpa %s6106, 1

</llo_original>
